<compile_context>
chip_gen: v7x
topology: tpu7x:2x2x1
jax: 0.10.0
libtpu: 0.0.40
codegen_flags: <defaults>
</compile_context>

<pallas_src>
import jax
import jax.numpy as jnp
from jax import lax
from jax.experimental import pallas as pl
from jax.experimental.pallas import tpu as pltpu

TK = 256  # hidden-dim tile: W1-column / W2-row tile processed per grid step


# ------------------------------ Pallas kernel ------------------------------

def _critic_fused_kernel(x_ref, act_ref, wt_ref, bc_ref,
                         w1c_ref, w1a_ref, b1_ref,
                         w2_ref, b2_ref, w3_ref, b3_ref,
                         o_ref, feat_ref, h2_ref):
    """Fused conv(+ReLU) -> flatten -> concat(action) -> 3-layer MLP.

    Grid axis 0 tiles the 1024-wide hidden dim:
      step k: h1_k = relu(feat @ W1c[:, k] + act @ W1a[:, k] + b1[k])
              h2  += h1_k @ W2[k, :]
    feat (conv output, NCHW-flatten order) and the h2 accumulator live in VMEM
    scratch across grid steps.
    """
    k = pl.program_id(0)

    @pl.when(k == 0)
    def _():
        # Conv folded into a dense matmul whose columns are already in
        # PyTorch NCHW-flatten order -> lane-dense [B, 512], no relayout.
        conv = jnp.dot(x_ref[...].astype(jnp.bfloat16), wt_ref[...],
                       preferred_element_type=jnp.float32) + bc_ref[...]
        feat_ref[...] = jnp.maximum(conv, 0.0)
        h2_ref[...] = jnp.zeros_like(h2_ref)

    # Layer 1 (tile of 256 hidden units): conv part + action part, bf16 MXU,
    # f32 accumulation.
    h1 = jnp.dot(feat_ref[...].astype(jnp.bfloat16), w1c_ref[...],
                 preferred_element_type=jnp.float32)
    h1 = h1 + jnp.dot(act_ref[...].astype(jnp.bfloat16), w1a_ref[...],
                      preferred_element_type=jnp.float32)
    h1 = jnp.maximum(h1 + b1_ref[...], 0.0)

    # Layer 2: accumulate partial products over hidden-dim tiles.
    h2_ref[...] += jnp.dot(h1.astype(jnp.bfloat16), w2_ref[...],
                           preferred_element_type=jnp.float32)

    @pl.when(k == pl.num_programs(0) - 1)
    def _():
        h2 = jnp.maximum(h2_ref[...] + b2_ref[...], 0.0)
        # Layer 3 ([1024, 1]) as a lane reduce instead of a 1-column matmul.
        o_ref[...] = (jnp.sum(h2 * w3_ref[...], axis=-1, keepdims=True)
                      + b3_ref[...])


# ------------------------------ JAX wrappers -------------------------------

def prepare_critic_params(conv_params, mlp_params, input_shape,
                          *, stride=2, pad=1):
    """One-time (init) transform of PyTorch-style params into kernel layout.

    - Folds the Conv2d into Wt[C*H*W, Cout*Ho*Wo] via identity-basis responses
      (exact: conv is linear); column order matches torch `.view(B, -1)` of an
      NCHW conv output.
    - Splits W1 into conv rows / action rows.
    - Casts the large weights to bf16 (biases + last layer stay f32).
    """
    cw, cb = conv_params                      # cw: [Cout, Cin, kh, kw]
    (w1, b1), (w2, b2), (w3, b3) = mlp_params
    C, H, W = input_shape
    Cout, _, kh, kw = cw.shape
    Ho = (H + 2 * pad - kh) // stride + 1
    Wo = (W + 2 * pad - kw) // stride + 1
    CHW, D = C * H * W, Cout * Ho * Wo

    eye = jnp.eye(CHW, dtype=jnp.float32).reshape(CHW, C, H, W)
    resp = lax.conv_general_dilated(
        eye, cw, (stride, stride), ((pad, pad), (pad, pad)),
        dimension_numbers=("NCHW", "OIHW", "NCHW"))        # [CHW, Cout, Ho, Wo]
    wt = resp.reshape(CHW, D).astype(jnp.bfloat16)          # NCHW-flatten cols
    bconv = jnp.repeat(cb, Ho * Wo)[None, :].astype(jnp.float32)   # [1, D]

    w1c = w1[:D].astype(jnp.bfloat16)                       # [D, 1024]
    w1a = w1[D:].astype(jnp.bfloat16)                       # [A, 1024]
    w3row = w3.reshape(1, -1).astype(jnp.float32)           # [1, 1024]
    return (wt, bconv, w1c, w1a,
            b1.astype(jnp.float32), w2.astype(jnp.bfloat16),
            b2.astype(jnp.float32), w3row,
            b3.reshape(1, 1).astype(jnp.float32))


def critic_forward(status, action, kparams):
    """Mirrors CriticNet.forward: CNN(status) -> flatten -> cat(action) -> MLP."""
    wt, bconv, w1c, w1a, b1, w2, b2, w3row, b3 = kparams
    B = status.shape[0]
    x_flat = status.reshape(B, -1).astype(jnp.float32)       # NCHW flatten
    act = action.astype(jnp.float32)

    CHW, D = wt.shape
    A = w1a.shape[0]
    HID = w1c.shape[1]
    grid = (HID // TK,)

    return pl.pallas_call(
        _critic_fused_kernel,
        out_shape=jax.ShapeDtypeStruct((B, 1), jnp.float32),
        grid_spec=pltpu.PrefetchScalarGridSpec(
            num_scalar_prefetch=0,
            grid=grid,
            in_specs=[
                pl.BlockSpec((B, CHW), lambda k: (0, 0)),    # x_flat (resident)
                pl.BlockSpec((B, A), lambda k: (0, 0)),      # action (resident)
                pl.BlockSpec((CHW, D), lambda k: (0, 0)),    # Wt (resident)
                pl.BlockSpec((1, D), lambda k: (0, 0)),      # conv bias
                pl.BlockSpec((D, TK), lambda k: (0, k)),     # W1 conv-part cols
                pl.BlockSpec((A, TK), lambda k: (0, k)),     # W1 action-part cols
                pl.BlockSpec((1, TK), lambda k: (0, k)),     # b1 tile
                pl.BlockSpec((TK, HID), lambda k: (k, 0)),   # W2 rows
                pl.BlockSpec((1, HID), lambda k: (0, 0)),    # b2
                pl.BlockSpec((1, HID), lambda k: (0, 0)),    # w3 row
                pl.BlockSpec((1, 1), lambda k: (0, 0)),      # b3
            ],
            out_specs=pl.BlockSpec((B, 1), lambda k: (0, 0)),
            scratch_shapes=[
                pltpu.VMEM((B, D), jnp.float32),             # conv features
                pltpu.VMEM((B, HID), jnp.float32),           # h2 accumulator
            ],
        ),
        compiler_params=pltpu.CompilerParams(
            dimension_semantics=("arbitrary",)),
    )(x_flat, act, wt, bconv, w1c, w1a, b1, w2, b2, w3row, b3)


# ---------------------------- deterministic init ---------------------------

def _linear_init(key, fan_in, fan_out):
    kw, kb = jax.random.split(key)
    bound = 1.0 / (fan_in ** 0.5)
    w = jax.random.uniform(kw, (fan_in, fan_out), jnp.float32, -bound, bound)
    b = jax.random.uniform(kb, (1, fan_out), jnp.float32, -bound, bound)
    return w, b


def _conv_init(key, cout, cin, kh, kw_):
    kw, kb = jax.random.split(key)
    fan_in = cin * kh * kw_
    bound = 1.0 / (fan_in ** 0.5)
    w = jax.random.uniform(kw, (cout, cin, kh, kw_), jnp.float32, -bound, bound)
    b = jax.random.uniform(kb, (cout,), jnp.float32, -bound, bound)
    return w, b


# ---------------------------------- main -----------------------------------

if __name__ == "__main__":
    # Small shapes consistent with the module: input_shape=(4, 16, 16), 6 actions.
    B, C, H, W = 2, 4, 16, 16
    nb_actions = 6
    CONV_COUT, KH, KW, STRIDE, PAD = 8, 3, 3, 2, 1
    Ho = (H + 2 * PAD - KH) // STRIDE + 1
    Wo = (W + 2 * PAD - KW) // STRIDE + 1
    cnn_output_dim = CONV_COUT * Ho * Wo      # == int(np.prod(cnn_out.shape[1:]))

    root = jax.random.PRNGKey(0)
    k_in, k_act, k_conv, k_l1, k_l2, k_l3 = jax.random.split(root, 6)

    status = jax.random.normal(k_in, (B, C, H, W), jnp.float32)   # NCHW
    action = jax.random.normal(k_act, (B, nb_actions), jnp.float32)

    conv_params = _conv_init(k_conv, CONV_COUT, C, KH, KW)
    mlp_params = (
        _linear_init(k_l1, cnn_output_dim + nb_actions, 1024),
        _linear_init(k_l2, 1024, 1024),
        _linear_init(k_l3, 1024, 1),
    )

    # One-time weight transform (conv fold-in, W1 split, bf16 cast).
    kparams = jax.tree_util.tree_map(
        jax.block_until_ready,
        prepare_critic_params(conv_params, mlp_params, (C, H, W),
                              stride=STRIDE, pad=PAD))

    critic = jax.jit(critic_forward)(status, action, kparams)
    critic = jax.block_until_ready(critic)
    assert critic.shape == (B, 1) and critic.dtype == jnp.float32

    # Pure-JAX reference of the same math, using bf16-rounded large weights
    # (the intentional quantization) but f32 activations everywhere.
    def _ref(status, action):
        cw, cb = conv_params
        (w1, b1), (w2, b2), (w3, b3) = mlp_params
        cw_q = cw.astype(jnp.bfloat16).astype(jnp.float32)
        w1_q = w1.astype(jnp.bfloat16).astype(jnp.float32)
        w2_q = w2.astype(jnp.bfloat16).astype(jnp.float32)
        y = lax.conv_general_dilated(
            status, cw_q, (STRIDE, STRIDE), ((PAD, PAD), (PAD, PAD)),
            dimension_numbers=("NCHW", "OIHW", "NCHW"))
        y = jnp.maximum(y + cb.reshape(1, -1, 1, 1), 0.0)
        f = jnp.concatenate([y.reshape(B, -1), action], axis=1)
        h = jnp.maximum(f @ w1_q + b1, 0.0)
        h = jnp.maximum(h @ w2_q + b2, 0.0)
        return h @ w3 + b3

    ref = _ref(status, action)
    assert jnp.allclose(critic, ref, rtol=1e-2, atol=1e-2), (
        f"max abs err = {float(jnp.max(jnp.abs(critic - ref)))}")

    print("KERNEL_OK")
</pallas_src>

<mosaic_0001>
module attributes {stable_mosaic.version = 11 : i64} {
  func.func @_critic_fused_kernel(%arg0: i32, %arg1: memref<2x1024xf32, #tpu.memory_space<vmem>>, %arg2: memref<2x6xf32, #tpu.memory_space<vmem>>, %arg3: memref<1024x512xbf16, #tpu.memory_space<vmem>>, %arg4: memref<1x512xf32, #tpu.memory_space<vmem>>, %arg5: memref<512x256xbf16, #tpu.memory_space<vmem>>, %arg6: memref<6x256xbf16, #tpu.memory_space<vmem>>, %arg7: memref<1x256xf32, #tpu.memory_space<vmem>>, %arg8: memref<256x1024xbf16, #tpu.memory_space<vmem>>, %arg9: memref<1x1024xf32, #tpu.memory_space<vmem>>, %arg10: memref<1x1024xf32, #tpu.memory_space<vmem>>, %arg11: memref<1x1xf32, #tpu.memory_space<vmem>>, %arg12: memref<2x1xf32, #tpu.memory_space<vmem>>, %arg13: memref<2x512xf32, #tpu.memory_space<vmem>>, %arg14: memref<2x1024xf32, #tpu.memory_space<vmem>>) attributes {dimension_semantics = [#tpu.dimension_semantics<arbitrary>], iteration_bounds = array<i64: 4>, scalar_prefetch = 0 : i64, scratch_operands = 2 : i64, tpu.core_type = #tpu.core_type<tc>, window_params = [{pipeline_mode = #tpu.pipeline_mode<synchronous>, transform_indices = @transform_0, window_bounds = array<i64: 2, 1024>}, {pipeline_mode = #tpu.pipeline_mode<synchronous>, transform_indices = @transform_1, window_bounds = array<i64: 2, 6>}, {pipeline_mode = #tpu.pipeline_mode<synchronous>, transform_indices = @transform_2, window_bounds = array<i64: 1024, 512>}, {pipeline_mode = #tpu.pipeline_mode<synchronous>, transform_indices = @transform_3, window_bounds = array<i64: 1, 512>}, {transform_indices = @transform_4, window_bounds = array<i64: 512, 256>}, {transform_indices = @transform_5, window_bounds = array<i64: 6, 256>}, {transform_indices = @transform_6, window_bounds = array<i64: 1, 256>}, {transform_indices = @transform_7, window_bounds = array<i64: 256, 1024>}, {pipeline_mode = #tpu.pipeline_mode<synchronous>, transform_indices = @transform_8, window_bounds = array<i64: 1, 1024>}, {pipeline_mode = #tpu.pipeline_mode<synchronous>, transform_indices = @transform_9, window_bounds = array<i64: 1, 1024>}, {pipeline_mode = #tpu.pipeline_mode<synchronous>, transform_indices = @transform_10, window_bounds = array<i64: 1, 1>}, {pipeline_mode = #tpu.pipeline_mode<synchronous>, transform_indices = @transform_11, window_bounds = array<i64: 2, 1>}]} {
    %c0_i32 = arith.constant 0 : i32
    %0 = arith.cmpi eq, %arg0, %c0_i32 : i32
    %1 = arith.extui %0 : i1 to i32
    %c0_i32_0 = arith.constant 0 : i32
    %2 = arith.cmpi ne, %1, %c0_i32_0 : i32
    scf.if %2 {
      %c0_20 = arith.constant 0 : index
      %c0_21 = arith.constant 0 : index
      %26 = vector.load %arg1[%c0_20, %c0_21] : memref<2x1024xf32, #tpu.memory_space<vmem>>, vector<2x1024xf32>
      %27 = arith.truncf %26 : vector<2x1024xf32> to vector<2x1024xbf16>
      %c0_22 = arith.constant 0 : index
      %c0_23 = arith.constant 0 : index
      %28 = vector.load %arg3[%c0_22, %c0_23] : memref<1024x512xbf16, #tpu.memory_space<vmem>>, vector<1024x512xbf16>
      %cst_24 = arith.constant dense<0.000000e+00> : vector<2x512xf32>
      %29 = tpu.matmul %27, %28, %cst_24 {dimension_numbers = #tpu.dot_dimension_numbers<[1], [0], [0], [1], [0, 0, 1, 1], [], []>} : vector<2x1024xbf16>, vector<1024x512xbf16>, vector<2x512xf32> -> vector<2x512xf32>
      %c0_25 = arith.constant 0 : index
      %c0_26 = arith.constant 0 : index
      %30 = vector.load %arg4[%c0_25, %c0_26] : memref<1x512xf32, #tpu.memory_space<vmem>>, vector<1x512xf32>
      %31 = vector.broadcast %30 : vector<1x512xf32> to vector<2x512xf32>
      %32 = arith.addf %29, %31 : vector<2x512xf32>
      %cst_27 = arith.constant 0.000000e+00 : f32
      %33 = vector.broadcast %cst_27 : f32 to vector<2x512xf32>
      %34 = arith.maximumf %32, %33 : vector<2x512xf32>
      %c0_28 = arith.constant 0 : index
      %c0_29 = arith.constant 0 : index
      %35 = vector.load %arg13[%c0_28, %c0_29] : memref<2x512xf32, #tpu.memory_space<vmem>>, vector<2x512xf32>
      tpu.vector_store %arg13[%c0_28, %c0_29], %34 {strides = array<i32>} : memref<2x512xf32, #tpu.memory_space<vmem>>, vector<2x512xf32>,
      %cst_30 = arith.constant 0.000000e+00 : f32
      %36 = vector.broadcast %cst_30 : f32 to vector<2x1024xf32>
      %c0_31 = arith.constant 0 : index
      %c0_32 = arith.constant 0 : index
      %37 = vector.load %arg14[%c0_31, %c0_32] : memref<2x1024xf32, #tpu.memory_space<vmem>>, vector<2x1024xf32>
      tpu.vector_store %arg14[%c0_31, %c0_32], %36 {strides = array<i32>} : memref<2x1024xf32, #tpu.memory_space<vmem>>, vector<2x1024xf32>,
    } else {
    }
    %c0 = arith.constant 0 : index
    %c0_1 = arith.constant 0 : index
    %3 = vector.load %arg13[%c0, %c0_1] : memref<2x512xf32, #tpu.memory_space<vmem>>, vector<2x512xf32>
    %4 = arith.truncf %3 : vector<2x512xf32> to vector<2x512xbf16>
    %c0_2 = arith.constant 0 : index
    %c0_3 = arith.constant 0 : index
    %5 = vector.load %arg5[%c0_2, %c0_3] : memref<512x256xbf16, #tpu.memory_space<vmem>>, vector<512x256xbf16>
    %cst = arith.constant dense<0.000000e+00> : vector<2x256xf32>
    %6 = tpu.matmul %4, %5, %cst {dimension_numbers = #tpu.dot_dimension_numbers<[1], [0], [0], [1], [0, 0, 1, 1], [], []>} : vector<2x512xbf16>, vector<512x256xbf16>, vector<2x256xf32> -> vector<2x256xf32>
    %c0_4 = arith.constant 0 : index
    %c0_5 = arith.constant 0 : index
    %7 = vector.load %arg2[%c0_4, %c0_5] : memref<2x6xf32, #tpu.memory_space<vmem>>, vector<2x6xf32>
    %8 = arith.truncf %7 : vector<2x6xf32> to vector<2x6xbf16>
    %c0_6 = arith.constant 0 : index
    %c0_7 = arith.constant 0 : index
    %9 = vector.load %arg6[%c0_6, %c0_7] : memref<6x256xbf16, #tpu.memory_space<vmem>>, vector<6x256xbf16>
    %cst_8 = arith.constant dense<0.000000e+00> : vector<2x256xf32>
    %10 = tpu.matmul %8, %9, %cst_8 {dimension_numbers = #tpu.dot_dimension_numbers<[1], [0], [0], [1], [0, 0, 1, 1], [], []>} : vector<2x6xbf16>, vector<6x256xbf16>, vector<2x256xf32> -> vector<2x256xf32>
    %11 = arith.addf %6, %10 : vector<2x256xf32>
    %c0_9 = arith.constant 0 : index
    %c0_10 = arith.constant 0 : index
    %12 = vector.load %arg7[%c0_9, %c0_10] : memref<1x256xf32, #tpu.memory_space<vmem>>, vector<1x256xf32>
    %13 = vector.broadcast %12 : vector<1x256xf32> to vector<2x256xf32>
    %14 = arith.addf %11, %13 : vector<2x256xf32>
    %cst_11 = arith.constant 0.000000e+00 : f32
    %15 = vector.broadcast %cst_11 : f32 to vector<2x256xf32>
    %16 = arith.maximumf %14, %15 : vector<2x256xf32>
    %c0_12 = arith.constant 0 : index
    %c0_13 = arith.constant 0 : index
    %17 = vector.load %arg14[%c0_12, %c0_13] : memref<2x1024xf32, #tpu.memory_space<vmem>>, vector<2x1024xf32>
    %18 = arith.truncf %16 : vector<2x256xf32> to vector<2x256xbf16>
    %c0_14 = arith.constant 0 : index
    %c0_15 = arith.constant 0 : index
    %19 = vector.load %arg8[%c0_14, %c0_15] : memref<256x1024xbf16, #tpu.memory_space<vmem>>, vector<256x1024xbf16>
    %cst_16 = arith.constant dense<0.000000e+00> : vector<2x1024xf32>
    %20 = tpu.matmul %18, %19, %cst_16 {dimension_numbers = #tpu.dot_dimension_numbers<[1], [0], [0], [1], [0, 0, 1, 1], [], []>} : vector<2x256xbf16>, vector<256x1024xbf16>, vector<2x1024xf32> -> vector<2x1024xf32>
    %21 = arith.addf %17, %20 : vector<2x1024xf32>
    %c0_17 = arith.constant 0 : index
    %c0_18 = arith.constant 0 : index
    %22 = vector.load %arg14[%c0_17, %c0_18] : memref<2x1024xf32, #tpu.memory_space<vmem>>, vector<2x1024xf32>
    tpu.vector_store %arg14[%c0_17, %c0_18], %21 {strides = array<i32>} : memref<2x1024xf32, #tpu.memory_space<vmem>>, vector<2x1024xf32>,
    %c3_i32 = arith.constant 3 : i32
    %23 = arith.cmpi eq, %arg0, %c3_i32 : i32
    %24 = arith.extui %23 : i1 to i32
    %c0_i32_19 = arith.constant 0 : i32
    %25 = arith.cmpi ne, %24, %c0_i32_19 : i32
    scf.if %25 {
      %c0_20 = arith.constant 0 : index
      %c0_21 = arith.constant 0 : index
      %26 = vector.load %arg14[%c0_20, %c0_21] : memref<2x1024xf32, #tpu.memory_space<vmem>>, vector<2x1024xf32>
      %c0_22 = arith.constant 0 : index
      %c0_23 = arith.constant 0 : index
      %27 = vector.load %arg9[%c0_22, %c0_23] : memref<1x1024xf32, #tpu.memory_space<vmem>>, vector<1x1024xf32>
      %28 = vector.broadcast %27 : vector<1x1024xf32> to vector<2x1024xf32>
      %29 = arith.addf %26, %28 : vector<2x1024xf32>
      %cst_24 = arith.constant 0.000000e+00 : f32
      %30 = vector.broadcast %cst_24 : f32 to vector<2x1024xf32>
      %31 = arith.maximumf %29, %30 : vector<2x1024xf32>
      %c0_25 = arith.constant 0 : index
      %c0_26 = arith.constant 0 : index
      %32 = vector.load %arg10[%c0_25, %c0_26] : memref<1x1024xf32, #tpu.memory_space<vmem>>, vector<1x1024xf32>
      %33 = vector.broadcast %32 : vector<1x1024xf32> to vector<2x1024xf32>
      %34 = arith.mulf %31, %33 : vector<2x1024xf32>
      %cst_27 = arith.constant dense<0.000000e+00> : vector<2xf32>
      %35 = vector.multi_reduction <add>, %34, %cst_27 [1] : vector<2x1024xf32> to vector<2xf32>
      %36 = vector.shape_cast %35 : vector<2xf32> to vector<2x1xf32>
      %c0_28 = arith.constant 0 : index
      %c0_29 = arith.constant 0 : index
      %37 = vector.load %arg11[%c0_28, %c0_29] : memref<1x1xf32, #tpu.memory_space<vmem>>, vector<1x1xf32>
      %38 = vector.broadcast %37 : vector<1x1xf32> to vector<2x1xf32>
      %39 = arith.addf %36, %38 : vector<2x1xf32>
      %c0_30 = arith.constant 0 : index
      %c0_31 = arith.constant 0 : index
      %40 = vector.load %arg12[%c0_30, %c0_31] : memref<2x1xf32, #tpu.memory_space<vmem>>, vector<2x1xf32>
      tpu.vector_store %arg12[%c0_30, %c0_31], %39 {strides = array<i32>} : memref<2x1xf32, #tpu.memory_space<vmem>>, vector<2x1xf32>,
    } else {
    }
    return
  }
  func.func @transform_0(%arg0: i32) -> (i32, i32) {
    %c0_i32 = arith.constant 0 : i32
    %c0_i32_0 = arith.constant 0 : i32
    %c0_i32_1 = arith.constant 0 : i32
    return %c0_i32, %c0_i32_0 : i32, i32
  }
  func.func @transform_1(%arg0: i32) -> (i32, i32) {
    %c0_i32 = arith.constant 0 : i32
    %c0_i32_0 = arith.constant 0 : i32
    %c0_i32_1 = arith.constant 0 : i32
    return %c0_i32, %c0_i32_0 : i32, i32
  }
  func.func @transform_2(%arg0: i32) -> (i32, i32) {
    %c0_i32 = arith.constant 0 : i32
    %c0_i32_0 = arith.constant 0 : i32
    %c0_i32_1 = arith.constant 0 : i32
    return %c0_i32, %c0_i32_0 : i32, i32
  }
  func.func @transform_3(%arg0: i32) -> (i32, i32) {
    %c0_i32 = arith.constant 0 : i32
    %c0_i32_0 = arith.constant 0 : i32
    %c0_i32_1 = arith.constant 0 : i32
    return %c0_i32, %c0_i32_0 : i32, i32
  }
  func.func @transform_4(%arg0: i32) -> (i32, i32) {
    %c0_i32 = arith.constant 0 : i32
    %c0_i32_0 = arith.constant 0 : i32
    return %c0_i32, %arg0 : i32, i32
  }
  func.func @transform_5(%arg0: i32) -> (i32, i32) {
    %c0_i32 = arith.constant 0 : i32
    %c0_i32_0 = arith.constant 0 : i32
    return %c0_i32, %arg0 : i32, i32
  }
  func.func @transform_6(%arg0: i32) -> (i32, i32) {
    %c0_i32 = arith.constant 0 : i32
    %c0_i32_0 = arith.constant 0 : i32
    return %c0_i32, %arg0 : i32, i32
  }
  func.func @transform_7(%arg0: i32) -> (i32, i32) {
    %c0_i32 = arith.constant 0 : i32
    %c0_i32_0 = arith.constant 0 : i32
    return %arg0, %c0_i32 : i32, i32
  }
  func.func @transform_8(%arg0: i32) -> (i32, i32) {
    %c0_i32 = arith.constant 0 : i32
    %c0_i32_0 = arith.constant 0 : i32
    %c0_i32_1 = arith.constant 0 : i32
    return %c0_i32, %c0_i32_0 : i32, i32
  }
  func.func @transform_9(%arg0: i32) -> (i32, i32) {
    %c0_i32 = arith.constant 0 : i32
    %c0_i32_0 = arith.constant 0 : i32
    %c0_i32_1 = arith.constant 0 : i32
    return %c0_i32, %c0_i32_0 : i32, i32
  }
  func.func @transform_10(%arg0: i32) -> (i32, i32) {
    %c0_i32 = arith.constant 0 : i32
    %c0_i32_0 = arith.constant 0 : i32
    %c0_i32_1 = arith.constant 0 : i32
    return %c0_i32, %c0_i32_0 : i32, i32
  }
  func.func @transform_11(%arg0: i32) -> (i32, i32) {
    %c0_i32 = arith.constant 0 : i32
    %c0_i32_0 = arith.constant 0 : i32
    %c0_i32_1 = arith.constant 0 : i32
    return %c0_i32, %c0_i32_0 : i32, i32
  }
}

</mosaic_0001>

<llo_original>
// kernel: critic_forward.1
$region0: #{critic_forward.1}
  #allocation0 [shape = 'u32[]', space=smem, size = 0x4, offset = 0x4, fixed_abs, tag = 'smem constant byte address 0x4 - core index']
  #allocation1 [shape = 'u32[144,128]{1,0:T(1,128)}', space=vmem, size = 0x12000, scoped, tag = 'internal scratch']
  #allocation2 [shape = 'f32[2,512]{1,0:T(2,128)}', space=vmem, size = 0x1000, scoped, tag = 'scratch operand']
  #allocation3 [shape = 'f32[2,1024]{1,0:T(2,128)}', space=vmem, size = 0x2000, scoped, tag = 'scratch operand']
  #allocation4 [shape = 'f32[1,1]{1,0:T(1,128)S(1)}', space=vmem, size = 0x200, scoped, tag = 'scoped memory for critic_forward.1']
  %s0 = inlined_call_operand.vmem [shape: f32[2,1024], index: 0, kind: input, shape index: {}]
  %s1 = inlined_call_operand.hbm [shape: f32[2,6], index: 1, kind: input, shape index: {}]
  %s2 = inlined_call_operand.hbm [shape: bf16[1024,512], index: 2, kind: input, shape index: {}]
  %s3 = inlined_call_operand.hbm [shape: f32[1,512], index: 3, kind: input, shape index: {}]
  %s4 = inlined_call_operand.hbm [shape: bf16[512,1024], index: 4, kind: input, shape index: {}]
  %s5 = inlined_call_operand.hbm [shape: bf16[6,1024], index: 5, kind: input, shape index: {}]
  %s6 = inlined_call_operand.hbm [shape: f32[1,1024], index: 6, kind: input, shape index: {}]
  %s7 = inlined_call_operand.hbm [shape: bf16[1024,1024], index: 7, kind: input, shape index: {}]
  %s8 = inlined_call_operand.hbm [shape: f32[1,1024], index: 8, kind: input, shape index: {}]
  %s9 = inlined_call_operand.hbm [shape: f32[1,1024], index: 9, kind: input, shape index: {}]
  %s10 = inlined_call_operand.<no memory space> [shape: f32[1,1], index: 10, kind: input, shape index: {}]
  %s11 = inlined_call_operand.vmem [shape: f32[2,1], index: 11, kind: output, shape index: {}]
  %s12 = sld [smem:[#allocation0]]
  $region121: #{critic_forward.1} parent=0
    _
  %s14 = ssub.s32 1, %s12
  %s15 = scalar_select 0, %s14, %s12
  %v16 = vstv %s10
  %17 = vst [vmem:[#allocation4] sm:$0x1] %v16
  $region1: #{critic_forward.1} parent=0
    #allocation5 [shape = 'u8[1024]{0}', space=vmem, size = 0x400, scoped, tag = 'input window, operand 1, single buffered']
    #allocation6 [shape = 's32[2]{0}', space=sflag, size = 0x8, scoped, tag = 'scoped memory for critic_forward.1']
    #allocation7 [shape = 'u8[1048576]{0}', space=vmem, size = 0x100000, scoped, tag = 'input window, operand 2, single buffered']
    #allocation8 [shape = 's32[1]{0}', space=sflag, size = 0x4, scoped, tag = 'scoped memory for critic_forward.1']
    #allocation9 [shape = 'u8[2048]{0}', space=vmem, size = 0x800, scoped, tag = 'input window, operand 3, single buffered']
    #allocation10 [shape = 'u8[524288]{0}', space=vmem, size = 0x80000, scoped, tag = 'input window, operand 4']
    #allocation11 [shape = 's32[2]{0}', space=sflag, size = 0x8, scoped, tag = 'scoped memory for critic_forward.1']
    #allocation12 [shape = 'u8[8192]{0}', space=vmem, size = 0x2000, scoped, tag = 'input window, operand 5']
    #allocation13 [shape = 'u8[2048]{0}', space=vmem, size = 0x800, scoped, tag = 'input window, operand 6']
    #allocation14 [shape = 's32[2]{0}', space=sflag, size = 0x8, scoped, tag = 'scoped memory for critic_forward.1']
    #allocation15 [shape = 'u8[1048576]{0}', space=vmem, size = 0x100000, scoped, tag = 'input window, operand 7']
    #allocation16 [shape = 'u8[4096]{0}', space=vmem, size = 0x1000, scoped, tag = 'input window, operand 8, single buffered']
    #allocation17 [shape = 's32[1]{0}', space=sflag, size = 0x4, scoped, tag = 'scoped memory for critic_forward.1']
    #allocation18 [shape = 'u8[4096]{0}', space=vmem, size = 0x1000, scoped, tag = 'input window, operand 9, single buffered']
    %18 = vsyncpa [#allocation6], 0
    %19 = vsyncpa [#allocation8], 0
    %20 = vsyncpa [#allocation11], 0
    %s21 = scalar_lea.sflag [#allocation11], 1
    %22 = vsyncpa %s21, 0
    %23 = vsyncpa [#allocation14], 0
    %s24 = scalar_lea.sflag [#allocation14], 1
    %25 = vsyncpa %s24, 0
    %26 = vsyncpa [#allocation17], 0
    loop: start=0, step=1, limit=6
    $region2: #{critic_forward.1} parent=1 // loop_pre_header
      _
    $region3: #{critic_forward.1} parent=1 // loop_header
      %s28 = sphi 0, %s32
      %p29 = scmp.ge.s32.totalorder %s28, 6
      %s36 = sphi 0, %s36
      %s38 = sphi 0, %s36
      %s39 = sphi 0, %s38
      %s53 = sphi 0, %s39
      %s57 = sphi 0, %s57
      %s59 = sphi 0, %s57
      %s60 = sphi 0, %s59
      %s74 = sphi 0, %s60
      %s78 = sphi 0, %s78
      %s80 = sphi 0, %s78
      %s81 = sphi 0, %s80
      %s95 = sphi 0, %s81
      %s99 = sphi 0, %s99
      %s101 = sphi 0, %s99
      %s102 = sphi 0, %s101
      %s116 = sphi 0, %s102
      %s122 = sphi 0, %s124
      %s125 = sphi 0, %s122
      %s126 = sphi 0, %s125
      %s142 = sphi 0, %s126
      %s148 = sphi 0, %s150
      %s151 = sphi 0, %s148
      %s152 = sphi 0, %s151
      %s168 = sphi 0, %s152
      %s174 = sphi 0, %s176
      %s177 = sphi 0, %s174
      %s178 = sphi 0, %s177
      %s194 = sphi 0, %s178
      %s200 = sphi 0, %s202
      %s203 = sphi 0, %s200
      %s204 = sphi 0, %s203
      %s220 = sphi 0, %s204
      %s224 = sphi 0, %s224
      %s226 = sphi 0, %s224
      %s227 = sphi 0, %s226
      %s241 = sphi 0, %s227
      %s245 = sphi 0, %s245
      %s247 = sphi 0, %s245
      %s248 = sphi 0, %s247
      %s262 = sphi 0, %s248
      %s266 = sphi 0, %s266
      %s268 = sphi 0, %s266
      %s269 = sphi 0, %s268
      %s283 = sphi 0, %s269
      %s287 = sphi 0, %s287
      %s289 = sphi 0, %s287
      %s290 = sphi 0, %s289
      %s304 = sphi 0, %s290
    $region4: #{critic_forward.1} parent=1 // loop_header_branch
      %31 = sbr.rel (%p29) target = $region8
    $region5: #{critic_forward.1} parent=1 // loop_body
      %s33 = ssub.s32 %s28, 1
      %s34 = ssub.s32 %s28, 2
      %s35 = sadd.s32 %s28, 1
      %s37 = sadd.s32 %s36, 1
      %p40 = scmp.eq.s32.totalorder %s28, 3
      %p41 = scmp.ne.s32.totalorder %s36, %s38
      %p42 = scmp.eq.s32.totalorder %s28, 0
      %p43 = por %p41, %p42
      %p44 = scmp.ne.s32.totalorder %s36, %s38
      %p45 = scmp.eq.s32.totalorder %s33, 3
      %p46 = por %p44, %p45
      %p47 = scmp.ne.s32.totalorder %s38, %s39
      %p48 = scmp.eq.s32.totalorder %s33, 0
      %p49 = por %p47, %p48
      %p50 = scmp.ne.s32.totalorder %s38, %s39
      %p51 = scmp.eq.s32.totalorder %s34, 3
      %p52 = por %p50, %p51
      %p54 = scmp.ne.s32.totalorder %s39, %s53
      %p55 = scmp.eq.s32.totalorder %s34, 0
      %p56 = por %p54, %p55
      %s58 = sadd.s32 %s57, 1
      %p61 = scmp.eq.s32.totalorder %s28, 3
      %p62 = scmp.ne.s32.totalorder %s57, %s59
      %p63 = scmp.eq.s32.totalorder %s28, 0
      %p64 = por %p62, %p63
      %p65 = scmp.ne.s32.totalorder %s57, %s59
      %p66 = scmp.eq.s32.totalorder %s33, 3
      %p67 = por %p65, %p66
      %p68 = scmp.ne.s32.totalorder %s59, %s60
      %p69 = scmp.eq.s32.totalorder %s33, 0
      %p70 = por %p68, %p69
      %p71 = scmp.ne.s32.totalorder %s59, %s60
      %p72 = scmp.eq.s32.totalorder %s34, 3
      %p73 = por %p71, %p72
      %p75 = scmp.ne.s32.totalorder %s60, %s74
      %p76 = scmp.eq.s32.totalorder %s34, 0
      %p77 = por %p75, %p76
      %s79 = sadd.s32 %s78, 1
      %p82 = scmp.eq.s32.totalorder %s28, 3
      %p83 = scmp.ne.s32.totalorder %s78, %s80
      %p84 = scmp.eq.s32.totalorder %s28, 0
      %p85 = por %p83, %p84
      %p86 = scmp.ne.s32.totalorder %s78, %s80
      %p87 = scmp.eq.s32.totalorder %s33, 3
      %p88 = por %p86, %p87
      %p89 = scmp.ne.s32.totalorder %s80, %s81
      %p90 = scmp.eq.s32.totalorder %s33, 0
      %p91 = por %p89, %p90
      %p92 = scmp.ne.s32.totalorder %s80, %s81
      %p93 = scmp.eq.s32.totalorder %s34, 3
      %p94 = por %p92, %p93
      %p96 = scmp.ne.s32.totalorder %s81, %s95
      %p97 = scmp.eq.s32.totalorder %s34, 0
      %p98 = por %p96, %p97
      %s100 = sadd.s32 %s99, 1
      %p103 = scmp.eq.s32.totalorder %s28, 3
      %p104 = scmp.ne.s32.totalorder %s99, %s101
      %p105 = scmp.eq.s32.totalorder %s28, 0
      %p106 = por %p104, %p105
      %p107 = scmp.ne.s32.totalorder %s99, %s101
      %p108 = scmp.eq.s32.totalorder %s33, 3
      %p109 = por %p107, %p108
      %p110 = scmp.ne.s32.totalorder %s101, %s102
      %p111 = scmp.eq.s32.totalorder %s33, 0
      %p112 = por %p110, %p111
      %p113 = scmp.ne.s32.totalorder %s101, %s102
      %p114 = scmp.eq.s32.totalorder %s34, 3
      %p115 = por %p113, %p114
      %p117 = scmp.ne.s32.totalorder %s102, %s116
      %p118 = scmp.eq.s32.totalorder %s34, 0
      %p119 = por %p117, %p118
      %s120 = ssub.s32 %s28, %s35
      %p121 = scmp.eq.s32.totalorder %s120, 0
      %s123 = sadd.s32 %s122, 1
      %s124 = scalar_select %p121, %s122, %s123
      %p127 = pneg %p121
      %p128 = scmp.eq.s32.totalorder %s28, 3
      %p129 = por %p127, %p128
      %p130 = scmp.ne.s32.totalorder %s122, %s125
      %p131 = scmp.eq.s32.totalorder %s28, 0
      %p132 = por %p130, %p131
      %p133 = scmp.ne.s32.totalorder %s122, %s125
      %p134 = scmp.eq.s32.totalorder %s33, 3
      %p135 = por %p133, %p134
      %p136 = scmp.ne.s32.totalorder %s125, %s126
      %p137 = scmp.eq.s32.totalorder %s33, 0
      %p138 = por %p136, %p137
      %p139 = scmp.ne.s32.totalorder %s125, %s126
      %p140 = scmp.eq.s32.totalorder %s34, 3
      %p141 = por %p139, %p140
      %p143 = scmp.ne.s32.totalorder %s126, %s142
      %p144 = scmp.eq.s32.totalorder %s34, 0
      %p145 = por %p143, %p144
      %s146 = ssub.s32 %s28, %s35
      %p147 = scmp.eq.s32.totalorder %s146, 0
      %s149 = sadd.s32 %s148, 1
      %s150 = scalar_select %p147, %s148, %s149
      %p153 = pneg %p147
      %p154 = scmp.eq.s32.totalorder %s28, 3
      %p155 = por %p153, %p154
      %p156 = scmp.ne.s32.totalorder %s148, %s151
      %p157 = scmp.eq.s32.totalorder %s28, 0
      %p158 = por %p156, %p157
      %p159 = scmp.ne.s32.totalorder %s148, %s151
      %p160 = scmp.eq.s32.totalorder %s33, 3
      %p161 = por %p159, %p160
      %p162 = scmp.ne.s32.totalorder %s151, %s152
      %p163 = scmp.eq.s32.totalorder %s33, 0
      %p164 = por %p162, %p163
      %p165 = scmp.ne.s32.totalorder %s151, %s152
      %p166 = scmp.eq.s32.totalorder %s34, 3
      %p167 = por %p165, %p166
      %p169 = scmp.ne.s32.totalorder %s152, %s168
      %p170 = scmp.eq.s32.totalorder %s34, 0
      %p171 = por %p169, %p170
      %s172 = ssub.s32 %s28, %s35
      %p173 = scmp.eq.s32.totalorder %s172, 0
      %s175 = sadd.s32 %s174, 1
      %s176 = scalar_select %p173, %s174, %s175
      %p179 = pneg %p173
      %p180 = scmp.eq.s32.totalorder %s28, 3
      %p181 = por %p179, %p180
      %p182 = scmp.ne.s32.totalorder %s174, %s177
      %p183 = scmp.eq.s32.totalorder %s28, 0
      %p184 = por %p182, %p183
      %p185 = scmp.ne.s32.totalorder %s174, %s177
      %p186 = scmp.eq.s32.totalorder %s33, 3
      %p187 = por %p185, %p186
      %p188 = scmp.ne.s32.totalorder %s177, %s178
      %p189 = scmp.eq.s32.totalorder %s33, 0
      %p190 = por %p188, %p189
      %p191 = scmp.ne.s32.totalorder %s177, %s178
      %p192 = scmp.eq.s32.totalorder %s34, 3
      %p193 = por %p191, %p192
      %p195 = scmp.ne.s32.totalorder %s178, %s194
      %p196 = scmp.eq.s32.totalorder %s34, 0
      %p197 = por %p195, %p196
      %s198 = ssub.s32 %s28, %s35
      %p199 = scmp.eq.s32.totalorder %s198, 0
      %s201 = sadd.s32 %s200, 1
      %s202 = scalar_select %p199, %s200, %s201
      %p205 = pneg %p199
      %p206 = scmp.eq.s32.totalorder %s28, 3
      %p207 = por %p205, %p206
      %p208 = scmp.ne.s32.totalorder %s200, %s203
      %p209 = scmp.eq.s32.totalorder %s28, 0
      %p210 = por %p208, %p209
      %p211 = scmp.ne.s32.totalorder %s200, %s203
      %p212 = scmp.eq.s32.totalorder %s33, 3
      %p213 = por %p211, %p212
      %p214 = scmp.ne.s32.totalorder %s203, %s204
      %p215 = scmp.eq.s32.totalorder %s33, 0
      %p216 = por %p214, %p215
      %p217 = scmp.ne.s32.totalorder %s203, %s204
      %p218 = scmp.eq.s32.totalorder %s34, 3
      %p219 = por %p217, %p218
      %p221 = scmp.ne.s32.totalorder %s204, %s220
      %p222 = scmp.eq.s32.totalorder %s34, 0
      %p223 = por %p221, %p222
      %s225 = sadd.s32 %s224, 1
      %p228 = scmp.eq.s32.totalorder %s28, 3
      %p229 = scmp.ne.s32.totalorder %s224, %s226
      %p230 = scmp.eq.s32.totalorder %s28, 0
      %p231 = por %p229, %p230
      %p232 = scmp.ne.s32.totalorder %s224, %s226
      %p233 = scmp.eq.s32.totalorder %s33, 3
      %p234 = por %p232, %p233
      %p235 = scmp.ne.s32.totalorder %s226, %s227
      %p236 = scmp.eq.s32.totalorder %s33, 0
      %p237 = por %p235, %p236
      %p238 = scmp.ne.s32.totalorder %s226, %s227
      %p239 = scmp.eq.s32.totalorder %s34, 3
      %p240 = por %p238, %p239
      %p242 = scmp.ne.s32.totalorder %s227, %s241
      %p243 = scmp.eq.s32.totalorder %s34, 0
      %p244 = por %p242, %p243
      %s246 = sadd.s32 %s245, 1
      %p249 = scmp.eq.s32.totalorder %s28, 3
      %p250 = scmp.ne.s32.totalorder %s245, %s247
      %p251 = scmp.eq.s32.totalorder %s28, 0
      %p252 = por %p250, %p251
      %p253 = scmp.ne.s32.totalorder %s245, %s247
      %p254 = scmp.eq.s32.totalorder %s33, 3
      %p255 = por %p253, %p254
      %p256 = scmp.ne.s32.totalorder %s247, %s248
      %p257 = scmp.eq.s32.totalorder %s33, 0
      %p258 = por %p256, %p257
      %p259 = scmp.ne.s32.totalorder %s247, %s248
      %p260 = scmp.eq.s32.totalorder %s34, 3
      %p261 = por %p259, %p260
      %p263 = scmp.ne.s32.totalorder %s248, %s262
      %p264 = scmp.eq.s32.totalorder %s34, 0
      %p265 = por %p263, %p264
      %s267 = sadd.s32 %s266, 1
      %p270 = scmp.eq.s32.totalorder %s28, 3
      %p271 = scmp.ne.s32.totalorder %s266, %s268
      %p272 = scmp.eq.s32.totalorder %s28, 0
      %p273 = por %p271, %p272
      %p274 = scmp.ne.s32.totalorder %s266, %s268
      %p275 = scmp.eq.s32.totalorder %s33, 3
      %p276 = por %p274, %p275
      %p277 = scmp.ne.s32.totalorder %s268, %s269
      %p278 = scmp.eq.s32.totalorder %s33, 0
      %p279 = por %p277, %p278
      %p280 = scmp.ne.s32.totalorder %s268, %s269
      %p281 = scmp.eq.s32.totalorder %s34, 3
      %p282 = por %p280, %p281
      %p284 = scmp.ne.s32.totalorder %s269, %s283
      %p285 = scmp.eq.s32.totalorder %s34, 0
      %p286 = por %p284, %p285
      %s288 = sadd.s32 %s287, 1
      %p291 = scmp.eq.s32.totalorder %s28, 3
      %p292 = scmp.ne.s32.totalorder %s287, %s289
      %p293 = scmp.eq.s32.totalorder %s28, 0
      %p294 = por %p292, %p293
      %p295 = scmp.ne.s32.totalorder %s287, %s289
      %p296 = scmp.eq.s32.totalorder %s33, 3
      %p297 = por %p295, %p296
      %p298 = scmp.ne.s32.totalorder %s289, %s290
      %p299 = scmp.eq.s32.totalorder %s33, 0
      %p300 = por %p298, %p299
      %p301 = scmp.ne.s32.totalorder %s289, %s290
      %p302 = scmp.eq.s32.totalorder %s34, 3
      %p303 = por %p301, %p302
      %p305 = scmp.ne.s32.totalorder %s290, %s304
      %p306 = scmp.eq.s32.totalorder %s34, 0
      %p307 = por %p305, %p306
      %p308 = scmp.le.s32.totalorder 1, %s28
      %p309 = scmp.lt.s32.totalorder %s28, 5
      %p310 = pnand %p308, %p309
      %p311 = pneg %p310
      // Predicated region
      $region9: #{critic_forward.1} parent=5 // pred_check
        _
      $region10: #{critic_forward.1} parent=5 // pred_check_branch
        %313 = sbr.rel (%p310) target = $region12
      $region11: #{critic_forward.1} parent=5 // pred_region
        %s314 = ssub.s32 %s28, 1
        // Predicated region
        $region13: #{critic_forward.1} parent=11 // pred_check
          %p315 = pneg %p49
        $region14: #{critic_forward.1} parent=11 // pred_check_branch
          %317 = sbr.rel (%p315) target = $region16
        $region15: #{critic_forward.1} parent=11 // pred_region
          _
        $region16: #{critic_forward.1} parent=11 // pred_fallthru
          _
        // Predicated region
        $region17: #{critic_forward.1} parent=11 // pred_check
          %p318 = pneg %p70
        $region18: #{critic_forward.1} parent=11 // pred_check_branch
          %320 = sbr.rel (%p318) target = $region20
        $region19: #{critic_forward.1} parent=11 // pred_region
          %s322 = ssub.s32 32, 32
          %323 = vsyncadd [#allocation6], %s322
          %s325 = sshll.u32 [#allocation5], 4
          %s326 = int_to_ptr.vmem [resolvable:$true] %s325
          %328 = dma.hbm_to_vmem [thread:$0]  %s1, 32, %s326, [#allocation6]
        $region20: #{critic_forward.1} parent=11 // pred_fallthru
          _
        // Predicated region
        $region21: #{critic_forward.1} parent=11 // pred_check
          %p329 = pneg %p91
        $region22: #{critic_forward.1} parent=11 // pred_check_branch
          %331 = sbr.rel (%p329) target = $region24
        $region23: #{critic_forward.1} parent=11 // pred_region
          %s333 = ssub.s32 32768, 32768
          %334 = vsyncadd [#allocation8], %s333
          %s335 = sshll.u32 [#allocation7], 4
          %s336 = int_to_ptr.vmem [resolvable:$true] %s335
          %341 = dma.hbm_to_vmem [thread:$0]  %s2, 32768, %s336, [#allocation8], 256, 256, 16
        $region24: #{critic_forward.1} parent=11 // pred_fallthru
          _
        // Predicated region
        $region25: #{critic_forward.1} parent=11 // pred_check
          %p342 = pneg %p112
        $region26: #{critic_forward.1} parent=11 // pred_check_branch
          %344 = sbr.rel (%p342) target = $region28
        $region27: #{critic_forward.1} parent=11 // pred_region
          %s346 = ssub.s32 64, 64
          %347 = vsyncadd [#allocation8], %s346
          %s349 = sshll.u32 [#allocation9], 4
          %s350 = int_to_ptr.vmem [resolvable:$true] %s349
          %352 = dma.hbm_to_vmem [thread:$0]  %s3, 64, %s350, [#allocation8]
        $region28: #{critic_forward.1} parent=11 // pred_fallthru
          _
        // Predicated region
        $region29: #{critic_forward.1} parent=11 // pred_check
          %p353 = pneg %p237
        $region30: #{critic_forward.1} parent=11 // pred_check_branch
          %355 = sbr.rel (%p353) target = $region32
        $region31: #{critic_forward.1} parent=11 // pred_region
          %s357 = ssub.s32 128, 128
          %358 = vsyncadd [#allocation17], %s357
          %s360 = sshll.u32 [#allocation16], 4
          %s361 = int_to_ptr.vmem [resolvable:$true] %s360
          %363 = dma.hbm_to_vmem [thread:$0]  %s8, 128, %s361, [#allocation17]
        $region32: #{critic_forward.1} parent=11 // pred_fallthru
          _
        // Predicated region
        $region33: #{critic_forward.1} parent=11 // pred_check
          %p364 = pneg %p258
        $region34: #{critic_forward.1} parent=11 // pred_check_branch
          %366 = sbr.rel (%p364) target = $region36
        $region35: #{critic_forward.1} parent=11 // pred_region
          %s368 = ssub.s32 128, 128
          %369 = vsyncadd [#allocation17], %s368
          %s371 = sshll.u32 [#allocation18], 4
          %s372 = int_to_ptr.vmem [resolvable:$true] %s371
          %374 = dma.hbm_to_vmem [thread:$0]  %s9, 128, %s372, [#allocation17]
        $region36: #{critic_forward.1} parent=11 // pred_fallthru
          _
        // Predicated region
        $region37: #{critic_forward.1} parent=11 // pred_check
          %p375 = pneg %p279
        $region38: #{critic_forward.1} parent=11 // pred_check_branch
          %377 = sbr.rel (%p375) target = $region40
        $region39: #{critic_forward.1} parent=11 // pred_region
          _
        $region40: #{critic_forward.1} parent=11 // pred_fallthru
          _
      $region12: #{critic_forward.1} parent=5 // pred_fallthru
        _
      %p378 = scmp.lt.s32.totalorder %s28, 4
      // Predicated region
      $region41: #{critic_forward.1} parent=5 // pred_check
        %p379 = pneg %p378
      $region42: #{critic_forward.1} parent=5 // pred_check_branch
        %381 = sbr.rel (%p379) target = $region44
      $region43: #{critic_forward.1} parent=5 // pred_region
        // Predicated region
        $region45: #{critic_forward.1} parent=43 // pred_check
          %p382 = pneg %p132
        $region46: #{critic_forward.1} parent=43 // pred_check_branch
          %384 = sbr.rel (%p382) target = $region48
        $region47: #{critic_forward.1} parent=43 // pred_region
          %s385 = sand.u32 %s28, 1
          %s386 = scalar_lea.sflag [#allocation11], %s385
          %s387 = sand.u32 %s122, 1
          %s388 = smul.addr %s387, 512
          %s389 = scalar_lea.vmem [#allocation10], %s388
          %s390 = smul.u32 2, %s28
          %s392 = ssub.s32 8192, 8192
          %393 = vsyncadd %s386, %s392
          %s394 = smul.addr %s390, 64
          %s395 = scalar_lea.hbm %s4, %s394
          %s396 = sshll.u32 %s389, 4
          %s397 = int_to_ptr.vmem [resolvable:$true] %s396
          %402 = dma.hbm_to_vmem [thread:$0]  %s395, 8192, %s397, %s386, 512, 128, 8
        $region48: #{critic_forward.1} parent=43 // pred_fallthru
          _
        // Predicated region
        $region49: #{critic_forward.1} parent=43 // pred_check
          %p403 = pneg %p158
        $region50: #{critic_forward.1} parent=43 // pred_check_branch
          %405 = sbr.rel (%p403) target = $region52
        $region51: #{critic_forward.1} parent=43 // pred_region
          %s406 = sand.u32 %s28, 1
          %s407 = scalar_lea.sflag [#allocation11], %s406
          %s408 = sand.u32 %s148, 1
          %s409 = smul.addr %s408, 8
          %s410 = scalar_lea.vmem [#allocation12], %s409
          %s411 = smul.u32 2, %s28
          %s413 = ssub.s32 128, 128
          %414 = vsyncadd %s407, %s413
          %s415 = smul.addr %s411, 64
          %s416 = scalar_lea.hbm %s5, %s415
          %s418 = sshll.u32 %s410, 4
          %s419 = int_to_ptr.vmem [resolvable:$true] %s418
          %421 = dma.hbm_to_vmem [thread:$0]  %s416, 128, %s419, %s407
        $region52: #{critic_forward.1} parent=43 // pred_fallthru
          _
        // Predicated region
        $region53: #{critic_forward.1} parent=43 // pred_check
          %p422 = pneg %p184
        $region54: #{critic_forward.1} parent=43 // pred_check_branch
          %424 = sbr.rel (%p422) target = $region56
        $region55: #{critic_forward.1} parent=43 // pred_region
          %s425 = sand.u32 %s28, 1
          %s426 = scalar_lea.sflag [#allocation14], %s425
          %s427 = sand.u32 %s174, 1
          %s428 = smul.addr %s427, 2
          %s429 = scalar_lea.vmem [#allocation13], %s428
          %s430 = smul.u32 2, %s28
          %s432 = ssub.s32 32, 32
          %433 = vsyncadd %s426, %s432
          %s434 = smul.addr %s430, 16
          %s435 = scalar_lea.hbm %s6, %s434
          %s437 = sshll.u32 %s429, 4
          %s438 = int_to_ptr.vmem [resolvable:$true] %s437
          %440 = dma.hbm_to_vmem [thread:$0]  %s435, 32, %s438, %s426
        $region56: #{critic_forward.1} parent=43 // pred_fallthru
          _
        // Predicated region
        $region57: #{critic_forward.1} parent=43 // pred_check
          %p441 = pneg %p210
        $region58: #{critic_forward.1} parent=43 // pred_check_branch
          %443 = sbr.rel (%p441) target = $region60
        $region59: #{critic_forward.1} parent=43 // pred_region
          %s444 = sand.u32 %s28, 1
          %s445 = scalar_lea.sflag [#allocation14], %s444
          %s446 = sand.u32 %s200, 1
          %s447 = smul.addr %s446, 1024
          %s448 = scalar_lea.vmem [#allocation15], %s447
          %s449 = smul.u32 32, %s28
          %s451 = ssub.s32 16384, 16384
          %452 = vsyncadd %s445, %s451
          %s453 = smul.addr %s449, 8
          %s454 = smul.addr %s453, 64
          %s455 = scalar_lea.hbm %s7, %s454
          %s456 = sshll.u32 %s448, 4
          %s457 = int_to_ptr.vmem [resolvable:$true] %s456
          %462 = dma.hbm_to_vmem [thread:$0]  %s455, 16384, %s457, %s445, 512, 512, 32
        $region60: #{critic_forward.1} parent=43 // pred_fallthru
          _
      $region44: #{critic_forward.1} parent=5 // pred_fallthru
        _
      %p463 = scmp.le.s32.totalorder 1, %s28
      %p464 = scmp.lt.s32.totalorder %s28, 5
      %p465 = pnand %p463, %p464
      %p466 = pneg %p465
      // Predicated region
      $region61: #{critic_forward.1} parent=5 // pred_check
        _
      $region62: #{critic_forward.1} parent=5 // pred_check_branch
        %468 = sbr.rel (%p465) target = $region64
      $region63: #{critic_forward.1} parent=5 // pred_region
        %s469 = ssub.s32 %s28, 1
        // Predicated region
        $region65: #{critic_forward.1} parent=63 // pred_check
          %p470 = pneg %p70
        $region66: #{critic_forward.1} parent=63 // pred_check_branch
          %472 = sbr.rel (%p470) target = $region68
        $region67: #{critic_forward.1} parent=63 // pred_region
          %473 = dma.done [#allocation6], 32
        $region68: #{critic_forward.1} parent=63 // pred_fallthru
          _
        // Predicated region
        $region69: #{critic_forward.1} parent=63 // pred_check
          %p474 = pneg %p91
        $region70: #{critic_forward.1} parent=63 // pred_check_branch
          %476 = sbr.rel (%p474) target = $region72
        $region71: #{critic_forward.1} parent=63 // pred_region
          %477 = dma.done [#allocation8], 32768
        $region72: #{critic_forward.1} parent=63 // pred_fallthru
          _
        // Predicated region
        $region73: #{critic_forward.1} parent=63 // pred_check
          %p478 = pneg %p112
        $region74: #{critic_forward.1} parent=63 // pred_check_branch
          %480 = sbr.rel (%p478) target = $region76
        $region75: #{critic_forward.1} parent=63 // pred_region
          %481 = dma.done [#allocation8], 64
        $region76: #{critic_forward.1} parent=63 // pred_fallthru
          _
        %s482 = sand.u32 %s33, 1
        %s483 = scalar_lea.sflag [#allocation11], %s482
        %s484 = sand.u32 %s125, 1
        %s485 = smul.addr %s484, 512
        %s486 = scalar_lea.vmem [#allocation10], %s485
        // Predicated region
        $region77: #{critic_forward.1} parent=63 // pred_check
          %p487 = pneg %p138
        $region78: #{critic_forward.1} parent=63 // pred_check_branch
          %489 = sbr.rel (%p487) target = $region80
        $region79: #{critic_forward.1} parent=63 // pred_region
          %490 = dma.done %s483, 8192
        $region80: #{critic_forward.1} parent=63 // pred_fallthru
          _
        %s491 = sand.u32 %s33, 1
        %s492 = scalar_lea.sflag [#allocation11], %s491
        %s493 = sand.u32 %s151, 1
        %s494 = smul.addr %s493, 8
        %s495 = scalar_lea.vmem [#allocation12], %s494
        // Predicated region
        $region81: #{critic_forward.1} parent=63 // pred_check
          %p496 = pneg %p164
        $region82: #{critic_forward.1} parent=63 // pred_check_branch
          %498 = sbr.rel (%p496) target = $region84
        $region83: #{critic_forward.1} parent=63 // pred_region
          %499 = dma.done %s492, 128
        $region84: #{critic_forward.1} parent=63 // pred_fallthru
          _
        %s500 = sand.u32 %s33, 1
        %s501 = scalar_lea.sflag [#allocation14], %s500
        %s502 = sand.u32 %s177, 1
        %s503 = smul.addr %s502, 2
        %s504 = scalar_lea.vmem [#allocation13], %s503
        // Predicated region
        $region85: #{critic_forward.1} parent=63 // pred_check
          %p505 = pneg %p190
        $region86: #{critic_forward.1} parent=63 // pred_check_branch
          %507 = sbr.rel (%p505) target = $region88
        $region87: #{critic_forward.1} parent=63 // pred_region
          %508 = dma.done %s501, 32
        $region88: #{critic_forward.1} parent=63 // pred_fallthru
          _
        %s509 = sand.u32 %s33, 1
        %s510 = scalar_lea.sflag [#allocation14], %s509
        %s511 = sand.u32 %s203, 1
        %s512 = smul.addr %s511, 1024
        %s513 = scalar_lea.vmem [#allocation15], %s512
        // Predicated region
        $region89: #{critic_forward.1} parent=63 // pred_check
          %p514 = pneg %p216
        $region90: #{critic_forward.1} parent=63 // pred_check_branch
          %516 = sbr.rel (%p514) target = $region92
        $region91: #{critic_forward.1} parent=63 // pred_region
          %517 = dma.done %s510, 16384
        $region92: #{critic_forward.1} parent=63 // pred_fallthru
          _
        // Predicated region
        $region93: #{critic_forward.1} parent=63 // pred_check
          %p518 = pneg %p237
        $region94: #{critic_forward.1} parent=63 // pred_check_branch
          %520 = sbr.rel (%p518) target = $region96
        $region95: #{critic_forward.1} parent=63 // pred_region
          %521 = dma.done [#allocation17], 128
        $region96: #{critic_forward.1} parent=63 // pred_fallthru
          _
        // Predicated region
        $region97: #{critic_forward.1} parent=63 // pred_check
          %p522 = pneg %p258
        $region98: #{critic_forward.1} parent=63 // pred_check_branch
          %524 = sbr.rel (%p522) target = $region100
        $region99: #{critic_forward.1} parent=63 // pred_region
          %525 = dma.done [#allocation17], 128
        $region100: #{critic_forward.1} parent=63 // pred_fallthru
          _
        %p526 = pneg %p49
        %p527 = pneg %p46
        %p528 = pneg %p70
        %p529 = pneg %p67
        %p530 = pneg %p91
        %p531 = pneg %p88
        %p532 = pneg %p112
        %p533 = pneg %p109
        %s534 = sand.u32 %s33, 1
        %s535 = scalar_lea.sflag [#allocation11], %s534
        %s536 = sand.u32 %s125, 1
        %s537 = smul.addr %s536, 512
        %s538 = scalar_lea.vmem [#allocation10], %s537
        %p539 = pneg %p138
        %p540 = pneg %p135
        %s541 = sand.u32 %s33, 1
        %s542 = scalar_lea.sflag [#allocation11], %s541
        %s543 = sand.u32 %s151, 1
        %s544 = smul.addr %s543, 8
        %s545 = scalar_lea.vmem [#allocation12], %s544
        %p546 = pneg %p164
        %p547 = pneg %p161
        %s548 = sand.u32 %s33, 1
        %s549 = scalar_lea.sflag [#allocation14], %s548
        %s550 = sand.u32 %s177, 1
        %s551 = smul.addr %s550, 2
        %s552 = scalar_lea.vmem [#allocation13], %s551
        %p553 = pneg %p190
        %p554 = pneg %p187
        %s555 = sand.u32 %s33, 1
        %s556 = scalar_lea.sflag [#allocation14], %s555
        %s557 = sand.u32 %s203, 1
        %s558 = smul.addr %s557, 1024
        %s559 = scalar_lea.vmem [#allocation15], %s558
        %p560 = pneg %p216
        %p561 = pneg %p213
        %p562 = pneg %p237
        %p563 = pneg %p234
        %p564 = pneg %p258
        %p565 = pneg %p255
        %p566 = pneg %p279
        %p567 = pneg %p276
        %p568 = pneg %p300
        %p569 = pneg %p297
        %s570 = smul.u32 2, %s33
        %s571 = smul.u32 2, %s33
        %s572 = smul.u32 2, %s33
        %s573 = smul.u32 32, %s33
        %p575 = scmp.eq.s32.totalorder %s33, 0
        // Predicated region
        $region101: #{critic_forward.1} parent=63 // pred_check
          %p576 = pneg %p575
        $region102: #{critic_forward.1} parent=63 // pred_check_branch
          %578 = sbr.rel (%p576) target = $region104
        $region103: #{critic_forward.1} parent=63 // pred_region
          %v579 = vld [vmem:[%s0] sm:$0xff]
          %v580 = vld [vmem:[%s0 + $0x8] sm:$0xff]
          %v583 = vcombine.high %v579, %v579
          %v585 = vunpack.c.l.s4 1983009808
          %v586 = vunpack.c.0.s8 %v585
          %v587 = vlaneseq
          %v588 = vshrl.u32 %v587, 7
          %v589 = vsub.s32 %v586, %v588
          %v590 = vrot.slane %v579, %v589
          %v592 = vunpack.c.l.s4 1983009808
          %v593 = vunpack.c.0.s8 %v592
          %v594 = vlaneseq
          %v595 = vshrl.u32 %v594, 7
          %v596 = vsub.s32 %v593, %v595
          %v597 = vrot.slane %v583, %v596
          %v598 = vcombine.high %v590, %v590
          %v599 = vcombine.high %v597, %v597
          %v600 = vcombine.high %v580, %v580
          %v602 = vunpack.c.l.s4 1983009808
          %v603 = vunpack.c.0.s8 %v602
          %v604 = vlaneseq
          %v605 = vshrl.u32 %v604, 7
          %v606 = vsub.s32 %v603, %v605
          %v607 = vrot.slane %v580, %v606
          %v609 = vunpack.c.l.s4 1983009808
          %v610 = vunpack.c.0.s8 %v609
          %v611 = vlaneseq
          %v612 = vshrl.u32 %v611, 7
          %v613 = vsub.s32 %v610, %v612
          %v614 = vrot.slane %v600, %v613
          %v615 = vcombine.high %v607, %v607
          %v616 = vcombine.high %v614, %v614
          %v625 = vpack.c.bf16 %v590, %v590
          %v626 = vpack.c.bf16 %v598, %v598
          %v627 = vpack.c.bf16 %v597, %v597
          %v628 = vpack.c.bf16 %v599, %v599
          %v629 = vpack.c.bf16 %v607, %v607
          %v630 = vpack.c.bf16 %v615, %v615
          %v631 = vpack.c.bf16 %v614, %v614
          %v632 = vpack.c.bf16 %v616, %v616
          %v633 = vld [vmem:[#allocation7] sm:$0xff]
          %v634 = vld [vmem:[#allocation7 + $0x8] sm:$0xff]
          %v635 = vld [vmem:[#allocation7 + $0x10] sm:$0xff]
          %v636 = vld [vmem:[#allocation7 + $0x18] sm:$0xff]
          %v637 = vld [vmem:[#allocation7 + $0x20] sm:$0xff]
          %v638 = vld [vmem:[#allocation7 + $0x28] sm:$0xff]
          %v639 = vld [vmem:[#allocation7 + $0x30] sm:$0xff]
          %v640 = vld [vmem:[#allocation7 + $0x38] sm:$0xff]
          %v641 = vld [vmem:[#allocation7 + $0x40] sm:$0xff]
          %v642 = vld [vmem:[#allocation7 + $0x48] sm:$0xff]
          %v643 = vld [vmem:[#allocation7 + $0x50] sm:$0xff]
          %v644 = vld [vmem:[#allocation7 + $0x58] sm:$0xff]
          %v645 = vld [vmem:[#allocation7 + $0x60] sm:$0xff]
          %v646 = vld [vmem:[#allocation7 + $0x68] sm:$0xff]
          %v647 = vld [vmem:[#allocation7 + $0x70] sm:$0xff]
          %v648 = vld [vmem:[#allocation7 + $0x78] sm:$0xff]
          %v649 = vld [vmem:[#allocation7 + $0x80] sm:$0xff]
          %v650 = vld [vmem:[#allocation7 + $0x88] sm:$0xff]
          %v651 = vld [vmem:[#allocation7 + $0x90] sm:$0xff]
          %v652 = vld [vmem:[#allocation7 + $0x98] sm:$0xff]
          %v653 = vld [vmem:[#allocation7 + $0xa0] sm:$0xff]
          %v654 = vld [vmem:[#allocation7 + $0xa8] sm:$0xff]
          %v655 = vld [vmem:[#allocation7 + $0xb0] sm:$0xff]
          %v656 = vld [vmem:[#allocation7 + $0xb8] sm:$0xff]
          %v657 = vld [vmem:[#allocation7 + $0xc0] sm:$0xff]
          %v658 = vld [vmem:[#allocation7 + $0xc8] sm:$0xff]
          %v659 = vld [vmem:[#allocation7 + $0xd0] sm:$0xff]
          %v660 = vld [vmem:[#allocation7 + $0xd8] sm:$0xff]
          %v661 = vld [vmem:[#allocation7 + $0xe0] sm:$0xff]
          %v662 = vld [vmem:[#allocation7 + $0xe8] sm:$0xff]
          %v663 = vld [vmem:[#allocation7 + $0xf0] sm:$0xff]
          %v664 = vld [vmem:[#allocation7 + $0xf8] sm:$0xff]
          %v665 = vld [vmem:[#allocation7 + $0x100] sm:$0xff]
          %v666 = vld [vmem:[#allocation7 + $0x108] sm:$0xff]
          %v667 = vld [vmem:[#allocation7 + $0x110] sm:$0xff]
          %v668 = vld [vmem:[#allocation7 + $0x118] sm:$0xff]
          %v669 = vld [vmem:[#allocation7 + $0x120] sm:$0xff]
          %v670 = vld [vmem:[#allocation7 + $0x128] sm:$0xff]
          %v671 = vld [vmem:[#allocation7 + $0x130] sm:$0xff]
          %v672 = vld [vmem:[#allocation7 + $0x138] sm:$0xff]
          %v673 = vld [vmem:[#allocation7 + $0x140] sm:$0xff]
          %v674 = vld [vmem:[#allocation7 + $0x148] sm:$0xff]
          %v675 = vld [vmem:[#allocation7 + $0x150] sm:$0xff]
          %v676 = vld [vmem:[#allocation7 + $0x158] sm:$0xff]
          %v677 = vld [vmem:[#allocation7 + $0x160] sm:$0xff]
          %v678 = vld [vmem:[#allocation7 + $0x168] sm:$0xff]
          %v679 = vld [vmem:[#allocation7 + $0x170] sm:$0xff]
          %v680 = vld [vmem:[#allocation7 + $0x178] sm:$0xff]
          %v681 = vld [vmem:[#allocation7 + $0x180] sm:$0xff]
          %v682 = vld [vmem:[#allocation7 + $0x188] sm:$0xff]
          %v683 = vld [vmem:[#allocation7 + $0x190] sm:$0xff]
          %v684 = vld [vmem:[#allocation7 + $0x198] sm:$0xff]
          %v685 = vld [vmem:[#allocation7 + $0x1a0] sm:$0xff]
          %v686 = vld [vmem:[#allocation7 + $0x1a8] sm:$0xff]
          %v687 = vld [vmem:[#allocation7 + $0x1b0] sm:$0xff]
          %v688 = vld [vmem:[#allocation7 + $0x1b8] sm:$0xff]
          %v689 = vld [vmem:[#allocation7 + $0x1c0] sm:$0xff]
          %v690 = vld [vmem:[#allocation7 + $0x1c8] sm:$0xff]
          %v691 = vld [vmem:[#allocation7 + $0x1d0] sm:$0xff]
          %v692 = vld [vmem:[#allocation7 + $0x1d8] sm:$0xff]
          %v693 = vld [vmem:[#allocation7 + $0x1e0] sm:$0xff]
          %v694 = vld [vmem:[#allocation7 + $0x1e8] sm:$0xff]
          %v695 = vld [vmem:[#allocation7 + $0x1f0] sm:$0xff]
          %v696 = vld [vmem:[#allocation7 + $0x1f8] sm:$0xff]
          %v697 = vld [vmem:[#allocation7 + $0x200] sm:$0xff]
          %v698 = vld [vmem:[#allocation7 + $0x208] sm:$0xff]
          %v699 = vld [vmem:[#allocation7 + $0x210] sm:$0xff]
          %v700 = vld [vmem:[#allocation7 + $0x218] sm:$0xff]
          %v701 = vld [vmem:[#allocation7 + $0x220] sm:$0xff]
          %v702 = vld [vmem:[#allocation7 + $0x228] sm:$0xff]
          %v703 = vld [vmem:[#allocation7 + $0x230] sm:$0xff]
          %v704 = vld [vmem:[#allocation7 + $0x238] sm:$0xff]
          %v705 = vld [vmem:[#allocation7 + $0x240] sm:$0xff]
          %v706 = vld [vmem:[#allocation7 + $0x248] sm:$0xff]
          %v707 = vld [vmem:[#allocation7 + $0x250] sm:$0xff]
          %v708 = vld [vmem:[#allocation7 + $0x258] sm:$0xff]
          %v709 = vld [vmem:[#allocation7 + $0x260] sm:$0xff]
          %v710 = vld [vmem:[#allocation7 + $0x268] sm:$0xff]
          %v711 = vld [vmem:[#allocation7 + $0x270] sm:$0xff]
          %v712 = vld [vmem:[#allocation7 + $0x278] sm:$0xff]
          %v713 = vld [vmem:[#allocation7 + $0x280] sm:$0xff]
          %v714 = vld [vmem:[#allocation7 + $0x288] sm:$0xff]
          %v715 = vld [vmem:[#allocation7 + $0x290] sm:$0xff]
          %v716 = vld [vmem:[#allocation7 + $0x298] sm:$0xff]
          %v717 = vld [vmem:[#allocation7 + $0x2a0] sm:$0xff]
          %v718 = vld [vmem:[#allocation7 + $0x2a8] sm:$0xff]
          %v719 = vld [vmem:[#allocation7 + $0x2b0] sm:$0xff]
          %v720 = vld [vmem:[#allocation7 + $0x2b8] sm:$0xff]
          %v721 = vld [vmem:[#allocation7 + $0x2c0] sm:$0xff]
          %v722 = vld [vmem:[#allocation7 + $0x2c8] sm:$0xff]
          %v723 = vld [vmem:[#allocation7 + $0x2d0] sm:$0xff]
          %v724 = vld [vmem:[#allocation7 + $0x2d8] sm:$0xff]
          %v725 = vld [vmem:[#allocation7 + $0x2e0] sm:$0xff]
          %v726 = vld [vmem:[#allocation7 + $0x2e8] sm:$0xff]
          %v727 = vld [vmem:[#allocation7 + $0x2f0] sm:$0xff]
          %v728 = vld [vmem:[#allocation7 + $0x2f8] sm:$0xff]
          %v729 = vld [vmem:[#allocation7 + $0x300] sm:$0xff]
          %v730 = vld [vmem:[#allocation7 + $0x308] sm:$0xff]
          %v731 = vld [vmem:[#allocation7 + $0x310] sm:$0xff]
          %v732 = vld [vmem:[#allocation7 + $0x318] sm:$0xff]
          %v733 = vld [vmem:[#allocation7 + $0x320] sm:$0xff]
          %v734 = vld [vmem:[#allocation7 + $0x328] sm:$0xff]
          %v735 = vld [vmem:[#allocation7 + $0x330] sm:$0xff]
          %v736 = vld [vmem:[#allocation7 + $0x338] sm:$0xff]
          %v737 = vld [vmem:[#allocation7 + $0x340] sm:$0xff]
          %v738 = vld [vmem:[#allocation7 + $0x348] sm:$0xff]
          %v739 = vld [vmem:[#allocation7 + $0x350] sm:$0xff]
          %v740 = vld [vmem:[#allocation7 + $0x358] sm:$0xff]
          %v741 = vld [vmem:[#allocation7 + $0x360] sm:$0xff]
          %v742 = vld [vmem:[#allocation7 + $0x368] sm:$0xff]
          %v743 = vld [vmem:[#allocation7 + $0x370] sm:$0xff]
          %v744 = vld [vmem:[#allocation7 + $0x378] sm:$0xff]
          %v745 = vld [vmem:[#allocation7 + $0x380] sm:$0xff]
          %v746 = vld [vmem:[#allocation7 + $0x388] sm:$0xff]
          %v747 = vld [vmem:[#allocation7 + $0x390] sm:$0xff]
          %v748 = vld [vmem:[#allocation7 + $0x398] sm:$0xff]
          %v749 = vld [vmem:[#allocation7 + $0x3a0] sm:$0xff]
          %v750 = vld [vmem:[#allocation7 + $0x3a8] sm:$0xff]
          %v751 = vld [vmem:[#allocation7 + $0x3b0] sm:$0xff]
          %v752 = vld [vmem:[#allocation7 + $0x3b8] sm:$0xff]
          %v753 = vld [vmem:[#allocation7 + $0x3c0] sm:$0xff]
          %v754 = vld [vmem:[#allocation7 + $0x3c8] sm:$0xff]
          %v755 = vld [vmem:[#allocation7 + $0x3d0] sm:$0xff]
          %v756 = vld [vmem:[#allocation7 + $0x3d8] sm:$0xff]
          %v757 = vld [vmem:[#allocation7 + $0x3e0] sm:$0xff]
          %v758 = vld [vmem:[#allocation7 + $0x3e8] sm:$0xff]
          %v759 = vld [vmem:[#allocation7 + $0x3f0] sm:$0xff]
          %v760 = vld [vmem:[#allocation7 + $0x3f8] sm:$0xff]
          %v761 = vld [vmem:[#allocation7 + $0x400] sm:$0xff]
          %v762 = vld [vmem:[#allocation7 + $0x408] sm:$0xff]
          %v763 = vld [vmem:[#allocation7 + $0x410] sm:$0xff]
          %v764 = vld [vmem:[#allocation7 + $0x418] sm:$0xff]
          %v765 = vld [vmem:[#allocation7 + $0x420] sm:$0xff]
          %v766 = vld [vmem:[#allocation7 + $0x428] sm:$0xff]
          %v767 = vld [vmem:[#allocation7 + $0x430] sm:$0xff]
          %v768 = vld [vmem:[#allocation7 + $0x438] sm:$0xff]
          %v769 = vld [vmem:[#allocation7 + $0x440] sm:$0xff]
          %v770 = vld [vmem:[#allocation7 + $0x448] sm:$0xff]
          %v771 = vld [vmem:[#allocation7 + $0x450] sm:$0xff]
          %v772 = vld [vmem:[#allocation7 + $0x458] sm:$0xff]
          %v773 = vld [vmem:[#allocation7 + $0x460] sm:$0xff]
          %v774 = vld [vmem:[#allocation7 + $0x468] sm:$0xff]
          %v775 = vld [vmem:[#allocation7 + $0x470] sm:$0xff]
          %v776 = vld [vmem:[#allocation7 + $0x478] sm:$0xff]
          %v777 = vld [vmem:[#allocation7 + $0x480] sm:$0xff]
          %v778 = vld [vmem:[#allocation7 + $0x488] sm:$0xff]
          %v779 = vld [vmem:[#allocation7 + $0x490] sm:$0xff]
          %v780 = vld [vmem:[#allocation7 + $0x498] sm:$0xff]
          %v781 = vld [vmem:[#allocation7 + $0x4a0] sm:$0xff]
          %v782 = vld [vmem:[#allocation7 + $0x4a8] sm:$0xff]
          %v783 = vld [vmem:[#allocation7 + $0x4b0] sm:$0xff]
          %v784 = vld [vmem:[#allocation7 + $0x4b8] sm:$0xff]
          %v785 = vld [vmem:[#allocation7 + $0x4c0] sm:$0xff]
          %v786 = vld [vmem:[#allocation7 + $0x4c8] sm:$0xff]
          %v787 = vld [vmem:[#allocation7 + $0x4d0] sm:$0xff]
          %v788 = vld [vmem:[#allocation7 + $0x4d8] sm:$0xff]
          %v789 = vld [vmem:[#allocation7 + $0x4e0] sm:$0xff]
          %v790 = vld [vmem:[#allocation7 + $0x4e8] sm:$0xff]
          %v791 = vld [vmem:[#allocation7 + $0x4f0] sm:$0xff]
          %v792 = vld [vmem:[#allocation7 + $0x4f8] sm:$0xff]
          %v793 = vld [vmem:[#allocation7 + $0x500] sm:$0xff]
          %v794 = vld [vmem:[#allocation7 + $0x508] sm:$0xff]
          %v795 = vld [vmem:[#allocation7 + $0x510] sm:$0xff]
          %v796 = vld [vmem:[#allocation7 + $0x518] sm:$0xff]
          %v797 = vld [vmem:[#allocation7 + $0x520] sm:$0xff]
          %v798 = vld [vmem:[#allocation7 + $0x528] sm:$0xff]
          %v799 = vld [vmem:[#allocation7 + $0x530] sm:$0xff]
          %v800 = vld [vmem:[#allocation7 + $0x538] sm:$0xff]
          %v801 = vld [vmem:[#allocation7 + $0x540] sm:$0xff]
          %v802 = vld [vmem:[#allocation7 + $0x548] sm:$0xff]
          %v803 = vld [vmem:[#allocation7 + $0x550] sm:$0xff]
          %v804 = vld [vmem:[#allocation7 + $0x558] sm:$0xff]
          %v805 = vld [vmem:[#allocation7 + $0x560] sm:$0xff]
          %v806 = vld [vmem:[#allocation7 + $0x568] sm:$0xff]
          %v807 = vld [vmem:[#allocation7 + $0x570] sm:$0xff]
          %v808 = vld [vmem:[#allocation7 + $0x578] sm:$0xff]
          %v809 = vld [vmem:[#allocation7 + $0x580] sm:$0xff]
          %v810 = vld [vmem:[#allocation7 + $0x588] sm:$0xff]
          %v811 = vld [vmem:[#allocation7 + $0x590] sm:$0xff]
          %v812 = vld [vmem:[#allocation7 + $0x598] sm:$0xff]
          %v813 = vld [vmem:[#allocation7 + $0x5a0] sm:$0xff]
          %v814 = vld [vmem:[#allocation7 + $0x5a8] sm:$0xff]
          %v815 = vld [vmem:[#allocation7 + $0x5b0] sm:$0xff]
          %v816 = vld [vmem:[#allocation7 + $0x5b8] sm:$0xff]
          %v817 = vld [vmem:[#allocation7 + $0x5c0] sm:$0xff]
          %v818 = vld [vmem:[#allocation7 + $0x5c8] sm:$0xff]
          %v819 = vld [vmem:[#allocation7 + $0x5d0] sm:$0xff]
          %v820 = vld [vmem:[#allocation7 + $0x5d8] sm:$0xff]
          %v821 = vld [vmem:[#allocation7 + $0x5e0] sm:$0xff]
          %v822 = vld [vmem:[#allocation7 + $0x5e8] sm:$0xff]
          %v823 = vld [vmem:[#allocation7 + $0x5f0] sm:$0xff]
          %v824 = vld [vmem:[#allocation7 + $0x5f8] sm:$0xff]
          %v825 = vld [vmem:[#allocation7 + $0x600] sm:$0xff]
          %v826 = vld [vmem:[#allocation7 + $0x608] sm:$0xff]
          %v827 = vld [vmem:[#allocation7 + $0x610] sm:$0xff]
          %v828 = vld [vmem:[#allocation7 + $0x618] sm:$0xff]
          %v829 = vld [vmem:[#allocation7 + $0x620] sm:$0xff]
          %v830 = vld [vmem:[#allocation7 + $0x628] sm:$0xff]
          %v831 = vld [vmem:[#allocation7 + $0x630] sm:$0xff]
          %v832 = vld [vmem:[#allocation7 + $0x638] sm:$0xff]
          %v833 = vld [vmem:[#allocation7 + $0x640] sm:$0xff]
          %v834 = vld [vmem:[#allocation7 + $0x648] sm:$0xff]
          %v835 = vld [vmem:[#allocation7 + $0x650] sm:$0xff]
          %v836 = vld [vmem:[#allocation7 + $0x658] sm:$0xff]
          %v837 = vld [vmem:[#allocation7 + $0x660] sm:$0xff]
          %v838 = vld [vmem:[#allocation7 + $0x668] sm:$0xff]
          %v839 = vld [vmem:[#allocation7 + $0x670] sm:$0xff]
          %v840 = vld [vmem:[#allocation7 + $0x678] sm:$0xff]
          %v841 = vld [vmem:[#allocation7 + $0x680] sm:$0xff]
          %v842 = vld [vmem:[#allocation7 + $0x688] sm:$0xff]
          %v843 = vld [vmem:[#allocation7 + $0x690] sm:$0xff]
          %v844 = vld [vmem:[#allocation7 + $0x698] sm:$0xff]
          %v845 = vld [vmem:[#allocation7 + $0x6a0] sm:$0xff]
          %v846 = vld [vmem:[#allocation7 + $0x6a8] sm:$0xff]
          %v847 = vld [vmem:[#allocation7 + $0x6b0] sm:$0xff]
          %v848 = vld [vmem:[#allocation7 + $0x6b8] sm:$0xff]
          %v849 = vld [vmem:[#allocation7 + $0x6c0] sm:$0xff]
          %v850 = vld [vmem:[#allocation7 + $0x6c8] sm:$0xff]
          %v851 = vld [vmem:[#allocation7 + $0x6d0] sm:$0xff]
          %v852 = vld [vmem:[#allocation7 + $0x6d8] sm:$0xff]
          %v853 = vld [vmem:[#allocation7 + $0x6e0] sm:$0xff]
          %v854 = vld [vmem:[#allocation7 + $0x6e8] sm:$0xff]
          %v855 = vld [vmem:[#allocation7 + $0x6f0] sm:$0xff]
          %v856 = vld [vmem:[#allocation7 + $0x6f8] sm:$0xff]
          %v857 = vld [vmem:[#allocation7 + $0x700] sm:$0xff]
          %v858 = vld [vmem:[#allocation7 + $0x708] sm:$0xff]
          %v859 = vld [vmem:[#allocation7 + $0x710] sm:$0xff]
          %v860 = vld [vmem:[#allocation7 + $0x718] sm:$0xff]
          %v861 = vld [vmem:[#allocation7 + $0x720] sm:$0xff]
          %v862 = vld [vmem:[#allocation7 + $0x728] sm:$0xff]
          %v863 = vld [vmem:[#allocation7 + $0x730] sm:$0xff]
          %v864 = vld [vmem:[#allocation7 + $0x738] sm:$0xff]
          %v865 = vld [vmem:[#allocation7 + $0x740] sm:$0xff]
          %v866 = vld [vmem:[#allocation7 + $0x748] sm:$0xff]
          %v867 = vld [vmem:[#allocation7 + $0x750] sm:$0xff]
          %v868 = vld [vmem:[#allocation7 + $0x758] sm:$0xff]
          %v869 = vld [vmem:[#allocation7 + $0x760] sm:$0xff]
          %v870 = vld [vmem:[#allocation7 + $0x768] sm:$0xff]
          %v871 = vld [vmem:[#allocation7 + $0x770] sm:$0xff]
          %v872 = vld [vmem:[#allocation7 + $0x778] sm:$0xff]
          %v873 = vld [vmem:[#allocation7 + $0x780] sm:$0xff]
          %v874 = vld [vmem:[#allocation7 + $0x788] sm:$0xff]
          %v875 = vld [vmem:[#allocation7 + $0x790] sm:$0xff]
          %v876 = vld [vmem:[#allocation7 + $0x798] sm:$0xff]
          %v877 = vld [vmem:[#allocation7 + $0x7a0] sm:$0xff]
          %v878 = vld [vmem:[#allocation7 + $0x7a8] sm:$0xff]
          %v879 = vld [vmem:[#allocation7 + $0x7b0] sm:$0xff]
          %v880 = vld [vmem:[#allocation7 + $0x7b8] sm:$0xff]
          %v881 = vld [vmem:[#allocation7 + $0x7c0] sm:$0xff]
          %v882 = vld [vmem:[#allocation7 + $0x7c8] sm:$0xff]
          %v883 = vld [vmem:[#allocation7 + $0x7d0] sm:$0xff]
          %v884 = vld [vmem:[#allocation7 + $0x7d8] sm:$0xff]
          %v885 = vld [vmem:[#allocation7 + $0x7e0] sm:$0xff]
          %v886 = vld [vmem:[#allocation7 + $0x7e8] sm:$0xff]
          %v887 = vld [vmem:[#allocation7 + $0x7f0] sm:$0xff]
          %v888 = vld [vmem:[#allocation7 + $0x7f8] sm:$0xff]
          %v889 = vld [vmem:[#allocation9] sm:$0xf]
          %v891 = vlaneseq
          %v892 = vshrl.u32 %v891, 7
          %v893 = vsub.s32 0, %v892
          %v894 = vrot.slane %v889, %v893
          %v895 = vlaneseq
          %v896 = vshrl.u32 %v895, 7
          %v897 = vsub.s32 1, %v896
          %v898 = vrot.slane %v889, %v897
          %v899 = vlaneseq
          %v900 = vshrl.u32 %v899, 7
          %v901 = vsub.s32 2, %v900
          %v902 = vrot.slane %v889, %v901
          %v903 = vlaneseq
          %v904 = vshrl.u32 %v903, 7
          %v905 = vsub.s32 3, %v904
          %v906 = vrot.slane %v889, %v905
          %v1167 = vunpack.c.l.b16 %v633
          %v1168 = vunpack.c.h.b16 %v633
          %v1169 = vunpack.c.l.b16 %v634
          %v1170 = vunpack.c.h.b16 %v634
          %v1171 = vunpack.c.l.b16 %v635
          %v1172 = vunpack.c.h.b16 %v635
          %v1173 = vunpack.c.l.b16 %v636
          %v1174 = vunpack.c.h.b16 %v636
          %v1175 = vunpack.c.l.b16 %v637
          %v1176 = vunpack.c.h.b16 %v637
          %v1177 = vunpack.c.l.b16 %v638
          %v1178 = vunpack.c.h.b16 %v638
          %v1179 = vunpack.c.l.b16 %v639
          %v1180 = vunpack.c.h.b16 %v639
          %v1181 = vunpack.c.l.b16 %v640
          %v1182 = vunpack.c.h.b16 %v640
          %v1183 = vunpack.c.l.b16 %v641
          %v1184 = vunpack.c.h.b16 %v641
          %v1185 = vunpack.c.l.b16 %v642
          %v1186 = vunpack.c.h.b16 %v642
          %v1187 = vunpack.c.l.b16 %v643
          %v1188 = vunpack.c.h.b16 %v643
          %v1189 = vunpack.c.l.b16 %v644
          %v1190 = vunpack.c.h.b16 %v644
          %v1191 = vunpack.c.l.b16 %v645
          %v1192 = vunpack.c.h.b16 %v645
          %v1193 = vunpack.c.l.b16 %v646
          %v1194 = vunpack.c.h.b16 %v646
          %v1195 = vunpack.c.l.b16 %v647
          %v1196 = vunpack.c.h.b16 %v647
          %v1197 = vunpack.c.l.b16 %v648
          %v1198 = vunpack.c.h.b16 %v648
          %v1199 = vunpack.c.l.b16 %v649
          %v1200 = vunpack.c.h.b16 %v649
          %v1201 = vunpack.c.l.b16 %v650
          %v1202 = vunpack.c.h.b16 %v650
          %v1203 = vunpack.c.l.b16 %v651
          %v1204 = vunpack.c.h.b16 %v651
          %v1205 = vunpack.c.l.b16 %v652
          %v1206 = vunpack.c.h.b16 %v652
          %v1207 = vunpack.c.l.b16 %v653
          %v1208 = vunpack.c.h.b16 %v653
          %v1209 = vunpack.c.l.b16 %v654
          %v1210 = vunpack.c.h.b16 %v654
          %v1211 = vunpack.c.l.b16 %v655
          %v1212 = vunpack.c.h.b16 %v655
          %v1213 = vunpack.c.l.b16 %v656
          %v1214 = vunpack.c.h.b16 %v656
          %v1215 = vunpack.c.l.b16 %v657
          %v1216 = vunpack.c.h.b16 %v657
          %v1217 = vunpack.c.l.b16 %v658
          %v1218 = vunpack.c.h.b16 %v658
          %v1219 = vunpack.c.l.b16 %v659
          %v1220 = vunpack.c.h.b16 %v659
          %v1221 = vunpack.c.l.b16 %v660
          %v1222 = vunpack.c.h.b16 %v660
          %v1223 = vunpack.c.l.b16 %v661
          %v1224 = vunpack.c.h.b16 %v661
          %v1225 = vunpack.c.l.b16 %v662
          %v1226 = vunpack.c.h.b16 %v662
          %v1227 = vunpack.c.l.b16 %v663
          %v1228 = vunpack.c.h.b16 %v663
          %v1229 = vunpack.c.l.b16 %v664
          %v1230 = vunpack.c.h.b16 %v664
          %v1231 = vunpack.c.l.b16 %v665
          %v1232 = vunpack.c.h.b16 %v665
          %v1233 = vunpack.c.l.b16 %v666
          %v1234 = vunpack.c.h.b16 %v666
          %v1235 = vunpack.c.l.b16 %v667
          %v1236 = vunpack.c.h.b16 %v667
          %v1237 = vunpack.c.l.b16 %v668
          %v1238 = vunpack.c.h.b16 %v668
          %v1239 = vunpack.c.l.b16 %v669
          %v1240 = vunpack.c.h.b16 %v669
          %v1241 = vunpack.c.l.b16 %v670
          %v1242 = vunpack.c.h.b16 %v670
          %v1243 = vunpack.c.l.b16 %v671
          %v1244 = vunpack.c.h.b16 %v671
          %v1245 = vunpack.c.l.b16 %v672
          %v1246 = vunpack.c.h.b16 %v672
          %v1247 = vunpack.c.l.b16 %v673
          %v1248 = vunpack.c.h.b16 %v673
          %v1249 = vunpack.c.l.b16 %v674
          %v1250 = vunpack.c.h.b16 %v674
          %v1251 = vunpack.c.l.b16 %v675
          %v1252 = vunpack.c.h.b16 %v675
          %v1253 = vunpack.c.l.b16 %v676
          %v1254 = vunpack.c.h.b16 %v676
          %v1255 = vunpack.c.l.b16 %v677
          %v1256 = vunpack.c.h.b16 %v677
          %v1257 = vunpack.c.l.b16 %v678
          %v1258 = vunpack.c.h.b16 %v678
          %v1259 = vunpack.c.l.b16 %v679
          %v1260 = vunpack.c.h.b16 %v679
          %v1261 = vunpack.c.l.b16 %v680
          %v1262 = vunpack.c.h.b16 %v680
          %v1263 = vunpack.c.l.b16 %v681
          %v1264 = vunpack.c.h.b16 %v681
          %v1265 = vunpack.c.l.b16 %v682
          %v1266 = vunpack.c.h.b16 %v682
          %v1267 = vunpack.c.l.b16 %v683
          %v1268 = vunpack.c.h.b16 %v683
          %v1269 = vunpack.c.l.b16 %v684
          %v1270 = vunpack.c.h.b16 %v684
          %v1271 = vunpack.c.l.b16 %v685
          %v1272 = vunpack.c.h.b16 %v685
          %v1273 = vunpack.c.l.b16 %v686
          %v1274 = vunpack.c.h.b16 %v686
          %v1275 = vunpack.c.l.b16 %v687
          %v1276 = vunpack.c.h.b16 %v687
          %v1277 = vunpack.c.l.b16 %v688
          %v1278 = vunpack.c.h.b16 %v688
          %v1279 = vunpack.c.l.b16 %v689
          %v1280 = vunpack.c.h.b16 %v689
          %v1281 = vunpack.c.l.b16 %v690
          %v1282 = vunpack.c.h.b16 %v690
          %v1283 = vunpack.c.l.b16 %v691
          %v1284 = vunpack.c.h.b16 %v691
          %v1285 = vunpack.c.l.b16 %v692
          %v1286 = vunpack.c.h.b16 %v692
          %v1287 = vunpack.c.l.b16 %v693
          %v1288 = vunpack.c.h.b16 %v693
          %v1289 = vunpack.c.l.b16 %v694
          %v1290 = vunpack.c.h.b16 %v694
          %v1291 = vunpack.c.l.b16 %v695
          %v1292 = vunpack.c.h.b16 %v695
          %v1293 = vunpack.c.l.b16 %v696
          %v1294 = vunpack.c.h.b16 %v696
          %v1295 = vunpack.c.l.b16 %v697
          %v1296 = vunpack.c.h.b16 %v697
          %v1297 = vunpack.c.l.b16 %v698
          %v1298 = vunpack.c.h.b16 %v698
          %v1299 = vunpack.c.l.b16 %v699
          %v1300 = vunpack.c.h.b16 %v699
          %v1301 = vunpack.c.l.b16 %v700
          %v1302 = vunpack.c.h.b16 %v700
          %v1303 = vunpack.c.l.b16 %v701
          %v1304 = vunpack.c.h.b16 %v701
          %v1305 = vunpack.c.l.b16 %v702
          %v1306 = vunpack.c.h.b16 %v702
          %v1307 = vunpack.c.l.b16 %v703
          %v1308 = vunpack.c.h.b16 %v703
          %v1309 = vunpack.c.l.b16 %v704
          %v1310 = vunpack.c.h.b16 %v704
          %v1311 = vunpack.c.l.b16 %v705
          %v1312 = vunpack.c.h.b16 %v705
          %v1313 = vunpack.c.l.b16 %v706
          %v1314 = vunpack.c.h.b16 %v706
          %v1315 = vunpack.c.l.b16 %v707
          %v1316 = vunpack.c.h.b16 %v707
          %v1317 = vunpack.c.l.b16 %v708
          %v1318 = vunpack.c.h.b16 %v708
          %v1319 = vunpack.c.l.b16 %v709
          %v1320 = vunpack.c.h.b16 %v709
          %v1321 = vunpack.c.l.b16 %v710
          %v1322 = vunpack.c.h.b16 %v710
          %v1323 = vunpack.c.l.b16 %v711
          %v1324 = vunpack.c.h.b16 %v711
          %v1325 = vunpack.c.l.b16 %v712
          %v1326 = vunpack.c.h.b16 %v712
          %v1327 = vunpack.c.l.b16 %v713
          %v1328 = vunpack.c.h.b16 %v713
          %v1329 = vunpack.c.l.b16 %v714
          %v1330 = vunpack.c.h.b16 %v714
          %v1331 = vunpack.c.l.b16 %v715
          %v1332 = vunpack.c.h.b16 %v715
          %v1333 = vunpack.c.l.b16 %v716
          %v1334 = vunpack.c.h.b16 %v716
          %v1335 = vunpack.c.l.b16 %v717
          %v1336 = vunpack.c.h.b16 %v717
          %v1337 = vunpack.c.l.b16 %v718
          %v1338 = vunpack.c.h.b16 %v718
          %v1339 = vunpack.c.l.b16 %v719
          %v1340 = vunpack.c.h.b16 %v719
          %v1341 = vunpack.c.l.b16 %v720
          %v1342 = vunpack.c.h.b16 %v720
          %v1343 = vunpack.c.l.b16 %v721
          %v1344 = vunpack.c.h.b16 %v721
          %v1345 = vunpack.c.l.b16 %v722
          %v1346 = vunpack.c.h.b16 %v722
          %v1347 = vunpack.c.l.b16 %v723
          %v1348 = vunpack.c.h.b16 %v723
          %v1349 = vunpack.c.l.b16 %v724
          %v1350 = vunpack.c.h.b16 %v724
          %v1351 = vunpack.c.l.b16 %v725
          %v1352 = vunpack.c.h.b16 %v725
          %v1353 = vunpack.c.l.b16 %v726
          %v1354 = vunpack.c.h.b16 %v726
          %v1355 = vunpack.c.l.b16 %v727
          %v1356 = vunpack.c.h.b16 %v727
          %v1357 = vunpack.c.l.b16 %v728
          %v1358 = vunpack.c.h.b16 %v728
          %v1359 = vunpack.c.l.b16 %v729
          %v1360 = vunpack.c.h.b16 %v729
          %v1361 = vunpack.c.l.b16 %v730
          %v1362 = vunpack.c.h.b16 %v730
          %v1363 = vunpack.c.l.b16 %v731
          %v1364 = vunpack.c.h.b16 %v731
          %v1365 = vunpack.c.l.b16 %v732
          %v1366 = vunpack.c.h.b16 %v732
          %v1367 = vunpack.c.l.b16 %v733
          %v1368 = vunpack.c.h.b16 %v733
          %v1369 = vunpack.c.l.b16 %v734
          %v1370 = vunpack.c.h.b16 %v734
          %v1371 = vunpack.c.l.b16 %v735
          %v1372 = vunpack.c.h.b16 %v735
          %v1373 = vunpack.c.l.b16 %v736
          %v1374 = vunpack.c.h.b16 %v736
          %v1375 = vunpack.c.l.b16 %v737
          %v1376 = vunpack.c.h.b16 %v737
          %v1377 = vunpack.c.l.b16 %v738
          %v1378 = vunpack.c.h.b16 %v738
          %v1379 = vunpack.c.l.b16 %v739
          %v1380 = vunpack.c.h.b16 %v739
          %v1381 = vunpack.c.l.b16 %v740
          %v1382 = vunpack.c.h.b16 %v740
          %v1383 = vunpack.c.l.b16 %v741
          %v1384 = vunpack.c.h.b16 %v741
          %v1385 = vunpack.c.l.b16 %v742
          %v1386 = vunpack.c.h.b16 %v742
          %v1387 = vunpack.c.l.b16 %v743
          %v1388 = vunpack.c.h.b16 %v743
          %v1389 = vunpack.c.l.b16 %v744
          %v1390 = vunpack.c.h.b16 %v744
          %v1391 = vunpack.c.l.b16 %v745
          %v1392 = vunpack.c.h.b16 %v745
          %v1393 = vunpack.c.l.b16 %v746
          %v1394 = vunpack.c.h.b16 %v746
          %v1395 = vunpack.c.l.b16 %v747
          %v1396 = vunpack.c.h.b16 %v747
          %v1397 = vunpack.c.l.b16 %v748
          %v1398 = vunpack.c.h.b16 %v748
          %v1399 = vunpack.c.l.b16 %v749
          %v1400 = vunpack.c.h.b16 %v749
          %v1401 = vunpack.c.l.b16 %v750
          %v1402 = vunpack.c.h.b16 %v750
          %v1403 = vunpack.c.l.b16 %v751
          %v1404 = vunpack.c.h.b16 %v751
          %v1405 = vunpack.c.l.b16 %v752
          %v1406 = vunpack.c.h.b16 %v752
          %v1407 = vunpack.c.l.b16 %v753
          %v1408 = vunpack.c.h.b16 %v753
          %v1409 = vunpack.c.l.b16 %v754
          %v1410 = vunpack.c.h.b16 %v754
          %v1411 = vunpack.c.l.b16 %v755
          %v1412 = vunpack.c.h.b16 %v755
          %v1413 = vunpack.c.l.b16 %v756
          %v1414 = vunpack.c.h.b16 %v756
          %v1415 = vunpack.c.l.b16 %v757
          %v1416 = vunpack.c.h.b16 %v757
          %v1417 = vunpack.c.l.b16 %v758
          %v1418 = vunpack.c.h.b16 %v758
          %v1419 = vunpack.c.l.b16 %v759
          %v1420 = vunpack.c.h.b16 %v759
          %v1421 = vunpack.c.l.b16 %v760
          %v1422 = vunpack.c.h.b16 %v760
          %v1423 = vunpack.c.l.b16 %v761
          %v1424 = vunpack.c.h.b16 %v761
          %v1425 = vunpack.c.l.b16 %v762
          %v1426 = vunpack.c.h.b16 %v762
          %v1427 = vunpack.c.l.b16 %v763
          %v1428 = vunpack.c.h.b16 %v763
          %v1429 = vunpack.c.l.b16 %v764
          %v1430 = vunpack.c.h.b16 %v764
          %v1431 = vunpack.c.l.b16 %v765
          %v1432 = vunpack.c.h.b16 %v765
          %v1433 = vunpack.c.l.b16 %v766
          %v1434 = vunpack.c.h.b16 %v766
          %v1435 = vunpack.c.l.b16 %v767
          %v1436 = vunpack.c.h.b16 %v767
          %v1437 = vunpack.c.l.b16 %v768
          %v1438 = vunpack.c.h.b16 %v768
          %v1439 = vunpack.c.l.b16 %v769
          %v1440 = vunpack.c.h.b16 %v769
          %v1441 = vunpack.c.l.b16 %v770
          %v1442 = vunpack.c.h.b16 %v770
          %v1443 = vunpack.c.l.b16 %v771
          %v1444 = vunpack.c.h.b16 %v771
          %v1445 = vunpack.c.l.b16 %v772
          %v1446 = vunpack.c.h.b16 %v772
          %v1447 = vunpack.c.l.b16 %v773
          %v1448 = vunpack.c.h.b16 %v773
          %v1449 = vunpack.c.l.b16 %v774
          %v1450 = vunpack.c.h.b16 %v774
          %v1451 = vunpack.c.l.b16 %v775
          %v1452 = vunpack.c.h.b16 %v775
          %v1453 = vunpack.c.l.b16 %v776
          %v1454 = vunpack.c.h.b16 %v776
          %v1455 = vunpack.c.l.b16 %v777
          %v1456 = vunpack.c.h.b16 %v777
          %v1457 = vunpack.c.l.b16 %v778
          %v1458 = vunpack.c.h.b16 %v778
          %v1459 = vunpack.c.l.b16 %v779
          %v1460 = vunpack.c.h.b16 %v779
          %v1461 = vunpack.c.l.b16 %v780
          %v1462 = vunpack.c.h.b16 %v780
          %v1463 = vunpack.c.l.b16 %v781
          %v1464 = vunpack.c.h.b16 %v781
          %v1465 = vunpack.c.l.b16 %v782
          %v1466 = vunpack.c.h.b16 %v782
          %v1467 = vunpack.c.l.b16 %v783
          %v1468 = vunpack.c.h.b16 %v783
          %v1469 = vunpack.c.l.b16 %v784
          %v1470 = vunpack.c.h.b16 %v784
          %v1471 = vunpack.c.l.b16 %v785
          %v1472 = vunpack.c.h.b16 %v785
          %v1473 = vunpack.c.l.b16 %v786
          %v1474 = vunpack.c.h.b16 %v786
          %v1475 = vunpack.c.l.b16 %v787
          %v1476 = vunpack.c.h.b16 %v787
          %v1477 = vunpack.c.l.b16 %v788
          %v1478 = vunpack.c.h.b16 %v788
          %v1479 = vunpack.c.l.b16 %v789
          %v1480 = vunpack.c.h.b16 %v789
          %v1481 = vunpack.c.l.b16 %v790
          %v1482 = vunpack.c.h.b16 %v790
          %v1483 = vunpack.c.l.b16 %v791
          %v1484 = vunpack.c.h.b16 %v791
          %v1485 = vunpack.c.l.b16 %v792
          %v1486 = vunpack.c.h.b16 %v792
          %v1487 = vunpack.c.l.b16 %v793
          %v1488 = vunpack.c.h.b16 %v793
          %v1489 = vunpack.c.l.b16 %v794
          %v1490 = vunpack.c.h.b16 %v794
          %v1491 = vunpack.c.l.b16 %v795
          %v1492 = vunpack.c.h.b16 %v795
          %v1493 = vunpack.c.l.b16 %v796
          %v1494 = vunpack.c.h.b16 %v796
          %v1495 = vunpack.c.l.b16 %v797
          %v1496 = vunpack.c.h.b16 %v797
          %v1497 = vunpack.c.l.b16 %v798
          %v1498 = vunpack.c.h.b16 %v798
          %v1499 = vunpack.c.l.b16 %v799
          %v1500 = vunpack.c.h.b16 %v799
          %v1501 = vunpack.c.l.b16 %v800
          %v1502 = vunpack.c.h.b16 %v800
          %v1503 = vunpack.c.l.b16 %v801
          %v1504 = vunpack.c.h.b16 %v801
          %v1505 = vunpack.c.l.b16 %v802
          %v1506 = vunpack.c.h.b16 %v802
          %v1507 = vunpack.c.l.b16 %v803
          %v1508 = vunpack.c.h.b16 %v803
          %v1509 = vunpack.c.l.b16 %v804
          %v1510 = vunpack.c.h.b16 %v804
          %v1511 = vunpack.c.l.b16 %v805
          %v1512 = vunpack.c.h.b16 %v805
          %v1513 = vunpack.c.l.b16 %v806
          %v1514 = vunpack.c.h.b16 %v806
          %v1515 = vunpack.c.l.b16 %v807
          %v1516 = vunpack.c.h.b16 %v807
          %v1517 = vunpack.c.l.b16 %v808
          %v1518 = vunpack.c.h.b16 %v808
          %v1519 = vunpack.c.l.b16 %v809
          %v1520 = vunpack.c.h.b16 %v809
          %v1521 = vunpack.c.l.b16 %v810
          %v1522 = vunpack.c.h.b16 %v810
          %v1523 = vunpack.c.l.b16 %v811
          %v1524 = vunpack.c.h.b16 %v811
          %v1525 = vunpack.c.l.b16 %v812
          %v1526 = vunpack.c.h.b16 %v812
          %v1527 = vunpack.c.l.b16 %v813
          %v1528 = vunpack.c.h.b16 %v813
          %v1529 = vunpack.c.l.b16 %v814
          %v1530 = vunpack.c.h.b16 %v814
          %v1531 = vunpack.c.l.b16 %v815
          %v1532 = vunpack.c.h.b16 %v815
          %v1533 = vunpack.c.l.b16 %v816
          %v1534 = vunpack.c.h.b16 %v816
          %v1535 = vunpack.c.l.b16 %v817
          %v1536 = vunpack.c.h.b16 %v817
          %v1537 = vunpack.c.l.b16 %v818
          %v1538 = vunpack.c.h.b16 %v818
          %v1539 = vunpack.c.l.b16 %v819
          %v1540 = vunpack.c.h.b16 %v819
          %v1541 = vunpack.c.l.b16 %v820
          %v1542 = vunpack.c.h.b16 %v820
          %v1543 = vunpack.c.l.b16 %v821
          %v1544 = vunpack.c.h.b16 %v821
          %v1545 = vunpack.c.l.b16 %v822
          %v1546 = vunpack.c.h.b16 %v822
          %v1547 = vunpack.c.l.b16 %v823
          %v1548 = vunpack.c.h.b16 %v823
          %v1549 = vunpack.c.l.b16 %v824
          %v1550 = vunpack.c.h.b16 %v824
          %v1551 = vunpack.c.l.b16 %v825
          %v1552 = vunpack.c.h.b16 %v825
          %v1553 = vunpack.c.l.b16 %v826
          %v1554 = vunpack.c.h.b16 %v826
          %v1555 = vunpack.c.l.b16 %v827
          %v1556 = vunpack.c.h.b16 %v827
          %v1557 = vunpack.c.l.b16 %v828
          %v1558 = vunpack.c.h.b16 %v828
          %v1559 = vunpack.c.l.b16 %v829
          %v1560 = vunpack.c.h.b16 %v829
          %v1561 = vunpack.c.l.b16 %v830
          %v1562 = vunpack.c.h.b16 %v830
          %v1563 = vunpack.c.l.b16 %v831
          %v1564 = vunpack.c.h.b16 %v831
          %v1565 = vunpack.c.l.b16 %v832
          %v1566 = vunpack.c.h.b16 %v832
          %v1567 = vunpack.c.l.b16 %v833
          %v1568 = vunpack.c.h.b16 %v833
          %v1569 = vunpack.c.l.b16 %v834
          %v1570 = vunpack.c.h.b16 %v834
          %v1571 = vunpack.c.l.b16 %v835
          %v1572 = vunpack.c.h.b16 %v835
          %v1573 = vunpack.c.l.b16 %v836
          %v1574 = vunpack.c.h.b16 %v836
          %v1575 = vunpack.c.l.b16 %v837
          %v1576 = vunpack.c.h.b16 %v837
          %v1577 = vunpack.c.l.b16 %v838
          %v1578 = vunpack.c.h.b16 %v838
          %v1579 = vunpack.c.l.b16 %v839
          %v1580 = vunpack.c.h.b16 %v839
          %v1581 = vunpack.c.l.b16 %v840
          %v1582 = vunpack.c.h.b16 %v840
          %v1583 = vunpack.c.l.b16 %v841
          %v1584 = vunpack.c.h.b16 %v841
          %v1585 = vunpack.c.l.b16 %v842
          %v1586 = vunpack.c.h.b16 %v842
          %v1587 = vunpack.c.l.b16 %v843
          %v1588 = vunpack.c.h.b16 %v843
          %v1589 = vunpack.c.l.b16 %v844
          %v1590 = vunpack.c.h.b16 %v844
          %v1591 = vunpack.c.l.b16 %v845
          %v1592 = vunpack.c.h.b16 %v845
          %v1593 = vunpack.c.l.b16 %v846
          %v1594 = vunpack.c.h.b16 %v846
          %v1595 = vunpack.c.l.b16 %v847
          %v1596 = vunpack.c.h.b16 %v847
          %v1597 = vunpack.c.l.b16 %v848
          %v1598 = vunpack.c.h.b16 %v848
          %v1599 = vunpack.c.l.b16 %v849
          %v1600 = vunpack.c.h.b16 %v849
          %v1601 = vunpack.c.l.b16 %v850
          %v1602 = vunpack.c.h.b16 %v850
          %v1603 = vunpack.c.l.b16 %v851
          %v1604 = vunpack.c.h.b16 %v851
          %v1605 = vunpack.c.l.b16 %v852
          %v1606 = vunpack.c.h.b16 %v852
          %v1607 = vunpack.c.l.b16 %v853
          %v1608 = vunpack.c.h.b16 %v853
          %v1609 = vunpack.c.l.b16 %v854
          %v1610 = vunpack.c.h.b16 %v854
          %v1611 = vunpack.c.l.b16 %v855
          %v1612 = vunpack.c.h.b16 %v855
          %v1613 = vunpack.c.l.b16 %v856
          %v1614 = vunpack.c.h.b16 %v856
          %v1615 = vunpack.c.l.b16 %v857
          %v1616 = vunpack.c.h.b16 %v857
          %v1617 = vunpack.c.l.b16 %v858
          %v1618 = vunpack.c.h.b16 %v858
          %v1619 = vunpack.c.l.b16 %v859
          %v1620 = vunpack.c.h.b16 %v859
          %v1621 = vunpack.c.l.b16 %v860
          %v1622 = vunpack.c.h.b16 %v860
          %v1623 = vunpack.c.l.b16 %v861
          %v1624 = vunpack.c.h.b16 %v861
          %v1625 = vunpack.c.l.b16 %v862
          %v1626 = vunpack.c.h.b16 %v862
          %v1627 = vunpack.c.l.b16 %v863
          %v1628 = vunpack.c.h.b16 %v863
          %v1629 = vunpack.c.l.b16 %v864
          %v1630 = vunpack.c.h.b16 %v864
          %v1631 = vunpack.c.l.b16 %v865
          %v1632 = vunpack.c.h.b16 %v865
          %v1633 = vunpack.c.l.b16 %v866
          %v1634 = vunpack.c.h.b16 %v866
          %v1635 = vunpack.c.l.b16 %v867
          %v1636 = vunpack.c.h.b16 %v867
          %v1637 = vunpack.c.l.b16 %v868
          %v1638 = vunpack.c.h.b16 %v868
          %v1639 = vunpack.c.l.b16 %v869
          %v1640 = vunpack.c.h.b16 %v869
          %v1641 = vunpack.c.l.b16 %v870
          %v1642 = vunpack.c.h.b16 %v870
          %v1643 = vunpack.c.l.b16 %v871
          %v1644 = vunpack.c.h.b16 %v871
          %v1645 = vunpack.c.l.b16 %v872
          %v1646 = vunpack.c.h.b16 %v872
          %v1647 = vunpack.c.l.b16 %v873
          %v1648 = vunpack.c.h.b16 %v873
          %v1649 = vunpack.c.l.b16 %v874
          %v1650 = vunpack.c.h.b16 %v874
          %v1651 = vunpack.c.l.b16 %v875
          %v1652 = vunpack.c.h.b16 %v875
          %v1653 = vunpack.c.l.b16 %v876
          %v1654 = vunpack.c.h.b16 %v876
          %v1655 = vunpack.c.l.b16 %v877
          %v1656 = vunpack.c.h.b16 %v877
          %v1657 = vunpack.c.l.b16 %v878
          %v1658 = vunpack.c.h.b16 %v878
          %v1659 = vunpack.c.l.b16 %v879
          %v1660 = vunpack.c.h.b16 %v879
          %v1661 = vunpack.c.l.b16 %v880
          %v1662 = vunpack.c.h.b16 %v880
          %v1663 = vunpack.c.l.b16 %v881
          %v1664 = vunpack.c.h.b16 %v881
          %v1665 = vunpack.c.l.b16 %v882
          %v1666 = vunpack.c.h.b16 %v882
          %v1667 = vunpack.c.l.b16 %v883
          %v1668 = vunpack.c.h.b16 %v883
          %v1669 = vunpack.c.l.b16 %v884
          %v1670 = vunpack.c.h.b16 %v884
          %v1671 = vunpack.c.l.b16 %v885
          %v1672 = vunpack.c.h.b16 %v885
          %v1673 = vunpack.c.l.b16 %v886
          %v1674 = vunpack.c.h.b16 %v886
          %v1675 = vunpack.c.l.b16 %v887
          %v1676 = vunpack.c.h.b16 %v887
          %v1677 = vunpack.c.l.b16 %v888
          %v1678 = vunpack.c.h.b16 %v888
          %v1679 = vpack.c.b16 %v1171, %v1167
          %v1680 = vpack.c.b16 %v1172, %v1168
          %v1681 = vpack.c.b16 %v1173, %v1169
          %v1682 = vpack.c.b16 %v1174, %v1170
          %v1683 = vpack.c.b16 %v1179, %v1175
          %v1684 = vpack.c.b16 %v1180, %v1176
          %v1685 = vpack.c.b16 %v1181, %v1177
          %v1686 = vpack.c.b16 %v1182, %v1178
          %v1687 = vpack.c.b16 %v1187, %v1183
          %v1688 = vpack.c.b16 %v1188, %v1184
          %v1689 = vpack.c.b16 %v1189, %v1185
          %v1690 = vpack.c.b16 %v1190, %v1186
          %v1691 = vpack.c.b16 %v1195, %v1191
          %v1692 = vpack.c.b16 %v1196, %v1192
          %v1693 = vpack.c.b16 %v1197, %v1193
          %v1694 = vpack.c.b16 %v1198, %v1194
          %v1695 = vpack.c.b16 %v1203, %v1199
          %v1696 = vpack.c.b16 %v1204, %v1200
          %v1697 = vpack.c.b16 %v1205, %v1201
          %v1698 = vpack.c.b16 %v1206, %v1202
          %v1699 = vpack.c.b16 %v1211, %v1207
          %v1700 = vpack.c.b16 %v1212, %v1208
          %v1701 = vpack.c.b16 %v1213, %v1209
          %v1702 = vpack.c.b16 %v1214, %v1210
          %v1703 = vpack.c.b16 %v1219, %v1215
          %v1704 = vpack.c.b16 %v1220, %v1216
          %v1705 = vpack.c.b16 %v1221, %v1217
          %v1706 = vpack.c.b16 %v1222, %v1218
          %v1707 = vpack.c.b16 %v1227, %v1223
          %v1708 = vpack.c.b16 %v1228, %v1224
          %v1709 = vpack.c.b16 %v1229, %v1225
          %v1710 = vpack.c.b16 %v1230, %v1226
          %v1711 = vpack.c.b16 %v1235, %v1231
          %v1712 = vpack.c.b16 %v1236, %v1232
          %v1713 = vpack.c.b16 %v1237, %v1233
          %v1714 = vpack.c.b16 %v1238, %v1234
          %v1715 = vpack.c.b16 %v1243, %v1239
          %v1716 = vpack.c.b16 %v1244, %v1240
          %v1717 = vpack.c.b16 %v1245, %v1241
          %v1718 = vpack.c.b16 %v1246, %v1242
          %v1719 = vpack.c.b16 %v1251, %v1247
          %v1720 = vpack.c.b16 %v1252, %v1248
          %v1721 = vpack.c.b16 %v1253, %v1249
          %v1722 = vpack.c.b16 %v1254, %v1250
          %v1723 = vpack.c.b16 %v1259, %v1255
          %v1724 = vpack.c.b16 %v1260, %v1256
          %v1725 = vpack.c.b16 %v1261, %v1257
          %v1726 = vpack.c.b16 %v1262, %v1258
          %v1727 = vpack.c.b16 %v1267, %v1263
          %v1728 = vpack.c.b16 %v1268, %v1264
          %v1729 = vpack.c.b16 %v1269, %v1265
          %v1730 = vpack.c.b16 %v1270, %v1266
          %v1731 = vpack.c.b16 %v1275, %v1271
          %v1732 = vpack.c.b16 %v1276, %v1272
          %v1733 = vpack.c.b16 %v1277, %v1273
          %v1734 = vpack.c.b16 %v1278, %v1274
          %v1735 = vpack.c.b16 %v1283, %v1279
          %v1736 = vpack.c.b16 %v1284, %v1280
          %v1737 = vpack.c.b16 %v1285, %v1281
          %v1738 = vpack.c.b16 %v1286, %v1282
          %v1739 = vpack.c.b16 %v1291, %v1287
          %v1740 = vpack.c.b16 %v1292, %v1288
          %v1741 = vpack.c.b16 %v1293, %v1289
          %v1742 = vpack.c.b16 %v1294, %v1290
          %v1743 = vpack.c.b16 %v1299, %v1295
          %v1744 = vpack.c.b16 %v1300, %v1296
          %v1745 = vpack.c.b16 %v1301, %v1297
          %v1746 = vpack.c.b16 %v1302, %v1298
          %v1747 = vpack.c.b16 %v1307, %v1303
          %v1748 = vpack.c.b16 %v1308, %v1304
          %v1749 = vpack.c.b16 %v1309, %v1305
          %v1750 = vpack.c.b16 %v1310, %v1306
          %v1751 = vpack.c.b16 %v1315, %v1311
          %v1752 = vpack.c.b16 %v1316, %v1312
          %v1753 = vpack.c.b16 %v1317, %v1313
          %v1754 = vpack.c.b16 %v1318, %v1314
          %v1755 = vpack.c.b16 %v1323, %v1319
          %v1756 = vpack.c.b16 %v1324, %v1320
          %v1757 = vpack.c.b16 %v1325, %v1321
          %v1758 = vpack.c.b16 %v1326, %v1322
          %v1759 = vpack.c.b16 %v1331, %v1327
          %v1760 = vpack.c.b16 %v1332, %v1328
          %v1761 = vpack.c.b16 %v1333, %v1329
          %v1762 = vpack.c.b16 %v1334, %v1330
          %v1763 = vpack.c.b16 %v1339, %v1335
          %v1764 = vpack.c.b16 %v1340, %v1336
          %v1765 = vpack.c.b16 %v1341, %v1337
          %v1766 = vpack.c.b16 %v1342, %v1338
          %v1767 = vpack.c.b16 %v1347, %v1343
          %v1768 = vpack.c.b16 %v1348, %v1344
          %v1769 = vpack.c.b16 %v1349, %v1345
          %v1770 = vpack.c.b16 %v1350, %v1346
          %v1771 = vpack.c.b16 %v1355, %v1351
          %v1772 = vpack.c.b16 %v1356, %v1352
          %v1773 = vpack.c.b16 %v1357, %v1353
          %v1774 = vpack.c.b16 %v1358, %v1354
          %v1775 = vpack.c.b16 %v1363, %v1359
          %v1776 = vpack.c.b16 %v1364, %v1360
          %v1777 = vpack.c.b16 %v1365, %v1361
          %v1778 = vpack.c.b16 %v1366, %v1362
          %v1779 = vpack.c.b16 %v1371, %v1367
          %v1780 = vpack.c.b16 %v1372, %v1368
          %v1781 = vpack.c.b16 %v1373, %v1369
          %v1782 = vpack.c.b16 %v1374, %v1370
          %v1783 = vpack.c.b16 %v1379, %v1375
          %v1784 = vpack.c.b16 %v1380, %v1376
          %v1785 = vpack.c.b16 %v1381, %v1377
          %v1786 = vpack.c.b16 %v1382, %v1378
          %v1787 = vpack.c.b16 %v1387, %v1383
          %v1788 = vpack.c.b16 %v1388, %v1384
          %v1789 = vpack.c.b16 %v1389, %v1385
          %v1790 = vpack.c.b16 %v1390, %v1386
          %v1791 = vpack.c.b16 %v1395, %v1391
          %v1792 = vpack.c.b16 %v1396, %v1392
          %v1793 = vpack.c.b16 %v1397, %v1393
          %v1794 = vpack.c.b16 %v1398, %v1394
          %v1795 = vpack.c.b16 %v1403, %v1399
          %v1796 = vpack.c.b16 %v1404, %v1400
          %v1797 = vpack.c.b16 %v1405, %v1401
          %v1798 = vpack.c.b16 %v1406, %v1402
          %v1799 = vpack.c.b16 %v1411, %v1407
          %v1800 = vpack.c.b16 %v1412, %v1408
          %v1801 = vpack.c.b16 %v1413, %v1409
          %v1802 = vpack.c.b16 %v1414, %v1410
          %v1803 = vpack.c.b16 %v1419, %v1415
          %v1804 = vpack.c.b16 %v1420, %v1416
          %v1805 = vpack.c.b16 %v1421, %v1417
          %v1806 = vpack.c.b16 %v1422, %v1418
          %v1807 = vpack.c.b16 %v1427, %v1423
          %v1808 = vpack.c.b16 %v1428, %v1424
          %v1809 = vpack.c.b16 %v1429, %v1425
          %v1810 = vpack.c.b16 %v1430, %v1426
          %v1811 = vpack.c.b16 %v1435, %v1431
          %v1812 = vpack.c.b16 %v1436, %v1432
          %v1813 = vpack.c.b16 %v1437, %v1433
          %v1814 = vpack.c.b16 %v1438, %v1434
          %v1815 = vpack.c.b16 %v1443, %v1439
          %v1816 = vpack.c.b16 %v1444, %v1440
          %v1817 = vpack.c.b16 %v1445, %v1441
          %v1818 = vpack.c.b16 %v1446, %v1442
          %v1819 = vpack.c.b16 %v1451, %v1447
          %v1820 = vpack.c.b16 %v1452, %v1448
          %v1821 = vpack.c.b16 %v1453, %v1449
          %v1822 = vpack.c.b16 %v1454, %v1450
          %v1823 = vpack.c.b16 %v1459, %v1455
          %v1824 = vpack.c.b16 %v1460, %v1456
          %v1825 = vpack.c.b16 %v1461, %v1457
          %v1826 = vpack.c.b16 %v1462, %v1458
          %v1827 = vpack.c.b16 %v1467, %v1463
          %v1828 = vpack.c.b16 %v1468, %v1464
          %v1829 = vpack.c.b16 %v1469, %v1465
          %v1830 = vpack.c.b16 %v1470, %v1466
          %v1831 = vpack.c.b16 %v1475, %v1471
          %v1832 = vpack.c.b16 %v1476, %v1472
          %v1833 = vpack.c.b16 %v1477, %v1473
          %v1834 = vpack.c.b16 %v1478, %v1474
          %v1835 = vpack.c.b16 %v1483, %v1479
          %v1836 = vpack.c.b16 %v1484, %v1480
          %v1837 = vpack.c.b16 %v1485, %v1481
          %v1838 = vpack.c.b16 %v1486, %v1482
          %v1839 = vpack.c.b16 %v1491, %v1487
          %v1840 = vpack.c.b16 %v1492, %v1488
          %v1841 = vpack.c.b16 %v1493, %v1489
          %v1842 = vpack.c.b16 %v1494, %v1490
          %v1843 = vpack.c.b16 %v1499, %v1495
          %v1844 = vpack.c.b16 %v1500, %v1496
          %v1845 = vpack.c.b16 %v1501, %v1497
          %v1846 = vpack.c.b16 %v1502, %v1498
          %v1847 = vpack.c.b16 %v1507, %v1503
          %v1848 = vpack.c.b16 %v1508, %v1504
          %v1849 = vpack.c.b16 %v1509, %v1505
          %v1850 = vpack.c.b16 %v1510, %v1506
          %v1851 = vpack.c.b16 %v1515, %v1511
          %v1852 = vpack.c.b16 %v1516, %v1512
          %v1853 = vpack.c.b16 %v1517, %v1513
          %v1854 = vpack.c.b16 %v1518, %v1514
          %v1855 = vpack.c.b16 %v1523, %v1519
          %v1856 = vpack.c.b16 %v1524, %v1520
          %v1857 = vpack.c.b16 %v1525, %v1521
          %v1858 = vpack.c.b16 %v1526, %v1522
          %v1859 = vpack.c.b16 %v1531, %v1527
          %v1860 = vpack.c.b16 %v1532, %v1528
          %v1861 = vpack.c.b16 %v1533, %v1529
          %v1862 = vpack.c.b16 %v1534, %v1530
          %v1863 = vpack.c.b16 %v1539, %v1535
          %v1864 = vpack.c.b16 %v1540, %v1536
          %v1865 = vpack.c.b16 %v1541, %v1537
          %v1866 = vpack.c.b16 %v1542, %v1538
          %v1867 = vpack.c.b16 %v1547, %v1543
          %v1868 = vpack.c.b16 %v1548, %v1544
          %v1869 = vpack.c.b16 %v1549, %v1545
          %v1870 = vpack.c.b16 %v1550, %v1546
          %v1871 = vpack.c.b16 %v1555, %v1551
          %v1872 = vpack.c.b16 %v1556, %v1552
          %v1873 = vpack.c.b16 %v1557, %v1553
          %v1874 = vpack.c.b16 %v1558, %v1554
          %v1875 = vpack.c.b16 %v1563, %v1559
          %v1876 = vpack.c.b16 %v1564, %v1560
          %v1877 = vpack.c.b16 %v1565, %v1561
          %v1878 = vpack.c.b16 %v1566, %v1562
          %v1879 = vpack.c.b16 %v1571, %v1567
          %v1880 = vpack.c.b16 %v1572, %v1568
          %v1881 = vpack.c.b16 %v1573, %v1569
          %v1882 = vpack.c.b16 %v1574, %v1570
          %v1883 = vpack.c.b16 %v1579, %v1575
          %v1884 = vpack.c.b16 %v1580, %v1576
          %v1885 = vpack.c.b16 %v1581, %v1577
          %v1886 = vpack.c.b16 %v1582, %v1578
          %v1887 = vpack.c.b16 %v1587, %v1583
          %v1888 = vpack.c.b16 %v1588, %v1584
          %v1889 = vpack.c.b16 %v1589, %v1585
          %v1890 = vpack.c.b16 %v1590, %v1586
          %v1891 = vpack.c.b16 %v1595, %v1591
          %v1892 = vpack.c.b16 %v1596, %v1592
          %v1893 = vpack.c.b16 %v1597, %v1593
          %v1894 = vpack.c.b16 %v1598, %v1594
          %v1895 = vpack.c.b16 %v1603, %v1599
          %v1896 = vpack.c.b16 %v1604, %v1600
          %v1897 = vpack.c.b16 %v1605, %v1601
          %v1898 = vpack.c.b16 %v1606, %v1602
          %v1899 = vpack.c.b16 %v1611, %v1607
          %v1900 = vpack.c.b16 %v1612, %v1608
          %v1901 = vpack.c.b16 %v1613, %v1609
          %v1902 = vpack.c.b16 %v1614, %v1610
          %v1903 = vpack.c.b16 %v1619, %v1615
          %v1904 = vpack.c.b16 %v1620, %v1616
          %v1905 = vpack.c.b16 %v1621, %v1617
          %v1906 = vpack.c.b16 %v1622, %v1618
          %v1907 = vpack.c.b16 %v1627, %v1623
          %v1908 = vpack.c.b16 %v1628, %v1624
          %v1909 = vpack.c.b16 %v1629, %v1625
          %v1910 = vpack.c.b16 %v1630, %v1626
          %v1911 = vpack.c.b16 %v1635, %v1631
          %v1912 = vpack.c.b16 %v1636, %v1632
          %v1913 = vpack.c.b16 %v1637, %v1633
          %v1914 = vpack.c.b16 %v1638, %v1634
          %v1915 = vpack.c.b16 %v1643, %v1639
          %v1916 = vpack.c.b16 %v1644, %v1640
          %v1917 = vpack.c.b16 %v1645, %v1641
          %v1918 = vpack.c.b16 %v1646, %v1642
          %v1919 = vpack.c.b16 %v1651, %v1647
          %v1920 = vpack.c.b16 %v1652, %v1648
          %v1921 = vpack.c.b16 %v1653, %v1649
          %v1922 = vpack.c.b16 %v1654, %v1650
          %v1923 = vpack.c.b16 %v1659, %v1655
          %v1924 = vpack.c.b16 %v1660, %v1656
          %v1925 = vpack.c.b16 %v1661, %v1657
          %v1926 = vpack.c.b16 %v1662, %v1658
          %v1927 = vpack.c.b16 %v1667, %v1663
          %v1928 = vpack.c.b16 %v1668, %v1664
          %v1929 = vpack.c.b16 %v1669, %v1665
          %v1930 = vpack.c.b16 %v1670, %v1666
          %v1931 = vpack.c.b16 %v1675, %v1671
          %v1932 = vpack.c.b16 %v1676, %v1672
          %v1933 = vpack.c.b16 %v1677, %v1673
          %v1934 = vpack.c.b16 %v1678, %v1674
          %2191 = vmatprep.subr.bf16.mxu0 %v1680
          %2192 = vmatpush1.bf16.msra.mxu0 %v1679
          %2193 = vmatprep.subr.bf16.mxu0 %v1684
          %2194 = vmatpush1.bf16.msra.mxu0 %v1683
          %2195 = vmatprep.subr.bf16.mxu0 %v1688
          %2196 = vmatpush1.bf16.msra.mxu0 %v1687
          %2197 = vmatprep.subr.bf16.mxu0 %v1692
          %2198 = vmatpush1.bf16.msra.mxu0 %v1691
          %2199 = vmatprep.subr.bf16.mxu0 %v1696
          %2200 = vmatpush1.bf16.msra.mxu0 %v1695
          %2201 = vmatprep.subr.bf16.mxu0 %v1700
          %2202 = vmatpush1.bf16.msra.mxu0 %v1699
          %2203 = vmatprep.subr.bf16.mxu0 %v1704
          %2204 = vmatpush1.bf16.msra.mxu0 %v1703
          %2205 = vmatprep.subr.bf16.mxu0 %v1708
          %2206 = vmatpush1.bf16.msra.mxu0 %v1707
          %2207 = vmatprep.subr.bf16.mxu0 %v1712
          %2208 = vmatpush1.bf16.msra.mxu0 %v1711
          %2209 = vmatprep.subr.bf16.mxu0 %v1716
          %2210 = vmatpush1.bf16.msra.mxu0 %v1715
          %2211 = vmatprep.subr.bf16.mxu0 %v1720
          %2212 = vmatpush1.bf16.msra.mxu0 %v1719
          %2213 = vmatprep.subr.bf16.mxu0 %v1724
          %2214 = vmatpush1.bf16.msra.mxu0 %v1723
          %2215 = vmatprep.subr.bf16.mxu0 %v1728
          %2216 = vmatpush1.bf16.msra.mxu0 %v1727
          %2217 = vmatprep.subr.bf16.mxu0 %v1732
          %2218 = vmatpush1.bf16.msra.mxu0 %v1731
          %2219 = vmatprep.subr.bf16.mxu0 %v1736
          %2220 = vmatpush1.bf16.msra.mxu0 %v1735
          %2221 = vmatprep.subr.bf16.mxu0 %v1740
          %2222 = vmatpush1.bf16.msra.mxu0 %v1739
          %2223 = vmatprep.mubr.bf16.mxu0 %v626
          %2224 = vmatmul.mubr.bf16.gmra.mrb[0].mxu0 %v625
          %v2225 = vpop.f32.mrb[0].mxu0
          %v2226 = vadd.f32 %v894, %v2225
          %v2227 = vpop.f32.mrb[0].mxu0
          %v2228 = vadd.f32 %v898, %v2227
          %v2229 = vpop.f32.mrb[0].mxu0
          %v2230 = vpop.f32.mrb[0].mxu0
          %2231 = vdwg.mxu0
          %2232 = vmatprep.subr.bf16.mxu0 %v1744
          %2233 = vmatpush1.bf16.msra.mxu0 %v1743
          %2234 = vmatprep.subr.bf16.mxu0 %v1748
          %2235 = vmatpush1.bf16.msra.mxu0 %v1747
          %2236 = vmatprep.subr.bf16.mxu0 %v1752
          %2237 = vmatpush1.bf16.msra.mxu0 %v1751
          %2238 = vmatprep.subr.bf16.mxu0 %v1756
          %2239 = vmatpush1.bf16.msra.mxu0 %v1755
          %2240 = vmatprep.subr.bf16.mxu0 %v1760
          %2241 = vmatpush1.bf16.msra.mxu0 %v1759
          %2242 = vmatprep.subr.bf16.mxu0 %v1764
          %2243 = vmatpush1.bf16.msra.mxu0 %v1763
          %2244 = vmatprep.subr.bf16.mxu0 %v1768
          %2245 = vmatpush1.bf16.msra.mxu0 %v1767
          %2246 = vmatprep.subr.bf16.mxu0 %v1772
          %2247 = vmatpush1.bf16.msra.mxu0 %v1771
          %2248 = vmatprep.subr.bf16.mxu0 %v1776
          %2249 = vmatpush1.bf16.msra.mxu0 %v1775
          %2250 = vmatprep.subr.bf16.mxu0 %v1780
          %2251 = vmatpush1.bf16.msra.mxu0 %v1779
          %2252 = vmatprep.subr.bf16.mxu0 %v1784
          %2253 = vmatpush1.bf16.msra.mxu0 %v1783
          %2254 = vmatprep.subr.bf16.mxu0 %v1788
          %2255 = vmatpush1.bf16.msra.mxu0 %v1787
          %2256 = vmatprep.subr.bf16.mxu0 %v1792
          %2257 = vmatpush1.bf16.msra.mxu0 %v1791
          %2258 = vmatprep.subr.bf16.mxu0 %v1796
          %2259 = vmatpush1.bf16.msra.mxu0 %v1795
          %2260 = vmatprep.subr.bf16.mxu0 %v1800
          %2261 = vmatpush1.bf16.msra.mxu0 %v1799
          %2262 = vmatprep.subr.bf16.mxu0 %v1804
          %2263 = vmatpush1.bf16.msra.mxu0 %v1803
          %2264 = vmatprep.mubr.bf16.mxu0 %v628
          %2265 = vmatmul.mubr.bf16.gmra.mrb[0].mxu0 %v627
          %v2266 = vpop.f32.mrb[0].mxu0
          %v2267 = vadd.f32 %v2226, %v2266
          %v2268 = vpop.f32.mrb[0].mxu0
          %v2269 = vadd.f32 %v2228, %v2268
          %v2270 = vpop.f32.mrb[0].mxu0
          %v2271 = vpop.f32.mrb[0].mxu0
          %2272 = vdwg.mxu0
          %2273 = vmatprep.subr.bf16.mxu0 %v1808
          %2274 = vmatpush1.bf16.msra.mxu0 %v1807
          %2275 = vmatprep.subr.bf16.mxu0 %v1812
          %2276 = vmatpush1.bf16.msra.mxu0 %v1811
          %2277 = vmatprep.subr.bf16.mxu0 %v1816
          %2278 = vmatpush1.bf16.msra.mxu0 %v1815
          %2279 = vmatprep.subr.bf16.mxu0 %v1820
          %2280 = vmatpush1.bf16.msra.mxu0 %v1819
          %2281 = vmatprep.subr.bf16.mxu0 %v1824
          %2282 = vmatpush1.bf16.msra.mxu0 %v1823
          %2283 = vmatprep.subr.bf16.mxu0 %v1828
          %2284 = vmatpush1.bf16.msra.mxu0 %v1827
          %2285 = vmatprep.subr.bf16.mxu0 %v1832
          %2286 = vmatpush1.bf16.msra.mxu0 %v1831
          %2287 = vmatprep.subr.bf16.mxu0 %v1836
          %2288 = vmatpush1.bf16.msra.mxu0 %v1835
          %2289 = vmatprep.subr.bf16.mxu0 %v1840
          %2290 = vmatpush1.bf16.msra.mxu0 %v1839
          %2291 = vmatprep.subr.bf16.mxu0 %v1844
          %2292 = vmatpush1.bf16.msra.mxu0 %v1843
          %2293 = vmatprep.subr.bf16.mxu0 %v1848
          %2294 = vmatpush1.bf16.msra.mxu0 %v1847
          %2295 = vmatprep.subr.bf16.mxu0 %v1852
          %2296 = vmatpush1.bf16.msra.mxu0 %v1851
          %2297 = vmatprep.subr.bf16.mxu0 %v1856
          %2298 = vmatpush1.bf16.msra.mxu0 %v1855
          %2299 = vmatprep.subr.bf16.mxu0 %v1860
          %2300 = vmatpush1.bf16.msra.mxu0 %v1859
          %2301 = vmatprep.subr.bf16.mxu0 %v1864
          %2302 = vmatpush1.bf16.msra.mxu0 %v1863
          %2303 = vmatprep.subr.bf16.mxu0 %v1868
          %2304 = vmatpush1.bf16.msra.mxu0 %v1867
          %2305 = vmatprep.mubr.bf16.mxu0 %v630
          %2306 = vmatmul.mubr.bf16.gmra.mrb[0].mxu0 %v629
          %v2307 = vpop.f32.mrb[0].mxu0
          %v2308 = vadd.f32 %v2267, %v2307
          %v2309 = vpop.f32.mrb[0].mxu0
          %v2310 = vadd.f32 %v2269, %v2309
          %v2311 = vpop.f32.mrb[0].mxu0
          %v2312 = vpop.f32.mrb[0].mxu0
          %2313 = vdwg.mxu0
          %2314 = vmatprep.subr.bf16.mxu0 %v1872
          %2315 = vmatpush1.bf16.msra.mxu0 %v1871
          %2316 = vmatprep.subr.bf16.mxu0 %v1876
          %2317 = vmatpush1.bf16.msra.mxu0 %v1875
          %2318 = vmatprep.subr.bf16.mxu0 %v1880
          %2319 = vmatpush1.bf16.msra.mxu0 %v1879
          %2320 = vmatprep.subr.bf16.mxu0 %v1884
          %2321 = vmatpush1.bf16.msra.mxu0 %v1883
          %2322 = vmatprep.subr.bf16.mxu0 %v1888
          %2323 = vmatpush1.bf16.msra.mxu0 %v1887
          %2324 = vmatprep.subr.bf16.mxu0 %v1892
          %2325 = vmatpush1.bf16.msra.mxu0 %v1891
          %2326 = vmatprep.subr.bf16.mxu0 %v1896
          %2327 = vmatpush1.bf16.msra.mxu0 %v1895
          %2328 = vmatprep.subr.bf16.mxu0 %v1900
          %2329 = vmatpush1.bf16.msra.mxu0 %v1899
          %2330 = vmatprep.subr.bf16.mxu0 %v1904
          %2331 = vmatpush1.bf16.msra.mxu0 %v1903
          %2332 = vmatprep.subr.bf16.mxu0 %v1908
          %2333 = vmatpush1.bf16.msra.mxu0 %v1907
          %2334 = vmatprep.subr.bf16.mxu0 %v1912
          %2335 = vmatpush1.bf16.msra.mxu0 %v1911
          %2336 = vmatprep.subr.bf16.mxu0 %v1916
          %2337 = vmatpush1.bf16.msra.mxu0 %v1915
          %2338 = vmatprep.subr.bf16.mxu0 %v1920
          %2339 = vmatpush1.bf16.msra.mxu0 %v1919
          %2340 = vmatprep.subr.bf16.mxu0 %v1924
          %2341 = vmatpush1.bf16.msra.mxu0 %v1923
          %2342 = vmatprep.subr.bf16.mxu0 %v1928
          %2343 = vmatpush1.bf16.msra.mxu0 %v1927
          %2344 = vmatprep.subr.bf16.mxu0 %v1932
          %2345 = vmatpush1.bf16.msra.mxu0 %v1931
          %2346 = vmatprep.mubr.bf16.mxu0 %v632
          %2347 = vmatmul.mubr.bf16.gmra.mrb[0].mxu0 %v631
          %v2348 = vpop.f32.mrb[0].mxu0
          %v2349 = vadd.f32 %v2308, %v2348
          %v2350 = vpop.f32.mrb[0].mxu0
          %v2351 = vadd.f32 %v2310, %v2350
          %v2352 = vpop.f32.mrb[0].mxu0
          %v2353 = vpop.f32.mrb[0].mxu0
          %2354 = vdwg.mxu0
          %2355 = vmatprep.subr.bf16.mxu0 %v1682
          %2356 = vmatpush1.bf16.msra.mxu0 %v1681
          %2357 = vmatprep.subr.bf16.mxu0 %v1686
          %2358 = vmatpush1.bf16.msra.mxu0 %v1685
          %2359 = vmatprep.subr.bf16.mxu0 %v1690
          %2360 = vmatpush1.bf16.msra.mxu0 %v1689
          %2361 = vmatprep.subr.bf16.mxu0 %v1694
          %2362 = vmatpush1.bf16.msra.mxu0 %v1693
          %2363 = vmatprep.subr.bf16.mxu0 %v1698
          %2364 = vmatpush1.bf16.msra.mxu0 %v1697
          %2365 = vmatprep.subr.bf16.mxu0 %v1702
          %2366 = vmatpush1.bf16.msra.mxu0 %v1701
          %2367 = vmatprep.subr.bf16.mxu0 %v1706
          %2368 = vmatpush1.bf16.msra.mxu0 %v1705
          %2369 = vmatprep.subr.bf16.mxu0 %v1710
          %2370 = vmatpush1.bf16.msra.mxu0 %v1709
          %2371 = vmatprep.subr.bf16.mxu0 %v1714
          %2372 = vmatpush1.bf16.msra.mxu0 %v1713
          %2373 = vmatprep.subr.bf16.mxu0 %v1718
          %2374 = vmatpush1.bf16.msra.mxu0 %v1717
          %2375 = vmatprep.subr.bf16.mxu0 %v1722
          %2376 = vmatpush1.bf16.msra.mxu0 %v1721
          %2377 = vmatprep.subr.bf16.mxu0 %v1726
          %2378 = vmatpush1.bf16.msra.mxu0 %v1725
          %2379 = vmatprep.subr.bf16.mxu0 %v1730
          %2380 = vmatpush1.bf16.msra.mxu0 %v1729
          %2381 = vmatprep.subr.bf16.mxu0 %v1734
          %2382 = vmatpush1.bf16.msra.mxu0 %v1733
          %2383 = vmatprep.subr.bf16.mxu0 %v1738
          %2384 = vmatpush1.bf16.msra.mxu0 %v1737
          %2385 = vmatprep.subr.bf16.mxu0 %v1742
          %2386 = vmatpush1.bf16.msra.mxu0 %v1741
          %2387 = vmatprep.mubr.bf16.mxu0 %v626
          %2388 = vmatmul.mubr.bf16.gmra.mrb[0].mxu0 %v625
          %v2389 = vpop.f32.mrb[0].mxu0
          %v2390 = vadd.f32 %v902, %v2389
          %v2391 = vpop.f32.mrb[0].mxu0
          %v2392 = vadd.f32 %v906, %v2391
          %v2393 = vpop.f32.mrb[0].mxu0
          %v2394 = vpop.f32.mrb[0].mxu0
          %2395 = vdwg.mxu0
          %2396 = vmatprep.subr.bf16.mxu0 %v1746
          %2397 = vmatpush1.bf16.msra.mxu0 %v1745
          %2398 = vmatprep.subr.bf16.mxu0 %v1750
          %2399 = vmatpush1.bf16.msra.mxu0 %v1749
          %2400 = vmatprep.subr.bf16.mxu0 %v1754
          %2401 = vmatpush1.bf16.msra.mxu0 %v1753
          %2402 = vmatprep.subr.bf16.mxu0 %v1758
          %2403 = vmatpush1.bf16.msra.mxu0 %v1757
          %2404 = vmatprep.subr.bf16.mxu0 %v1762
          %2405 = vmatpush1.bf16.msra.mxu0 %v1761
          %2406 = vmatprep.subr.bf16.mxu0 %v1766
          %2407 = vmatpush1.bf16.msra.mxu0 %v1765
          %2408 = vmatprep.subr.bf16.mxu0 %v1770
          %2409 = vmatpush1.bf16.msra.mxu0 %v1769
          %2410 = vmatprep.subr.bf16.mxu0 %v1774
          %2411 = vmatpush1.bf16.msra.mxu0 %v1773
          %2412 = vmatprep.subr.bf16.mxu0 %v1778
          %2413 = vmatpush1.bf16.msra.mxu0 %v1777
          %2414 = vmatprep.subr.bf16.mxu0 %v1782
          %2415 = vmatpush1.bf16.msra.mxu0 %v1781
          %2416 = vmatprep.subr.bf16.mxu0 %v1786
          %2417 = vmatpush1.bf16.msra.mxu0 %v1785
          %2418 = vmatprep.subr.bf16.mxu0 %v1790
          %2419 = vmatpush1.bf16.msra.mxu0 %v1789
          %2420 = vmatprep.subr.bf16.mxu0 %v1794
          %2421 = vmatpush1.bf16.msra.mxu0 %v1793
          %2422 = vmatprep.subr.bf16.mxu0 %v1798
          %2423 = vmatpush1.bf16.msra.mxu0 %v1797
          %2424 = vmatprep.subr.bf16.mxu0 %v1802
          %2425 = vmatpush1.bf16.msra.mxu0 %v1801
          %2426 = vmatprep.subr.bf16.mxu0 %v1806
          %2427 = vmatpush1.bf16.msra.mxu0 %v1805
          %2428 = vmatprep.mubr.bf16.mxu0 %v628
          %2429 = vmatmul.mubr.bf16.gmra.mrb[0].mxu0 %v627
          %v2430 = vpop.f32.mrb[0].mxu0
          %v2431 = vadd.f32 %v2390, %v2430
          %v2432 = vpop.f32.mrb[0].mxu0
          %v2433 = vadd.f32 %v2392, %v2432
          %v2434 = vpop.f32.mrb[0].mxu0
          %v2435 = vpop.f32.mrb[0].mxu0
          %2436 = vdwg.mxu0
          %2437 = vmatprep.subr.bf16.mxu0 %v1810
          %2438 = vmatpush1.bf16.msra.mxu0 %v1809
          %2439 = vmatprep.subr.bf16.mxu0 %v1814
          %2440 = vmatpush1.bf16.msra.mxu0 %v1813
          %2441 = vmatprep.subr.bf16.mxu0 %v1818
          %2442 = vmatpush1.bf16.msra.mxu0 %v1817
          %2443 = vmatprep.subr.bf16.mxu0 %v1822
          %2444 = vmatpush1.bf16.msra.mxu0 %v1821
          %2445 = vmatprep.subr.bf16.mxu0 %v1826
          %2446 = vmatpush1.bf16.msra.mxu0 %v1825
          %2447 = vmatprep.subr.bf16.mxu0 %v1830
          %2448 = vmatpush1.bf16.msra.mxu0 %v1829
          %2449 = vmatprep.subr.bf16.mxu0 %v1834
          %2450 = vmatpush1.bf16.msra.mxu0 %v1833
          %2451 = vmatprep.subr.bf16.mxu0 %v1838
          %2452 = vmatpush1.bf16.msra.mxu0 %v1837
          %2453 = vmatprep.subr.bf16.mxu0 %v1842
          %2454 = vmatpush1.bf16.msra.mxu0 %v1841
          %2455 = vmatprep.subr.bf16.mxu0 %v1846
          %2456 = vmatpush1.bf16.msra.mxu0 %v1845
          %2457 = vmatprep.subr.bf16.mxu0 %v1850
          %2458 = vmatpush1.bf16.msra.mxu0 %v1849
          %2459 = vmatprep.subr.bf16.mxu0 %v1854
          %2460 = vmatpush1.bf16.msra.mxu0 %v1853
          %2461 = vmatprep.subr.bf16.mxu0 %v1858
          %2462 = vmatpush1.bf16.msra.mxu0 %v1857
          %2463 = vmatprep.subr.bf16.mxu0 %v1862
          %2464 = vmatpush1.bf16.msra.mxu0 %v1861
          %2465 = vmatprep.subr.bf16.mxu0 %v1866
          %2466 = vmatpush1.bf16.msra.mxu0 %v1865
          %2467 = vmatprep.subr.bf16.mxu0 %v1870
          %2468 = vmatpush1.bf16.msra.mxu0 %v1869
          %2469 = vmatprep.mubr.bf16.mxu0 %v630
          %2470 = vmatmul.mubr.bf16.gmra.mrb[0].mxu0 %v629
          %v2471 = vpop.f32.mrb[0].mxu0
          %v2472 = vadd.f32 %v2431, %v2471
          %v2473 = vpop.f32.mrb[0].mxu0
          %v2474 = vadd.f32 %v2433, %v2473
          %v2475 = vpop.f32.mrb[0].mxu0
          %v2476 = vpop.f32.mrb[0].mxu0
          %2477 = vdwg.mxu0
          %2478 = vmatprep.subr.bf16.mxu0 %v1874
          %2479 = vmatpush1.bf16.msra.mxu0 %v1873
          %2480 = vmatprep.subr.bf16.mxu0 %v1878
          %2481 = vmatpush1.bf16.msra.mxu0 %v1877
          %2482 = vmatprep.subr.bf16.mxu0 %v1882
          %2483 = vmatpush1.bf16.msra.mxu0 %v1881
          %2484 = vmatprep.subr.bf16.mxu0 %v1886
          %2485 = vmatpush1.bf16.msra.mxu0 %v1885
          %2486 = vmatprep.subr.bf16.mxu0 %v1890
          %2487 = vmatpush1.bf16.msra.mxu0 %v1889
          %2488 = vmatprep.subr.bf16.mxu0 %v1894
          %2489 = vmatpush1.bf16.msra.mxu0 %v1893
          %2490 = vmatprep.subr.bf16.mxu0 %v1898
          %2491 = vmatpush1.bf16.msra.mxu0 %v1897
          %2492 = vmatprep.subr.bf16.mxu0 %v1902
          %2493 = vmatpush1.bf16.msra.mxu0 %v1901
          %2494 = vmatprep.subr.bf16.mxu0 %v1906
          %2495 = vmatpush1.bf16.msra.mxu0 %v1905
          %2496 = vmatprep.subr.bf16.mxu0 %v1910
          %2497 = vmatpush1.bf16.msra.mxu0 %v1909
          %2498 = vmatprep.subr.bf16.mxu0 %v1914
          %2499 = vmatpush1.bf16.msra.mxu0 %v1913
          %2500 = vmatprep.subr.bf16.mxu0 %v1918
          %2501 = vmatpush1.bf16.msra.mxu0 %v1917
          %2502 = vmatprep.subr.bf16.mxu0 %v1922
          %2503 = vmatpush1.bf16.msra.mxu0 %v1921
          %2504 = vmatprep.subr.bf16.mxu0 %v1926
          %2505 = vmatpush1.bf16.msra.mxu0 %v1925
          %2506 = vmatprep.subr.bf16.mxu0 %v1930
          %2507 = vmatpush1.bf16.msra.mxu0 %v1929
          %2508 = vmatprep.subr.bf16.mxu0 %v1934
          %2509 = vmatpush1.bf16.msra.mxu0 %v1933
          %2510 = vmatprep.mubr.bf16.mxu0 %v632
          %2511 = vmatmul.mubr.bf16.gmra.mrb[0].mxu0 %v631
          %v2512 = vpop.f32.mrb[0].mxu0
          %v2513 = vadd.f32 %v2472, %v2512
          %v2514 = vpop.f32.mrb[0].mxu0
          %v2515 = vadd.f32 %v2474, %v2514
          %v2516 = vpop.f32.mrb[0].mxu0
          %v2517 = vpop.f32.mrb[0].mxu0
          %2518 = vdwg.mxu0
          %v2519 = vmax.f32 %v2349, 0.0
          %v2520 = vmax.f32 %v2351, 0.0
          %v2521 = vmax.f32 %v2513, 0.0
          %v2522 = vmax.f32 %v2515, 0.0
          %v2527 = vcombine.low %v2519, %v2520
          %v2528 = vcombine.low %v2521, %v2522
          %v2530 = vunpack.c.l.s4 1983009808
          %v2531 = vunpack.c.0.s8 %v2530
          %v2532 = vlaneseq
          %v2533 = vshrl.u32 %v2532, 7
          %v2534 = vsub.s32 %v2531, %v2533
          %v2535 = vrot.slane %v2527, %v2534
          %v2537 = vunpack.c.l.s4 1983009808
          %v2538 = vunpack.c.0.s8 %v2537
          %v2539 = vlaneseq
          %v2540 = vshrl.u32 %v2539, 7
          %v2541 = vsub.s32 %v2538, %v2540
          %v2542 = vrot.slane %v2528, %v2541
          %v2543 = vcombine.low %v2535, %v2542
          %2545 = vst [vmem:[#allocation2] sm:$0xff] %v2543
          %2546 = vst [vmem:[#allocation3] sm:$0xff] 0.0
          %2547 = vst [vmem:[#allocation3 + $0x8] sm:$0xff] 0.0
        $region104: #{critic_forward.1} parent=63 // pred_fallthru
          _
        %v2548 = vld [vmem:[#allocation2] sm:$0xff]
        %v2550 = vcombine.high %v2548, %v2548
        %v2552 = vunpack.c.l.s4 1983009808
        %v2553 = vunpack.c.0.s8 %v2552
        %v2554 = vlaneseq
        %v2555 = vshrl.u32 %v2554, 7
        %v2556 = vsub.s32 %v2553, %v2555
        %v2557 = vrot.slane %v2548, %v2556
        %v2559 = vunpack.c.l.s4 1983009808
        %v2560 = vunpack.c.0.s8 %v2559
        %v2561 = vlaneseq
        %v2562 = vshrl.u32 %v2561, 7
        %v2563 = vsub.s32 %v2560, %v2562
        %v2564 = vrot.slane %v2550, %v2563
        %v2565 = vcombine.high %v2557, %v2557
        %v2566 = vcombine.high %v2564, %v2564
        %v2571 = vpack.c.bf16 %v2557, %v2557
        %v2572 = vpack.c.bf16 %v2565, %v2565
        %v2573 = vpack.c.bf16 %v2564, %v2564
        %v2574 = vpack.c.bf16 %v2566, %v2566
        %v2575 = vld [vmem:[%s486] sm:$0xff]
        %v2576 = vld [vmem:[%s486 + $0x8] sm:$0xff]
        %v2577 = vld [vmem:[%s486 + $0x10] sm:$0xff]
        %v2578 = vld [vmem:[%s486 + $0x18] sm:$0xff]
        %v2579 = vld [vmem:[%s486 + $0x20] sm:$0xff]
        %v2580 = vld [vmem:[%s486 + $0x28] sm:$0xff]
        %v2581 = vld [vmem:[%s486 + $0x30] sm:$0xff]
        %v2582 = vld [vmem:[%s486 + $0x38] sm:$0xff]
        %v2583 = vld [vmem:[%s486 + $0x40] sm:$0xff]
        %v2584 = vld [vmem:[%s486 + $0x48] sm:$0xff]
        %v2585 = vld [vmem:[%s486 + $0x50] sm:$0xff]
        %v2586 = vld [vmem:[%s486 + $0x58] sm:$0xff]
        %v2587 = vld [vmem:[%s486 + $0x60] sm:$0xff]
        %v2588 = vld [vmem:[%s486 + $0x68] sm:$0xff]
        %v2589 = vld [vmem:[%s486 + $0x70] sm:$0xff]
        %v2590 = vld [vmem:[%s486 + $0x78] sm:$0xff]
        %v2591 = vld [vmem:[%s486 + $0x80] sm:$0xff]
        %v2592 = vld [vmem:[%s486 + $0x88] sm:$0xff]
        %v2593 = vld [vmem:[%s486 + $0x90] sm:$0xff]
        %v2594 = vld [vmem:[%s486 + $0x98] sm:$0xff]
        %v2595 = vld [vmem:[%s486 + $0xa0] sm:$0xff]
        %v2596 = vld [vmem:[%s486 + $0xa8] sm:$0xff]
        %v2597 = vld [vmem:[%s486 + $0xb0] sm:$0xff]
        %v2598 = vld [vmem:[%s486 + $0xb8] sm:$0xff]
        %v2599 = vld [vmem:[%s486 + $0xc0] sm:$0xff]
        %v2600 = vld [vmem:[%s486 + $0xc8] sm:$0xff]
        %v2601 = vld [vmem:[%s486 + $0xd0] sm:$0xff]
        %v2602 = vld [vmem:[%s486 + $0xd8] sm:$0xff]
        %v2603 = vld [vmem:[%s486 + $0xe0] sm:$0xff]
        %v2604 = vld [vmem:[%s486 + $0xe8] sm:$0xff]
        %v2605 = vld [vmem:[%s486 + $0xf0] sm:$0xff]
        %v2606 = vld [vmem:[%s486 + $0xf8] sm:$0xff]
        %v2607 = vld [vmem:[%s486 + $0x100] sm:$0xff]
        %v2608 = vld [vmem:[%s486 + $0x108] sm:$0xff]
        %v2609 = vld [vmem:[%s486 + $0x110] sm:$0xff]
        %v2610 = vld [vmem:[%s486 + $0x118] sm:$0xff]
        %v2611 = vld [vmem:[%s486 + $0x120] sm:$0xff]
        %v2612 = vld [vmem:[%s486 + $0x128] sm:$0xff]
        %v2613 = vld [vmem:[%s486 + $0x130] sm:$0xff]
        %v2614 = vld [vmem:[%s486 + $0x138] sm:$0xff]
        %v2615 = vld [vmem:[%s486 + $0x140] sm:$0xff]
        %v2616 = vld [vmem:[%s486 + $0x148] sm:$0xff]
        %v2617 = vld [vmem:[%s486 + $0x150] sm:$0xff]
        %v2618 = vld [vmem:[%s486 + $0x158] sm:$0xff]
        %v2619 = vld [vmem:[%s486 + $0x160] sm:$0xff]
        %v2620 = vld [vmem:[%s486 + $0x168] sm:$0xff]
        %v2621 = vld [vmem:[%s486 + $0x170] sm:$0xff]
        %v2622 = vld [vmem:[%s486 + $0x178] sm:$0xff]
        %v2623 = vld [vmem:[%s486 + $0x180] sm:$0xff]
        %v2624 = vld [vmem:[%s486 + $0x188] sm:$0xff]
        %v2625 = vld [vmem:[%s486 + $0x190] sm:$0xff]
        %v2626 = vld [vmem:[%s486 + $0x198] sm:$0xff]
        %v2627 = vld [vmem:[%s486 + $0x1a0] sm:$0xff]
        %v2628 = vld [vmem:[%s486 + $0x1a8] sm:$0xff]
        %v2629 = vld [vmem:[%s486 + $0x1b0] sm:$0xff]
        %v2630 = vld [vmem:[%s486 + $0x1b8] sm:$0xff]
        %v2631 = vld [vmem:[%s486 + $0x1c0] sm:$0xff]
        %v2632 = vld [vmem:[%s486 + $0x1c8] sm:$0xff]
        %v2633 = vld [vmem:[%s486 + $0x1d0] sm:$0xff]
        %v2634 = vld [vmem:[%s486 + $0x1d8] sm:$0xff]
        %v2635 = vld [vmem:[%s486 + $0x1e0] sm:$0xff]
        %v2636 = vld [vmem:[%s486 + $0x1e8] sm:$0xff]
        %v2637 = vld [vmem:[%s486 + $0x1f0] sm:$0xff]
        %v2638 = vld [vmem:[%s486 + $0x1f8] sm:$0xff]
        %v2639 = vld [vmem:[#allocation5] sm:$0x3]
        %v2640 = vpack.c.bf16 %v2639, %v2639
        %v2641 = vld [vmem:[%s495] sm:$0x77]
        %v2643 = vunpack.c.l.b16 %v2641
        %v2644 = vunpack.c.h.b16 %v2641
        %v2645 = vpack.c.b16 %v2643, %v2643
        %v2646 = vpack.c.b16 %v2644, %v2644
        %vm2647 = vcmask 48128
        %v2649 = vsel %vm2647, %v2640, 0
        %vm2651 = vcmask 1042432
        %v2653 = vsel %vm2651, %v2645, 0
        %v2656 = vsel %vm2651, %v2646, 0
        %2658 = vmatprep.subr.bf16.mxu0 %v2656
        %2659 = vmatpush1.bf16.msra.mxu0 %v2653
        %2660 = vmatprep.subr.bf16.mxu0 0
        %2661 = vmatpush1.bf16.msra.mxu0 0
        %2662 = vmatprep.subr.bf16.mxu0 0
        %2663 = vmatpush1.bf16.msra.mxu0 0
        %2664 = vmatprep.subr.bf16.mxu0 0
        %2665 = vmatpush1.bf16.msra.mxu0 0
        %2666 = vmatprep.subr.bf16.mxu0 0
        %2667 = vmatpush1.bf16.msra.mxu0 0
        %2668 = vmatprep.subr.bf16.mxu0 0
        %2669 = vmatpush1.bf16.msra.mxu0 0
        %2670 = vmatprep.subr.bf16.mxu0 0
        %2671 = vmatpush1.bf16.msra.mxu0 0
        %2672 = vmatprep.subr.bf16.mxu0 0
        %2673 = vmatpush1.bf16.msra.mxu0 0
        %2674 = vmatprep.subr.bf16.mxu0 0
        %2675 = vmatpush1.bf16.msra.mxu0 0
        %2676 = vmatprep.subr.bf16.mxu0 0
        %2677 = vmatpush1.bf16.msra.mxu0 0
        %2678 = vmatprep.subr.bf16.mxu0 0
        %2679 = vmatpush1.bf16.msra.mxu0 0
        %2680 = vmatprep.subr.bf16.mxu0 0
        %2681 = vmatpush1.bf16.msra.mxu0 0
        %2682 = vmatprep.subr.bf16.mxu0 0
        %2683 = vmatpush1.bf16.msra.mxu0 0
        %2684 = vmatprep.subr.bf16.mxu0 0
        %2685 = vmatpush1.bf16.msra.mxu0 0
        %2686 = vmatprep.subr.bf16.mxu0 0
        %2687 = vmatpush1.bf16.msra.mxu0 0
        %2688 = vmatprep.subr.bf16.mxu0 0
        %2689 = vmatpush1.bf16.msra.mxu0 0
        %2690 = vmatprep.mubr.bf16.mxu0 0
        %2691 = vmatmul.mubr.bf16.gmra.mrb[0].mxu0 %v2649
        %v2692 = vpop.f32.mrb[0].mxu0
        %v2693 = vadd.f32 0.0, %v2692
        %v2694 = vpop.f32.mrb[0].mxu0
        %v2695 = vadd.f32 0.0, %v2694
        %v2696 = vpop.f32.mrb[0].mxu0
        %v2697 = vpop.f32.mrb[0].mxu0
        %2698 = vdwg.mxu0
        %v2763 = vunpack.c.l.b16 %v2575
        %v2764 = vunpack.c.h.b16 %v2575
        %v2765 = vunpack.c.l.b16 %v2576
        %v2766 = vunpack.c.h.b16 %v2576
        %v2767 = vunpack.c.l.b16 %v2577
        %v2768 = vunpack.c.h.b16 %v2577
        %v2769 = vunpack.c.l.b16 %v2578
        %v2770 = vunpack.c.h.b16 %v2578
        %v2771 = vunpack.c.l.b16 %v2579
        %v2772 = vunpack.c.h.b16 %v2579
        %v2773 = vunpack.c.l.b16 %v2580
        %v2774 = vunpack.c.h.b16 %v2580
        %v2775 = vunpack.c.l.b16 %v2581
        %v2776 = vunpack.c.h.b16 %v2581
        %v2777 = vunpack.c.l.b16 %v2582
        %v2778 = vunpack.c.h.b16 %v2582
        %v2779 = vunpack.c.l.b16 %v2583
        %v2780 = vunpack.c.h.b16 %v2583
        %v2781 = vunpack.c.l.b16 %v2584
        %v2782 = vunpack.c.h.b16 %v2584
        %v2783 = vunpack.c.l.b16 %v2585
        %v2784 = vunpack.c.h.b16 %v2585
        %v2785 = vunpack.c.l.b16 %v2586
        %v2786 = vunpack.c.h.b16 %v2586
        %v2787 = vunpack.c.l.b16 %v2587
        %v2788 = vunpack.c.h.b16 %v2587
        %v2789 = vunpack.c.l.b16 %v2588
        %v2790 = vunpack.c.h.b16 %v2588
        %v2791 = vunpack.c.l.b16 %v2589
        %v2792 = vunpack.c.h.b16 %v2589
        %v2793 = vunpack.c.l.b16 %v2590
        %v2794 = vunpack.c.h.b16 %v2590
        %v2795 = vunpack.c.l.b16 %v2591
        %v2796 = vunpack.c.h.b16 %v2591
        %v2797 = vunpack.c.l.b16 %v2592
        %v2798 = vunpack.c.h.b16 %v2592
        %v2799 = vunpack.c.l.b16 %v2593
        %v2800 = vunpack.c.h.b16 %v2593
        %v2801 = vunpack.c.l.b16 %v2594
        %v2802 = vunpack.c.h.b16 %v2594
        %v2803 = vunpack.c.l.b16 %v2595
        %v2804 = vunpack.c.h.b16 %v2595
        %v2805 = vunpack.c.l.b16 %v2596
        %v2806 = vunpack.c.h.b16 %v2596
        %v2807 = vunpack.c.l.b16 %v2597
        %v2808 = vunpack.c.h.b16 %v2597
        %v2809 = vunpack.c.l.b16 %v2598
        %v2810 = vunpack.c.h.b16 %v2598
        %v2811 = vunpack.c.l.b16 %v2599
        %v2812 = vunpack.c.h.b16 %v2599
        %v2813 = vunpack.c.l.b16 %v2600
        %v2814 = vunpack.c.h.b16 %v2600
        %v2815 = vunpack.c.l.b16 %v2601
        %v2816 = vunpack.c.h.b16 %v2601
        %v2817 = vunpack.c.l.b16 %v2602
        %v2818 = vunpack.c.h.b16 %v2602
        %v2819 = vunpack.c.l.b16 %v2603
        %v2820 = vunpack.c.h.b16 %v2603
        %v2821 = vunpack.c.l.b16 %v2604
        %v2822 = vunpack.c.h.b16 %v2604
        %v2823 = vunpack.c.l.b16 %v2605
        %v2824 = vunpack.c.h.b16 %v2605
        %v2825 = vunpack.c.l.b16 %v2606
        %v2826 = vunpack.c.h.b16 %v2606
        %v2827 = vunpack.c.l.b16 %v2607
        %v2828 = vunpack.c.h.b16 %v2607
        %v2829 = vunpack.c.l.b16 %v2608
        %v2830 = vunpack.c.h.b16 %v2608
        %v2831 = vunpack.c.l.b16 %v2609
        %v2832 = vunpack.c.h.b16 %v2609
        %v2833 = vunpack.c.l.b16 %v2610
        %v2834 = vunpack.c.h.b16 %v2610
        %v2835 = vunpack.c.l.b16 %v2611
        %v2836 = vunpack.c.h.b16 %v2611
        %v2837 = vunpack.c.l.b16 %v2612
        %v2838 = vunpack.c.h.b16 %v2612
        %v2839 = vunpack.c.l.b16 %v2613
        %v2840 = vunpack.c.h.b16 %v2613
        %v2841 = vunpack.c.l.b16 %v2614
        %v2842 = vunpack.c.h.b16 %v2614
        %v2843 = vunpack.c.l.b16 %v2615
        %v2844 = vunpack.c.h.b16 %v2615
        %v2845 = vunpack.c.l.b16 %v2616
        %v2846 = vunpack.c.h.b16 %v2616
        %v2847 = vunpack.c.l.b16 %v2617
        %v2848 = vunpack.c.h.b16 %v2617
        %v2849 = vunpack.c.l.b16 %v2618
        %v2850 = vunpack.c.h.b16 %v2618
        %v2851 = vunpack.c.l.b16 %v2619
        %v2852 = vunpack.c.h.b16 %v2619
        %v2853 = vunpack.c.l.b16 %v2620
        %v2854 = vunpack.c.h.b16 %v2620
        %v2855 = vunpack.c.l.b16 %v2621
        %v2856 = vunpack.c.h.b16 %v2621
        %v2857 = vunpack.c.l.b16 %v2622
        %v2858 = vunpack.c.h.b16 %v2622
        %v2859 = vunpack.c.l.b16 %v2623
        %v2860 = vunpack.c.h.b16 %v2623
        %v2861 = vunpack.c.l.b16 %v2624
        %v2862 = vunpack.c.h.b16 %v2624
        %v2863 = vunpack.c.l.b16 %v2625
        %v2864 = vunpack.c.h.b16 %v2625
        %v2865 = vunpack.c.l.b16 %v2626
        %v2866 = vunpack.c.h.b16 %v2626
        %v2867 = vunpack.c.l.b16 %v2627
        %v2868 = vunpack.c.h.b16 %v2627
        %v2869 = vunpack.c.l.b16 %v2628
        %v2870 = vunpack.c.h.b16 %v2628
        %v2871 = vunpack.c.l.b16 %v2629
        %v2872 = vunpack.c.h.b16 %v2629
        %v2873 = vunpack.c.l.b16 %v2630
        %v2874 = vunpack.c.h.b16 %v2630
        %v2875 = vunpack.c.l.b16 %v2631
        %v2876 = vunpack.c.h.b16 %v2631
        %v2877 = vunpack.c.l.b16 %v2632
        %v2878 = vunpack.c.h.b16 %v2632
        %v2879 = vunpack.c.l.b16 %v2633
        %v2880 = vunpack.c.h.b16 %v2633
        %v2881 = vunpack.c.l.b16 %v2634
        %v2882 = vunpack.c.h.b16 %v2634
        %v2883 = vunpack.c.l.b16 %v2635
        %v2884 = vunpack.c.h.b16 %v2635
        %v2885 = vunpack.c.l.b16 %v2636
        %v2886 = vunpack.c.h.b16 %v2636
        %v2887 = vunpack.c.l.b16 %v2637
        %v2888 = vunpack.c.h.b16 %v2637
        %v2889 = vunpack.c.l.b16 %v2638
        %v2890 = vunpack.c.h.b16 %v2638
        %v2891 = vpack.c.b16 %v2765, %v2763
        %v2892 = vpack.c.b16 %v2766, %v2764
        %v2893 = vpack.c.b16 %v2769, %v2767
        %v2894 = vpack.c.b16 %v2770, %v2768
        %v2895 = vpack.c.b16 %v2773, %v2771
        %v2896 = vpack.c.b16 %v2774, %v2772
        %v2897 = vpack.c.b16 %v2777, %v2775
        %v2898 = vpack.c.b16 %v2778, %v2776
        %v2899 = vpack.c.b16 %v2781, %v2779
        %v2900 = vpack.c.b16 %v2782, %v2780
        %v2901 = vpack.c.b16 %v2785, %v2783
        %v2902 = vpack.c.b16 %v2786, %v2784
        %v2903 = vpack.c.b16 %v2789, %v2787
        %v2904 = vpack.c.b16 %v2790, %v2788
        %v2905 = vpack.c.b16 %v2793, %v2791
        %v2906 = vpack.c.b16 %v2794, %v2792
        %v2907 = vpack.c.b16 %v2797, %v2795
        %v2908 = vpack.c.b16 %v2798, %v2796
        %v2909 = vpack.c.b16 %v2801, %v2799
        %v2910 = vpack.c.b16 %v2802, %v2800
        %v2911 = vpack.c.b16 %v2805, %v2803
        %v2912 = vpack.c.b16 %v2806, %v2804
        %v2913 = vpack.c.b16 %v2809, %v2807
        %v2914 = vpack.c.b16 %v2810, %v2808
        %v2915 = vpack.c.b16 %v2813, %v2811
        %v2916 = vpack.c.b16 %v2814, %v2812
        %v2917 = vpack.c.b16 %v2817, %v2815
        %v2918 = vpack.c.b16 %v2818, %v2816
        %v2919 = vpack.c.b16 %v2821, %v2819
        %v2920 = vpack.c.b16 %v2822, %v2820
        %v2921 = vpack.c.b16 %v2825, %v2823
        %v2922 = vpack.c.b16 %v2826, %v2824
        %v2923 = vpack.c.b16 %v2829, %v2827
        %v2924 = vpack.c.b16 %v2830, %v2828
        %v2925 = vpack.c.b16 %v2833, %v2831
        %v2926 = vpack.c.b16 %v2834, %v2832
        %v2927 = vpack.c.b16 %v2837, %v2835
        %v2928 = vpack.c.b16 %v2838, %v2836
        %v2929 = vpack.c.b16 %v2841, %v2839
        %v2930 = vpack.c.b16 %v2842, %v2840
        %v2931 = vpack.c.b16 %v2845, %v2843
        %v2932 = vpack.c.b16 %v2846, %v2844
        %v2933 = vpack.c.b16 %v2849, %v2847
        %v2934 = vpack.c.b16 %v2850, %v2848
        %v2935 = vpack.c.b16 %v2853, %v2851
        %v2936 = vpack.c.b16 %v2854, %v2852
        %v2937 = vpack.c.b16 %v2857, %v2855
        %v2938 = vpack.c.b16 %v2858, %v2856
        %v2939 = vpack.c.b16 %v2861, %v2859
        %v2940 = vpack.c.b16 %v2862, %v2860
        %v2941 = vpack.c.b16 %v2865, %v2863
        %v2942 = vpack.c.b16 %v2866, %v2864
        %v2943 = vpack.c.b16 %v2869, %v2867
        %v2944 = vpack.c.b16 %v2870, %v2868
        %v2945 = vpack.c.b16 %v2873, %v2871
        %v2946 = vpack.c.b16 %v2874, %v2872
        %v2947 = vpack.c.b16 %v2877, %v2875
        %v2948 = vpack.c.b16 %v2878, %v2876
        %v2949 = vpack.c.b16 %v2881, %v2879
        %v2950 = vpack.c.b16 %v2882, %v2880
        %v2951 = vpack.c.b16 %v2885, %v2883
        %v2952 = vpack.c.b16 %v2886, %v2884
        %v2953 = vpack.c.b16 %v2889, %v2887
        %v2954 = vpack.c.b16 %v2890, %v2888
        %3019 = vmatprep.subr.bf16.mxu0 %v2892
        %3020 = vmatpush1.bf16.msra.mxu0 %v2891
        %3021 = vmatprep.subr.bf16.mxu0 %v2894
        %3022 = vmatpush1.bf16.msra.mxu0 %v2893
        %3023 = vmatprep.subr.bf16.mxu0 %v2896
        %3024 = vmatpush1.bf16.msra.mxu0 %v2895
        %3025 = vmatprep.subr.bf16.mxu0 %v2898
        %3026 = vmatpush1.bf16.msra.mxu0 %v2897
        %3027 = vmatprep.subr.bf16.mxu0 %v2900
        %3028 = vmatpush1.bf16.msra.mxu0 %v2899
        %3029 = vmatprep.subr.bf16.mxu0 %v2902
        %3030 = vmatpush1.bf16.msra.mxu0 %v2901
        %3031 = vmatprep.subr.bf16.mxu0 %v2904
        %3032 = vmatpush1.bf16.msra.mxu0 %v2903
        %3033 = vmatprep.subr.bf16.mxu0 %v2906
        %3034 = vmatpush1.bf16.msra.mxu0 %v2905
        %3035 = vmatprep.subr.bf16.mxu0 %v2908
        %3036 = vmatpush1.bf16.msra.mxu0 %v2907
        %3037 = vmatprep.subr.bf16.mxu0 %v2910
        %3038 = vmatpush1.bf16.msra.mxu0 %v2909
        %3039 = vmatprep.subr.bf16.mxu0 %v2912
        %3040 = vmatpush1.bf16.msra.mxu0 %v2911
        %3041 = vmatprep.subr.bf16.mxu0 %v2914
        %3042 = vmatpush1.bf16.msra.mxu0 %v2913
        %3043 = vmatprep.subr.bf16.mxu0 %v2916
        %3044 = vmatpush1.bf16.msra.mxu0 %v2915
        %3045 = vmatprep.subr.bf16.mxu0 %v2918
        %3046 = vmatpush1.bf16.msra.mxu0 %v2917
        %3047 = vmatprep.subr.bf16.mxu0 %v2920
        %3048 = vmatpush1.bf16.msra.mxu0 %v2919
        %3049 = vmatprep.subr.bf16.mxu0 %v2922
        %3050 = vmatpush1.bf16.msra.mxu0 %v2921
        %3051 = vmatprep.mubr.bf16.mxu0 %v2572
        %3052 = vmatmul.mubr.bf16.gmra.mrb[0].mxu0 %v2571
        %v3053 = vpop.f32.mrb[0].mxu0
        %v3054 = vadd.f32 %v2693, %v3053
        %v3055 = vpop.f32.mrb[0].mxu0
        %v3056 = vadd.f32 %v2695, %v3055
        %v3057 = vpop.f32.mrb[0].mxu0
        %v3058 = vpop.f32.mrb[0].mxu0
        %3059 = vdwg.mxu0
        %3060 = vmatprep.subr.bf16.mxu0 %v2924
        %3061 = vmatpush1.bf16.msra.mxu0 %v2923
        %3062 = vmatprep.subr.bf16.mxu0 %v2926
        %3063 = vmatpush1.bf16.msra.mxu0 %v2925
        %3064 = vmatprep.subr.bf16.mxu0 %v2928
        %3065 = vmatpush1.bf16.msra.mxu0 %v2927
        %3066 = vmatprep.subr.bf16.mxu0 %v2930
        %3067 = vmatpush1.bf16.msra.mxu0 %v2929
        %3068 = vmatprep.subr.bf16.mxu0 %v2932
        %3069 = vmatpush1.bf16.msra.mxu0 %v2931
        %3070 = vmatprep.subr.bf16.mxu0 %v2934
        %3071 = vmatpush1.bf16.msra.mxu0 %v2933
        %3072 = vmatprep.subr.bf16.mxu0 %v2936
        %3073 = vmatpush1.bf16.msra.mxu0 %v2935
        %3074 = vmatprep.subr.bf16.mxu0 %v2938
        %3075 = vmatpush1.bf16.msra.mxu0 %v2937
        %3076 = vmatprep.subr.bf16.mxu0 %v2940
        %3077 = vmatpush1.bf16.msra.mxu0 %v2939
        %3078 = vmatprep.subr.bf16.mxu0 %v2942
        %3079 = vmatpush1.bf16.msra.mxu0 %v2941
        %3080 = vmatprep.subr.bf16.mxu0 %v2944
        %3081 = vmatpush1.bf16.msra.mxu0 %v2943
        %3082 = vmatprep.subr.bf16.mxu0 %v2946
        %3083 = vmatpush1.bf16.msra.mxu0 %v2945
        %3084 = vmatprep.subr.bf16.mxu0 %v2948
        %3085 = vmatpush1.bf16.msra.mxu0 %v2947
        %3086 = vmatprep.subr.bf16.mxu0 %v2950
        %3087 = vmatpush1.bf16.msra.mxu0 %v2949
        %3088 = vmatprep.subr.bf16.mxu0 %v2952
        %3089 = vmatpush1.bf16.msra.mxu0 %v2951
        %3090 = vmatprep.subr.bf16.mxu0 %v2954
        %3091 = vmatpush1.bf16.msra.mxu0 %v2953
        %3092 = vmatprep.mubr.bf16.mxu0 %v2574
        %3093 = vmatmul.mubr.bf16.gmra.mrb[0].mxu0 %v2573
        %v3094 = vpop.f32.mrb[0].mxu0
        %v3095 = vadd.f32 %v3054, %v3094
        %v3096 = vpop.f32.mrb[0].mxu0
        %v3097 = vadd.f32 %v3056, %v3096
        %v3098 = vpop.f32.mrb[0].mxu0
        %v3099 = vpop.f32.mrb[0].mxu0
        %3100 = vdwg.mxu0
        %v3101 = vld [vmem:[%s504] sm:$0x3]
        %v3103 = vlaneseq
        %v3104 = vshrl.u32 %v3103, 7
        %v3105 = vsub.s32 0, %v3104
        %v3106 = vrot.slane %v3101, %v3105
        %v3107 = vlaneseq
        %v3108 = vshrl.u32 %v3107, 7
        %v3109 = vsub.s32 1, %v3108
        %v3110 = vrot.slane %v3101, %v3109
        %v3113 = vadd.f32 %v3095, %v3106
        %v3114 = vadd.f32 %v3097, %v3110
        %v3115 = vmax.f32 %v3113, 0.0
        %v3116 = vmax.f32 %v3114, 0.0
        %v3117 = vld [vmem:[#allocation3] sm:$0xff]
        %v3118 = vld [vmem:[#allocation3 + $0x8] sm:$0xff]
        %v3119 = vpack.c.bf16 %v3115, %v3115
        %v3120 = vpack.c.bf16 %v3116, %v3116
        %v3121 = vld [vmem:[%s513] sm:$0xff]
        %v3122 = vld [vmem:[%s513 + $0x8] sm:$0xff]
        %v3123 = vld [vmem:[%s513 + $0x10] sm:$0xff]
        %v3124 = vld [vmem:[%s513 + $0x18] sm:$0xff]
        %v3125 = vld [vmem:[%s513 + $0x20] sm:$0xff]
        %v3126 = vld [vmem:[%s513 + $0x28] sm:$0xff]
        %v3127 = vld [vmem:[%s513 + $0x30] sm:$0xff]
        %v3128 = vld [vmem:[%s513 + $0x38] sm:$0xff]
        %v3129 = vld [vmem:[%s513 + $0x40] sm:$0xff]
        %v3130 = vld [vmem:[%s513 + $0x48] sm:$0xff]
        %v3131 = vld [vmem:[%s513 + $0x50] sm:$0xff]
        %v3132 = vld [vmem:[%s513 + $0x58] sm:$0xff]
        %v3133 = vld [vmem:[%s513 + $0x60] sm:$0xff]
        %v3134 = vld [vmem:[%s513 + $0x68] sm:$0xff]
        %v3135 = vld [vmem:[%s513 + $0x70] sm:$0xff]
        %v3136 = vld [vmem:[%s513 + $0x78] sm:$0xff]
        %v3137 = vld [vmem:[%s513 + $0x80] sm:$0xff]
        %v3138 = vld [vmem:[%s513 + $0x88] sm:$0xff]
        %v3139 = vld [vmem:[%s513 + $0x90] sm:$0xff]
        %v3140 = vld [vmem:[%s513 + $0x98] sm:$0xff]
        %v3141 = vld [vmem:[%s513 + $0xa0] sm:$0xff]
        %v3142 = vld [vmem:[%s513 + $0xa8] sm:$0xff]
        %v3143 = vld [vmem:[%s513 + $0xb0] sm:$0xff]
        %v3144 = vld [vmem:[%s513 + $0xb8] sm:$0xff]
        %v3145 = vld [vmem:[%s513 + $0xc0] sm:$0xff]
        %v3146 = vld [vmem:[%s513 + $0xc8] sm:$0xff]
        %v3147 = vld [vmem:[%s513 + $0xd0] sm:$0xff]
        %v3148 = vld [vmem:[%s513 + $0xd8] sm:$0xff]
        %v3149 = vld [vmem:[%s513 + $0xe0] sm:$0xff]
        %v3150 = vld [vmem:[%s513 + $0xe8] sm:$0xff]
        %v3151 = vld [vmem:[%s513 + $0xf0] sm:$0xff]
        %v3152 = vld [vmem:[%s513 + $0xf8] sm:$0xff]
        %v3153 = vld [vmem:[%s513 + $0x100] sm:$0xff]
        %v3154 = vld [vmem:[%s513 + $0x108] sm:$0xff]
        %v3155 = vld [vmem:[%s513 + $0x110] sm:$0xff]
        %v3156 = vld [vmem:[%s513 + $0x118] sm:$0xff]
        %v3157 = vld [vmem:[%s513 + $0x120] sm:$0xff]
        %v3158 = vld [vmem:[%s513 + $0x128] sm:$0xff]
        %v3159 = vld [vmem:[%s513 + $0x130] sm:$0xff]
        %v3160 = vld [vmem:[%s513 + $0x138] sm:$0xff]
        %v3161 = vld [vmem:[%s513 + $0x140] sm:$0xff]
        %v3162 = vld [vmem:[%s513 + $0x148] sm:$0xff]
        %v3163 = vld [vmem:[%s513 + $0x150] sm:$0xff]
        %v3164 = vld [vmem:[%s513 + $0x158] sm:$0xff]
        %v3165 = vld [vmem:[%s513 + $0x160] sm:$0xff]
        %v3166 = vld [vmem:[%s513 + $0x168] sm:$0xff]
        %v3167 = vld [vmem:[%s513 + $0x170] sm:$0xff]
        %v3168 = vld [vmem:[%s513 + $0x178] sm:$0xff]
        %v3169 = vld [vmem:[%s513 + $0x180] sm:$0xff]
        %v3170 = vld [vmem:[%s513 + $0x188] sm:$0xff]
        %v3171 = vld [vmem:[%s513 + $0x190] sm:$0xff]
        %v3172 = vld [vmem:[%s513 + $0x198] sm:$0xff]
        %v3173 = vld [vmem:[%s513 + $0x1a0] sm:$0xff]
        %v3174 = vld [vmem:[%s513 + $0x1a8] sm:$0xff]
        %v3175 = vld [vmem:[%s513 + $0x1b0] sm:$0xff]
        %v3176 = vld [vmem:[%s513 + $0x1b8] sm:$0xff]
        %v3177 = vld [vmem:[%s513 + $0x1c0] sm:$0xff]
        %v3178 = vld [vmem:[%s513 + $0x1c8] sm:$0xff]
        %v3179 = vld [vmem:[%s513 + $0x1d0] sm:$0xff]
        %v3180 = vld [vmem:[%s513 + $0x1d8] sm:$0xff]
        %v3181 = vld [vmem:[%s513 + $0x1e0] sm:$0xff]
        %v3182 = vld [vmem:[%s513 + $0x1e8] sm:$0xff]
        %v3183 = vld [vmem:[%s513 + $0x1f0] sm:$0xff]
        %v3184 = vld [vmem:[%s513 + $0x1f8] sm:$0xff]
        %v3185 = vld [vmem:[%s513 + $0x200] sm:$0xff]
        %v3186 = vld [vmem:[%s513 + $0x208] sm:$0xff]
        %v3187 = vld [vmem:[%s513 + $0x210] sm:$0xff]
        %v3188 = vld [vmem:[%s513 + $0x218] sm:$0xff]
        %v3189 = vld [vmem:[%s513 + $0x220] sm:$0xff]
        %v3190 = vld [vmem:[%s513 + $0x228] sm:$0xff]
        %v3191 = vld [vmem:[%s513 + $0x230] sm:$0xff]
        %v3192 = vld [vmem:[%s513 + $0x238] sm:$0xff]
        %v3193 = vld [vmem:[%s513 + $0x240] sm:$0xff]
        %v3194 = vld [vmem:[%s513 + $0x248] sm:$0xff]
        %v3195 = vld [vmem:[%s513 + $0x250] sm:$0xff]
        %v3196 = vld [vmem:[%s513 + $0x258] sm:$0xff]
        %v3197 = vld [vmem:[%s513 + $0x260] sm:$0xff]
        %v3198 = vld [vmem:[%s513 + $0x268] sm:$0xff]
        %v3199 = vld [vmem:[%s513 + $0x270] sm:$0xff]
        %v3200 = vld [vmem:[%s513 + $0x278] sm:$0xff]
        %v3201 = vld [vmem:[%s513 + $0x280] sm:$0xff]
        %v3202 = vld [vmem:[%s513 + $0x288] sm:$0xff]
        %v3203 = vld [vmem:[%s513 + $0x290] sm:$0xff]
        %v3204 = vld [vmem:[%s513 + $0x298] sm:$0xff]
        %v3205 = vld [vmem:[%s513 + $0x2a0] sm:$0xff]
        %v3206 = vld [vmem:[%s513 + $0x2a8] sm:$0xff]
        %v3207 = vld [vmem:[%s513 + $0x2b0] sm:$0xff]
        %v3208 = vld [vmem:[%s513 + $0x2b8] sm:$0xff]
        %v3209 = vld [vmem:[%s513 + $0x2c0] sm:$0xff]
        %v3210 = vld [vmem:[%s513 + $0x2c8] sm:$0xff]
        %v3211 = vld [vmem:[%s513 + $0x2d0] sm:$0xff]
        %v3212 = vld [vmem:[%s513 + $0x2d8] sm:$0xff]
        %v3213 = vld [vmem:[%s513 + $0x2e0] sm:$0xff]
        %v3214 = vld [vmem:[%s513 + $0x2e8] sm:$0xff]
        %v3215 = vld [vmem:[%s513 + $0x2f0] sm:$0xff]
        %v3216 = vld [vmem:[%s513 + $0x2f8] sm:$0xff]
        %v3217 = vld [vmem:[%s513 + $0x300] sm:$0xff]
        %v3218 = vld [vmem:[%s513 + $0x308] sm:$0xff]
        %v3219 = vld [vmem:[%s513 + $0x310] sm:$0xff]
        %v3220 = vld [vmem:[%s513 + $0x318] sm:$0xff]
        %v3221 = vld [vmem:[%s513 + $0x320] sm:$0xff]
        %v3222 = vld [vmem:[%s513 + $0x328] sm:$0xff]
        %v3223 = vld [vmem:[%s513 + $0x330] sm:$0xff]
        %v3224 = vld [vmem:[%s513 + $0x338] sm:$0xff]
        %v3225 = vld [vmem:[%s513 + $0x340] sm:$0xff]
        %v3226 = vld [vmem:[%s513 + $0x348] sm:$0xff]
        %v3227 = vld [vmem:[%s513 + $0x350] sm:$0xff]
        %v3228 = vld [vmem:[%s513 + $0x358] sm:$0xff]
        %v3229 = vld [vmem:[%s513 + $0x360] sm:$0xff]
        %v3230 = vld [vmem:[%s513 + $0x368] sm:$0xff]
        %v3231 = vld [vmem:[%s513 + $0x370] sm:$0xff]
        %v3232 = vld [vmem:[%s513 + $0x378] sm:$0xff]
        %v3233 = vld [vmem:[%s513 + $0x380] sm:$0xff]
        %v3234 = vld [vmem:[%s513 + $0x388] sm:$0xff]
        %v3235 = vld [vmem:[%s513 + $0x390] sm:$0xff]
        %v3236 = vld [vmem:[%s513 + $0x398] sm:$0xff]
        %v3237 = vld [vmem:[%s513 + $0x3a0] sm:$0xff]
        %v3238 = vld [vmem:[%s513 + $0x3a8] sm:$0xff]
        %v3239 = vld [vmem:[%s513 + $0x3b0] sm:$0xff]
        %v3240 = vld [vmem:[%s513 + $0x3b8] sm:$0xff]
        %v3241 = vld [vmem:[%s513 + $0x3c0] sm:$0xff]
        %v3242 = vld [vmem:[%s513 + $0x3c8] sm:$0xff]
        %v3243 = vld [vmem:[%s513 + $0x3d0] sm:$0xff]
        %v3244 = vld [vmem:[%s513 + $0x3d8] sm:$0xff]
        %v3245 = vld [vmem:[%s513 + $0x3e0] sm:$0xff]
        %v3246 = vld [vmem:[%s513 + $0x3e8] sm:$0xff]
        %v3247 = vld [vmem:[%s513 + $0x3f0] sm:$0xff]
        %v3248 = vld [vmem:[%s513 + $0x3f8] sm:$0xff]
        %v3377 = vunpack.c.l.b16 %v3121
        %v3378 = vunpack.c.h.b16 %v3121
        %v3379 = vunpack.c.l.b16 %v3122
        %v3380 = vunpack.c.h.b16 %v3122
        %v3381 = vunpack.c.l.b16 %v3123
        %v3382 = vunpack.c.h.b16 %v3123
        %v3383 = vunpack.c.l.b16 %v3124
        %v3384 = vunpack.c.h.b16 %v3124
        %v3385 = vunpack.c.l.b16 %v3125
        %v3386 = vunpack.c.h.b16 %v3125
        %v3387 = vunpack.c.l.b16 %v3126
        %v3388 = vunpack.c.h.b16 %v3126
        %v3389 = vunpack.c.l.b16 %v3127
        %v3390 = vunpack.c.h.b16 %v3127
        %v3391 = vunpack.c.l.b16 %v3128
        %v3392 = vunpack.c.h.b16 %v3128
        %v3393 = vunpack.c.l.b16 %v3129
        %v3394 = vunpack.c.h.b16 %v3129
        %v3395 = vunpack.c.l.b16 %v3130
        %v3396 = vunpack.c.h.b16 %v3130
        %v3397 = vunpack.c.l.b16 %v3131
        %v3398 = vunpack.c.h.b16 %v3131
        %v3399 = vunpack.c.l.b16 %v3132
        %v3400 = vunpack.c.h.b16 %v3132
        %v3401 = vunpack.c.l.b16 %v3133
        %v3402 = vunpack.c.h.b16 %v3133
        %v3403 = vunpack.c.l.b16 %v3134
        %v3404 = vunpack.c.h.b16 %v3134
        %v3405 = vunpack.c.l.b16 %v3135
        %v3406 = vunpack.c.h.b16 %v3135
        %v3407 = vunpack.c.l.b16 %v3136
        %v3408 = vunpack.c.h.b16 %v3136
        %v3409 = vunpack.c.l.b16 %v3137
        %v3410 = vunpack.c.h.b16 %v3137
        %v3411 = vunpack.c.l.b16 %v3138
        %v3412 = vunpack.c.h.b16 %v3138
        %v3413 = vunpack.c.l.b16 %v3139
        %v3414 = vunpack.c.h.b16 %v3139
        %v3415 = vunpack.c.l.b16 %v3140
        %v3416 = vunpack.c.h.b16 %v3140
        %v3417 = vunpack.c.l.b16 %v3141
        %v3418 = vunpack.c.h.b16 %v3141
        %v3419 = vunpack.c.l.b16 %v3142
        %v3420 = vunpack.c.h.b16 %v3142
        %v3421 = vunpack.c.l.b16 %v3143
        %v3422 = vunpack.c.h.b16 %v3143
        %v3423 = vunpack.c.l.b16 %v3144
        %v3424 = vunpack.c.h.b16 %v3144
        %v3425 = vunpack.c.l.b16 %v3145
        %v3426 = vunpack.c.h.b16 %v3145
        %v3427 = vunpack.c.l.b16 %v3146
        %v3428 = vunpack.c.h.b16 %v3146
        %v3429 = vunpack.c.l.b16 %v3147
        %v3430 = vunpack.c.h.b16 %v3147
        %v3431 = vunpack.c.l.b16 %v3148
        %v3432 = vunpack.c.h.b16 %v3148
        %v3433 = vunpack.c.l.b16 %v3149
        %v3434 = vunpack.c.h.b16 %v3149
        %v3435 = vunpack.c.l.b16 %v3150
        %v3436 = vunpack.c.h.b16 %v3150
        %v3437 = vunpack.c.l.b16 %v3151
        %v3438 = vunpack.c.h.b16 %v3151
        %v3439 = vunpack.c.l.b16 %v3152
        %v3440 = vunpack.c.h.b16 %v3152
        %v3441 = vunpack.c.l.b16 %v3153
        %v3442 = vunpack.c.h.b16 %v3153
        %v3443 = vunpack.c.l.b16 %v3154
        %v3444 = vunpack.c.h.b16 %v3154
        %v3445 = vunpack.c.l.b16 %v3155
        %v3446 = vunpack.c.h.b16 %v3155
        %v3447 = vunpack.c.l.b16 %v3156
        %v3448 = vunpack.c.h.b16 %v3156
        %v3449 = vunpack.c.l.b16 %v3157
        %v3450 = vunpack.c.h.b16 %v3157
        %v3451 = vunpack.c.l.b16 %v3158
        %v3452 = vunpack.c.h.b16 %v3158
        %v3453 = vunpack.c.l.b16 %v3159
        %v3454 = vunpack.c.h.b16 %v3159
        %v3455 = vunpack.c.l.b16 %v3160
        %v3456 = vunpack.c.h.b16 %v3160
        %v3457 = vunpack.c.l.b16 %v3161
        %v3458 = vunpack.c.h.b16 %v3161
        %v3459 = vunpack.c.l.b16 %v3162
        %v3460 = vunpack.c.h.b16 %v3162
        %v3461 = vunpack.c.l.b16 %v3163
        %v3462 = vunpack.c.h.b16 %v3163
        %v3463 = vunpack.c.l.b16 %v3164
        %v3464 = vunpack.c.h.b16 %v3164
        %v3465 = vunpack.c.l.b16 %v3165
        %v3466 = vunpack.c.h.b16 %v3165
        %v3467 = vunpack.c.l.b16 %v3166
        %v3468 = vunpack.c.h.b16 %v3166
        %v3469 = vunpack.c.l.b16 %v3167
        %v3470 = vunpack.c.h.b16 %v3167
        %v3471 = vunpack.c.l.b16 %v3168
        %v3472 = vunpack.c.h.b16 %v3168
        %v3473 = vunpack.c.l.b16 %v3169
        %v3474 = vunpack.c.h.b16 %v3169
        %v3475 = vunpack.c.l.b16 %v3170
        %v3476 = vunpack.c.h.b16 %v3170
        %v3477 = vunpack.c.l.b16 %v3171
        %v3478 = vunpack.c.h.b16 %v3171
        %v3479 = vunpack.c.l.b16 %v3172
        %v3480 = vunpack.c.h.b16 %v3172
        %v3481 = vunpack.c.l.b16 %v3173
        %v3482 = vunpack.c.h.b16 %v3173
        %v3483 = vunpack.c.l.b16 %v3174
        %v3484 = vunpack.c.h.b16 %v3174
        %v3485 = vunpack.c.l.b16 %v3175
        %v3486 = vunpack.c.h.b16 %v3175
        %v3487 = vunpack.c.l.b16 %v3176
        %v3488 = vunpack.c.h.b16 %v3176
        %v3489 = vunpack.c.l.b16 %v3177
        %v3490 = vunpack.c.h.b16 %v3177
        %v3491 = vunpack.c.l.b16 %v3178
        %v3492 = vunpack.c.h.b16 %v3178
        %v3493 = vunpack.c.l.b16 %v3179
        %v3494 = vunpack.c.h.b16 %v3179
        %v3495 = vunpack.c.l.b16 %v3180
        %v3496 = vunpack.c.h.b16 %v3180
        %v3497 = vunpack.c.l.b16 %v3181
        %v3498 = vunpack.c.h.b16 %v3181
        %v3499 = vunpack.c.l.b16 %v3182
        %v3500 = vunpack.c.h.b16 %v3182
        %v3501 = vunpack.c.l.b16 %v3183
        %v3502 = vunpack.c.h.b16 %v3183
        %v3503 = vunpack.c.l.b16 %v3184
        %v3504 = vunpack.c.h.b16 %v3184
        %v3505 = vunpack.c.l.b16 %v3185
        %v3506 = vunpack.c.h.b16 %v3185
        %v3507 = vunpack.c.l.b16 %v3186
        %v3508 = vunpack.c.h.b16 %v3186
        %v3509 = vunpack.c.l.b16 %v3187
        %v3510 = vunpack.c.h.b16 %v3187
        %v3511 = vunpack.c.l.b16 %v3188
        %v3512 = vunpack.c.h.b16 %v3188
        %v3513 = vunpack.c.l.b16 %v3189
        %v3514 = vunpack.c.h.b16 %v3189
        %v3515 = vunpack.c.l.b16 %v3190
        %v3516 = vunpack.c.h.b16 %v3190
        %v3517 = vunpack.c.l.b16 %v3191
        %v3518 = vunpack.c.h.b16 %v3191
        %v3519 = vunpack.c.l.b16 %v3192
        %v3520 = vunpack.c.h.b16 %v3192
        %v3521 = vunpack.c.l.b16 %v3193
        %v3522 = vunpack.c.h.b16 %v3193
        %v3523 = vunpack.c.l.b16 %v3194
        %v3524 = vunpack.c.h.b16 %v3194
        %v3525 = vunpack.c.l.b16 %v3195
        %v3526 = vunpack.c.h.b16 %v3195
        %v3527 = vunpack.c.l.b16 %v3196
        %v3528 = vunpack.c.h.b16 %v3196
        %v3529 = vunpack.c.l.b16 %v3197
        %v3530 = vunpack.c.h.b16 %v3197
        %v3531 = vunpack.c.l.b16 %v3198
        %v3532 = vunpack.c.h.b16 %v3198
        %v3533 = vunpack.c.l.b16 %v3199
        %v3534 = vunpack.c.h.b16 %v3199
        %v3535 = vunpack.c.l.b16 %v3200
        %v3536 = vunpack.c.h.b16 %v3200
        %v3537 = vunpack.c.l.b16 %v3201
        %v3538 = vunpack.c.h.b16 %v3201
        %v3539 = vunpack.c.l.b16 %v3202
        %v3540 = vunpack.c.h.b16 %v3202
        %v3541 = vunpack.c.l.b16 %v3203
        %v3542 = vunpack.c.h.b16 %v3203
        %v3543 = vunpack.c.l.b16 %v3204
        %v3544 = vunpack.c.h.b16 %v3204
        %v3545 = vunpack.c.l.b16 %v3205
        %v3546 = vunpack.c.h.b16 %v3205
        %v3547 = vunpack.c.l.b16 %v3206
        %v3548 = vunpack.c.h.b16 %v3206
        %v3549 = vunpack.c.l.b16 %v3207
        %v3550 = vunpack.c.h.b16 %v3207
        %v3551 = vunpack.c.l.b16 %v3208
        %v3552 = vunpack.c.h.b16 %v3208
        %v3553 = vunpack.c.l.b16 %v3209
        %v3554 = vunpack.c.h.b16 %v3209
        %v3555 = vunpack.c.l.b16 %v3210
        %v3556 = vunpack.c.h.b16 %v3210
        %v3557 = vunpack.c.l.b16 %v3211
        %v3558 = vunpack.c.h.b16 %v3211
        %v3559 = vunpack.c.l.b16 %v3212
        %v3560 = vunpack.c.h.b16 %v3212
        %v3561 = vunpack.c.l.b16 %v3213
        %v3562 = vunpack.c.h.b16 %v3213
        %v3563 = vunpack.c.l.b16 %v3214
        %v3564 = vunpack.c.h.b16 %v3214
        %v3565 = vunpack.c.l.b16 %v3215
        %v3566 = vunpack.c.h.b16 %v3215
        %v3567 = vunpack.c.l.b16 %v3216
        %v3568 = vunpack.c.h.b16 %v3216
        %v3569 = vunpack.c.l.b16 %v3217
        %v3570 = vunpack.c.h.b16 %v3217
        %v3571 = vunpack.c.l.b16 %v3218
        %v3572 = vunpack.c.h.b16 %v3218
        %v3573 = vunpack.c.l.b16 %v3219
        %v3574 = vunpack.c.h.b16 %v3219
        %v3575 = vunpack.c.l.b16 %v3220
        %v3576 = vunpack.c.h.b16 %v3220
        %v3577 = vunpack.c.l.b16 %v3221
        %v3578 = vunpack.c.h.b16 %v3221
        %v3579 = vunpack.c.l.b16 %v3222
        %v3580 = vunpack.c.h.b16 %v3222
        %v3581 = vunpack.c.l.b16 %v3223
        %v3582 = vunpack.c.h.b16 %v3223
        %v3583 = vunpack.c.l.b16 %v3224
        %v3584 = vunpack.c.h.b16 %v3224
        %v3585 = vunpack.c.l.b16 %v3225
        %v3586 = vunpack.c.h.b16 %v3225
        %v3587 = vunpack.c.l.b16 %v3226
        %v3588 = vunpack.c.h.b16 %v3226
        %v3589 = vunpack.c.l.b16 %v3227
        %v3590 = vunpack.c.h.b16 %v3227
        %v3591 = vunpack.c.l.b16 %v3228
        %v3592 = vunpack.c.h.b16 %v3228
        %v3593 = vunpack.c.l.b16 %v3229
        %v3594 = vunpack.c.h.b16 %v3229
        %v3595 = vunpack.c.l.b16 %v3230
        %v3596 = vunpack.c.h.b16 %v3230
        %v3597 = vunpack.c.l.b16 %v3231
        %v3598 = vunpack.c.h.b16 %v3231
        %v3599 = vunpack.c.l.b16 %v3232
        %v3600 = vunpack.c.h.b16 %v3232
        %v3601 = vunpack.c.l.b16 %v3233
        %v3602 = vunpack.c.h.b16 %v3233
        %v3603 = vunpack.c.l.b16 %v3234
        %v3604 = vunpack.c.h.b16 %v3234
        %v3605 = vunpack.c.l.b16 %v3235
        %v3606 = vunpack.c.h.b16 %v3235
        %v3607 = vunpack.c.l.b16 %v3236
        %v3608 = vunpack.c.h.b16 %v3236
        %v3609 = vunpack.c.l.b16 %v3237
        %v3610 = vunpack.c.h.b16 %v3237
        %v3611 = vunpack.c.l.b16 %v3238
        %v3612 = vunpack.c.h.b16 %v3238
        %v3613 = vunpack.c.l.b16 %v3239
        %v3614 = vunpack.c.h.b16 %v3239
        %v3615 = vunpack.c.l.b16 %v3240
        %v3616 = vunpack.c.h.b16 %v3240
        %v3617 = vunpack.c.l.b16 %v3241
        %v3618 = vunpack.c.h.b16 %v3241
        %v3619 = vunpack.c.l.b16 %v3242
        %v3620 = vunpack.c.h.b16 %v3242
        %v3621 = vunpack.c.l.b16 %v3243
        %v3622 = vunpack.c.h.b16 %v3243
        %v3623 = vunpack.c.l.b16 %v3244
        %v3624 = vunpack.c.h.b16 %v3244
        %v3625 = vunpack.c.l.b16 %v3245
        %v3626 = vunpack.c.h.b16 %v3245
        %v3627 = vunpack.c.l.b16 %v3246
        %v3628 = vunpack.c.h.b16 %v3246
        %v3629 = vunpack.c.l.b16 %v3247
        %v3630 = vunpack.c.h.b16 %v3247
        %v3631 = vunpack.c.l.b16 %v3248
        %v3632 = vunpack.c.h.b16 %v3248
        %v3633 = vpack.c.b16 %v3385, %v3377
        %v3634 = vpack.c.b16 %v3386, %v3378
        %v3635 = vpack.c.b16 %v3387, %v3379
        %v3636 = vpack.c.b16 %v3388, %v3380
        %v3637 = vpack.c.b16 %v3389, %v3381
        %v3638 = vpack.c.b16 %v3390, %v3382
        %v3639 = vpack.c.b16 %v3391, %v3383
        %v3640 = vpack.c.b16 %v3392, %v3384
        %v3641 = vpack.c.b16 %v3401, %v3393
        %v3642 = vpack.c.b16 %v3402, %v3394
        %v3643 = vpack.c.b16 %v3403, %v3395
        %v3644 = vpack.c.b16 %v3404, %v3396
        %v3645 = vpack.c.b16 %v3405, %v3397
        %v3646 = vpack.c.b16 %v3406, %v3398
        %v3647 = vpack.c.b16 %v3407, %v3399
        %v3648 = vpack.c.b16 %v3408, %v3400
        %v3649 = vpack.c.b16 %v3417, %v3409
        %v3650 = vpack.c.b16 %v3418, %v3410
        %v3651 = vpack.c.b16 %v3419, %v3411
        %v3652 = vpack.c.b16 %v3420, %v3412
        %v3653 = vpack.c.b16 %v3421, %v3413
        %v3654 = vpack.c.b16 %v3422, %v3414
        %v3655 = vpack.c.b16 %v3423, %v3415
        %v3656 = vpack.c.b16 %v3424, %v3416
        %v3657 = vpack.c.b16 %v3433, %v3425
        %v3658 = vpack.c.b16 %v3434, %v3426
        %v3659 = vpack.c.b16 %v3435, %v3427
        %v3660 = vpack.c.b16 %v3436, %v3428
        %v3661 = vpack.c.b16 %v3437, %v3429
        %v3662 = vpack.c.b16 %v3438, %v3430
        %v3663 = vpack.c.b16 %v3439, %v3431
        %v3664 = vpack.c.b16 %v3440, %v3432
        %v3665 = vpack.c.b16 %v3449, %v3441
        %v3666 = vpack.c.b16 %v3450, %v3442
        %v3667 = vpack.c.b16 %v3451, %v3443
        %v3668 = vpack.c.b16 %v3452, %v3444
        %v3669 = vpack.c.b16 %v3453, %v3445
        %v3670 = vpack.c.b16 %v3454, %v3446
        %v3671 = vpack.c.b16 %v3455, %v3447
        %v3672 = vpack.c.b16 %v3456, %v3448
        %v3673 = vpack.c.b16 %v3465, %v3457
        %v3674 = vpack.c.b16 %v3466, %v3458
        %v3675 = vpack.c.b16 %v3467, %v3459
        %v3676 = vpack.c.b16 %v3468, %v3460
        %v3677 = vpack.c.b16 %v3469, %v3461
        %v3678 = vpack.c.b16 %v3470, %v3462
        %v3679 = vpack.c.b16 %v3471, %v3463
        %v3680 = vpack.c.b16 %v3472, %v3464
        %v3681 = vpack.c.b16 %v3481, %v3473
        %v3682 = vpack.c.b16 %v3482, %v3474
        %v3683 = vpack.c.b16 %v3483, %v3475
        %v3684 = vpack.c.b16 %v3484, %v3476
        %v3685 = vpack.c.b16 %v3485, %v3477
        %v3686 = vpack.c.b16 %v3486, %v3478
        %v3687 = vpack.c.b16 %v3487, %v3479
        %v3688 = vpack.c.b16 %v3488, %v3480
        %v3689 = vpack.c.b16 %v3497, %v3489
        %v3690 = vpack.c.b16 %v3498, %v3490
        %v3691 = vpack.c.b16 %v3499, %v3491
        %v3692 = vpack.c.b16 %v3500, %v3492
        %v3693 = vpack.c.b16 %v3501, %v3493
        %v3694 = vpack.c.b16 %v3502, %v3494
        %v3695 = vpack.c.b16 %v3503, %v3495
        %v3696 = vpack.c.b16 %v3504, %v3496
        %v3697 = vpack.c.b16 %v3513, %v3505
        %v3698 = vpack.c.b16 %v3514, %v3506
        %v3699 = vpack.c.b16 %v3515, %v3507
        %v3700 = vpack.c.b16 %v3516, %v3508
        %v3701 = vpack.c.b16 %v3517, %v3509
        %v3702 = vpack.c.b16 %v3518, %v3510
        %v3703 = vpack.c.b16 %v3519, %v3511
        %v3704 = vpack.c.b16 %v3520, %v3512
        %v3705 = vpack.c.b16 %v3529, %v3521
        %v3706 = vpack.c.b16 %v3530, %v3522
        %v3707 = vpack.c.b16 %v3531, %v3523
        %v3708 = vpack.c.b16 %v3532, %v3524
        %v3709 = vpack.c.b16 %v3533, %v3525
        %v3710 = vpack.c.b16 %v3534, %v3526
        %v3711 = vpack.c.b16 %v3535, %v3527
        %v3712 = vpack.c.b16 %v3536, %v3528
        %v3713 = vpack.c.b16 %v3545, %v3537
        %v3714 = vpack.c.b16 %v3546, %v3538
        %v3715 = vpack.c.b16 %v3547, %v3539
        %v3716 = vpack.c.b16 %v3548, %v3540
        %v3717 = vpack.c.b16 %v3549, %v3541
        %v3718 = vpack.c.b16 %v3550, %v3542
        %v3719 = vpack.c.b16 %v3551, %v3543
        %v3720 = vpack.c.b16 %v3552, %v3544
        %v3721 = vpack.c.b16 %v3561, %v3553
        %v3722 = vpack.c.b16 %v3562, %v3554
        %v3723 = vpack.c.b16 %v3563, %v3555
        %v3724 = vpack.c.b16 %v3564, %v3556
        %v3725 = vpack.c.b16 %v3565, %v3557
        %v3726 = vpack.c.b16 %v3566, %v3558
        %v3727 = vpack.c.b16 %v3567, %v3559
        %v3728 = vpack.c.b16 %v3568, %v3560
        %v3729 = vpack.c.b16 %v3577, %v3569
        %v3730 = vpack.c.b16 %v3578, %v3570
        %v3731 = vpack.c.b16 %v3579, %v3571
        %v3732 = vpack.c.b16 %v3580, %v3572
        %v3733 = vpack.c.b16 %v3581, %v3573
        %v3734 = vpack.c.b16 %v3582, %v3574
        %v3735 = vpack.c.b16 %v3583, %v3575
        %v3736 = vpack.c.b16 %v3584, %v3576
        %v3737 = vpack.c.b16 %v3593, %v3585
        %v3738 = vpack.c.b16 %v3594, %v3586
        %v3739 = vpack.c.b16 %v3595, %v3587
        %v3740 = vpack.c.b16 %v3596, %v3588
        %v3741 = vpack.c.b16 %v3597, %v3589
        %v3742 = vpack.c.b16 %v3598, %v3590
        %v3743 = vpack.c.b16 %v3599, %v3591
        %v3744 = vpack.c.b16 %v3600, %v3592
        %v3745 = vpack.c.b16 %v3609, %v3601
        %v3746 = vpack.c.b16 %v3610, %v3602
        %v3747 = vpack.c.b16 %v3611, %v3603
        %v3748 = vpack.c.b16 %v3612, %v3604
        %v3749 = vpack.c.b16 %v3613, %v3605
        %v3750 = vpack.c.b16 %v3614, %v3606
        %v3751 = vpack.c.b16 %v3615, %v3607
        %v3752 = vpack.c.b16 %v3616, %v3608
        %v3753 = vpack.c.b16 %v3625, %v3617
        %v3754 = vpack.c.b16 %v3626, %v3618
        %v3755 = vpack.c.b16 %v3627, %v3619
        %v3756 = vpack.c.b16 %v3628, %v3620
        %v3757 = vpack.c.b16 %v3629, %v3621
        %v3758 = vpack.c.b16 %v3630, %v3622
        %v3759 = vpack.c.b16 %v3631, %v3623
        %v3760 = vpack.c.b16 %v3632, %v3624
        %3889 = vmatprep.subr.bf16.mxu0 %v3634
        %3890 = vmatpush1.bf16.msra.mxu0 %v3633
        %3891 = vmatprep.subr.bf16.mxu0 %v3642
        %3892 = vmatpush1.bf16.msra.mxu0 %v3641
        %3893 = vmatprep.subr.bf16.mxu0 %v3650
        %3894 = vmatpush1.bf16.msra.mxu0 %v3649
        %3895 = vmatprep.subr.bf16.mxu0 %v3658
        %3896 = vmatpush1.bf16.msra.mxu0 %v3657
        %3897 = vmatprep.subr.bf16.mxu0 %v3666
        %3898 = vmatpush1.bf16.msra.mxu0 %v3665
        %3899 = vmatprep.subr.bf16.mxu0 %v3674
        %3900 = vmatpush1.bf16.msra.mxu0 %v3673
        %3901 = vmatprep.subr.bf16.mxu0 %v3682
        %3902 = vmatpush1.bf16.msra.mxu0 %v3681
        %3903 = vmatprep.subr.bf16.mxu0 %v3690
        %3904 = vmatpush1.bf16.msra.mxu0 %v3689
        %3905 = vmatprep.subr.bf16.mxu0 %v3698
        %3906 = vmatpush1.bf16.msra.mxu0 %v3697
        %3907 = vmatprep.subr.bf16.mxu0 %v3706
        %3908 = vmatpush1.bf16.msra.mxu0 %v3705
        %3909 = vmatprep.subr.bf16.mxu0 %v3714
        %3910 = vmatpush1.bf16.msra.mxu0 %v3713
        %3911 = vmatprep.subr.bf16.mxu0 %v3722
        %3912 = vmatpush1.bf16.msra.mxu0 %v3721
        %3913 = vmatprep.subr.bf16.mxu0 %v3730
        %3914 = vmatpush1.bf16.msra.mxu0 %v3729
        %3915 = vmatprep.subr.bf16.mxu0 %v3738
        %3916 = vmatpush1.bf16.msra.mxu0 %v3737
        %3917 = vmatprep.subr.bf16.mxu0 %v3746
        %3918 = vmatpush1.bf16.msra.mxu0 %v3745
        %3919 = vmatprep.subr.bf16.mxu0 %v3754
        %3920 = vmatpush1.bf16.msra.mxu0 %v3753
        %3921 = vmatprep.mubr.bf16.mxu0 %v3120
        %3922 = vmatmul.mubr.bf16.gmra.mrb[0].mxu0 %v3119
        %v3923 = vpop.f32.mrb[0].mxu0
        %v3924 = vadd.f32 0.0, %v3923
        %v3925 = vpop.f32.mrb[0].mxu0
        %v3926 = vadd.f32 0.0, %v3925
        %v3927 = vpop.f32.mrb[0].mxu0
        %v3928 = vpop.f32.mrb[0].mxu0
        %3929 = vdwg.mxu0
        %3930 = vmatprep.subr.bf16.mxu0 %v3636
        %3931 = vmatpush1.bf16.msra.mxu0 %v3635
        %3932 = vmatprep.subr.bf16.mxu0 %v3644
        %3933 = vmatpush1.bf16.msra.mxu0 %v3643
        %3934 = vmatprep.subr.bf16.mxu0 %v3652
        %3935 = vmatpush1.bf16.msra.mxu0 %v3651
        %3936 = vmatprep.subr.bf16.mxu0 %v3660
        %3937 = vmatpush1.bf16.msra.mxu0 %v3659
        %3938 = vmatprep.subr.bf16.mxu0 %v3668
        %3939 = vmatpush1.bf16.msra.mxu0 %v3667
        %3940 = vmatprep.subr.bf16.mxu0 %v3676
        %3941 = vmatpush1.bf16.msra.mxu0 %v3675
        %3942 = vmatprep.subr.bf16.mxu0 %v3684
        %3943 = vmatpush1.bf16.msra.mxu0 %v3683
        %3944 = vmatprep.subr.bf16.mxu0 %v3692
        %3945 = vmatpush1.bf16.msra.mxu0 %v3691
        %3946 = vmatprep.subr.bf16.mxu0 %v3700
        %3947 = vmatpush1.bf16.msra.mxu0 %v3699
        %3948 = vmatprep.subr.bf16.mxu0 %v3708
        %3949 = vmatpush1.bf16.msra.mxu0 %v3707
        %3950 = vmatprep.subr.bf16.mxu0 %v3716
        %3951 = vmatpush1.bf16.msra.mxu0 %v3715
        %3952 = vmatprep.subr.bf16.mxu0 %v3724
        %3953 = vmatpush1.bf16.msra.mxu0 %v3723
        %3954 = vmatprep.subr.bf16.mxu0 %v3732
        %3955 = vmatpush1.bf16.msra.mxu0 %v3731
        %3956 = vmatprep.subr.bf16.mxu0 %v3740
        %3957 = vmatpush1.bf16.msra.mxu0 %v3739
        %3958 = vmatprep.subr.bf16.mxu0 %v3748
        %3959 = vmatpush1.bf16.msra.mxu0 %v3747
        %3960 = vmatprep.subr.bf16.mxu0 %v3756
        %3961 = vmatpush1.bf16.msra.mxu0 %v3755
        %3962 = vmatprep.mubr.bf16.mxu0 %v3120
        %3963 = vmatmul.mubr.bf16.gmra.mrb[0].mxu0 %v3119
        %v3964 = vpop.f32.mrb[0].mxu0
        %v3965 = vadd.f32 0.0, %v3964
        %v3966 = vpop.f32.mrb[0].mxu0
        %v3967 = vadd.f32 0.0, %v3966
        %v3968 = vpop.f32.mrb[0].mxu0
        %v3969 = vpop.f32.mrb[0].mxu0
        %3970 = vdwg.mxu0
        %3971 = vmatprep.subr.bf16.mxu0 %v3638
        %3972 = vmatpush1.bf16.msra.mxu0 %v3637
        %3973 = vmatprep.subr.bf16.mxu0 %v3646
        %3974 = vmatpush1.bf16.msra.mxu0 %v3645
        %3975 = vmatprep.subr.bf16.mxu0 %v3654
        %3976 = vmatpush1.bf16.msra.mxu0 %v3653
        %3977 = vmatprep.subr.bf16.mxu0 %v3662
        %3978 = vmatpush1.bf16.msra.mxu0 %v3661
        %3979 = vmatprep.subr.bf16.mxu0 %v3670
        %3980 = vmatpush1.bf16.msra.mxu0 %v3669
        %3981 = vmatprep.subr.bf16.mxu0 %v3678
        %3982 = vmatpush1.bf16.msra.mxu0 %v3677
        %3983 = vmatprep.subr.bf16.mxu0 %v3686
        %3984 = vmatpush1.bf16.msra.mxu0 %v3685
        %3985 = vmatprep.subr.bf16.mxu0 %v3694
        %3986 = vmatpush1.bf16.msra.mxu0 %v3693
        %3987 = vmatprep.subr.bf16.mxu0 %v3702
        %3988 = vmatpush1.bf16.msra.mxu0 %v3701
        %3989 = vmatprep.subr.bf16.mxu0 %v3710
        %3990 = vmatpush1.bf16.msra.mxu0 %v3709
        %3991 = vmatprep.subr.bf16.mxu0 %v3718
        %3992 = vmatpush1.bf16.msra.mxu0 %v3717
        %3993 = vmatprep.subr.bf16.mxu0 %v3726
        %3994 = vmatpush1.bf16.msra.mxu0 %v3725
        %3995 = vmatprep.subr.bf16.mxu0 %v3734
        %3996 = vmatpush1.bf16.msra.mxu0 %v3733
        %3997 = vmatprep.subr.bf16.mxu0 %v3742
        %3998 = vmatpush1.bf16.msra.mxu0 %v3741
        %3999 = vmatprep.subr.bf16.mxu0 %v3750
        %4000 = vmatpush1.bf16.msra.mxu0 %v3749
        %4001 = vmatprep.subr.bf16.mxu0 %v3758
        %4002 = vmatpush1.bf16.msra.mxu0 %v3757
        %4003 = vmatprep.mubr.bf16.mxu0 %v3120
        %4004 = vmatmul.mubr.bf16.gmra.mrb[0].mxu0 %v3119
        %v4005 = vpop.f32.mrb[0].mxu0
        %v4006 = vadd.f32 0.0, %v4005
        %v4007 = vpop.f32.mrb[0].mxu0
        %v4008 = vadd.f32 0.0, %v4007
        %v4009 = vpop.f32.mrb[0].mxu0
        %v4010 = vpop.f32.mrb[0].mxu0
        %4011 = vdwg.mxu0
        %4012 = vmatprep.subr.bf16.mxu0 %v3640
        %4013 = vmatpush1.bf16.msra.mxu0 %v3639
        %4014 = vmatprep.subr.bf16.mxu0 %v3648
        %4015 = vmatpush1.bf16.msra.mxu0 %v3647
        %4016 = vmatprep.subr.bf16.mxu0 %v3656
        %4017 = vmatpush1.bf16.msra.mxu0 %v3655
        %4018 = vmatprep.subr.bf16.mxu0 %v3664
        %4019 = vmatpush1.bf16.msra.mxu0 %v3663
        %4020 = vmatprep.subr.bf16.mxu0 %v3672
        %4021 = vmatpush1.bf16.msra.mxu0 %v3671
        %4022 = vmatprep.subr.bf16.mxu0 %v3680
        %4023 = vmatpush1.bf16.msra.mxu0 %v3679
        %4024 = vmatprep.subr.bf16.mxu0 %v3688
        %4025 = vmatpush1.bf16.msra.mxu0 %v3687
        %4026 = vmatprep.subr.bf16.mxu0 %v3696
        %4027 = vmatpush1.bf16.msra.mxu0 %v3695
        %4028 = vmatprep.subr.bf16.mxu0 %v3704
        %4029 = vmatpush1.bf16.msra.mxu0 %v3703
        %4030 = vmatprep.subr.bf16.mxu0 %v3712
        %4031 = vmatpush1.bf16.msra.mxu0 %v3711
        %4032 = vmatprep.subr.bf16.mxu0 %v3720
        %4033 = vmatpush1.bf16.msra.mxu0 %v3719
        %4034 = vmatprep.subr.bf16.mxu0 %v3728
        %4035 = vmatpush1.bf16.msra.mxu0 %v3727
        %4036 = vmatprep.subr.bf16.mxu0 %v3736
        %4037 = vmatpush1.bf16.msra.mxu0 %v3735
        %4038 = vmatprep.subr.bf16.mxu0 %v3744
        %4039 = vmatpush1.bf16.msra.mxu0 %v3743
        %4040 = vmatprep.subr.bf16.mxu0 %v3752
        %4041 = vmatpush1.bf16.msra.mxu0 %v3751
        %4042 = vmatprep.subr.bf16.mxu0 %v3760
        %4043 = vmatpush1.bf16.msra.mxu0 %v3759
        %4044 = vmatprep.mubr.bf16.mxu0 %v3120
        %4045 = vmatmul.mubr.bf16.gmra.mrb[0].mxu0 %v3119
        %v4046 = vpop.f32.mrb[0].mxu0
        %v4047 = vadd.f32 0.0, %v4046
        %v4048 = vpop.f32.mrb[0].mxu0
        %v4049 = vadd.f32 0.0, %v4048
        %v4050 = vpop.f32.mrb[0].mxu0
        %v4051 = vpop.f32.mrb[0].mxu0
        %4052 = vdwg.mxu0
        %v4061 = vcombine.low %v3924, %v3926
        %v4062 = vcombine.low %v3965, %v3967
        %v4064 = vunpack.c.l.s4 1983009808
        %v4065 = vunpack.c.0.s8 %v4064
        %v4066 = vlaneseq
        %v4067 = vshrl.u32 %v4066, 7
        %v4068 = vsub.s32 %v4065, %v4067
        %v4069 = vrot.slane %v4061, %v4068
        %v4071 = vunpack.c.l.s4 1983009808
        %v4072 = vunpack.c.0.s8 %v4071
        %v4073 = vlaneseq
        %v4074 = vshrl.u32 %v4073, 7
        %v4075 = vsub.s32 %v4072, %v4074
        %v4076 = vrot.slane %v4062, %v4075
        %v4077 = vcombine.low %v4069, %v4076
        %v4078 = vcombine.low %v4006, %v4008
        %v4079 = vcombine.low %v4047, %v4049
        %v4081 = vunpack.c.l.s4 1983009808
        %v4082 = vunpack.c.0.s8 %v4081
        %v4083 = vlaneseq
        %v4084 = vshrl.u32 %v4083, 7
        %v4085 = vsub.s32 %v4082, %v4084
        %v4086 = vrot.slane %v4078, %v4085
        %v4088 = vunpack.c.l.s4 1983009808
        %v4089 = vunpack.c.0.s8 %v4088
        %v4090 = vlaneseq
        %v4091 = vshrl.u32 %v4090, 7
        %v4092 = vsub.s32 %v4089, %v4091
        %v4093 = vrot.slane %v4079, %v4092
        %v4094 = vcombine.low %v4086, %v4093
        %v4097 = vadd.f32 %v3117, %v4077
        %v4098 = vadd.f32 %v3118, %v4094
        %4099 = vst [vmem:[#allocation3] sm:$0xff] %v4097
        %4100 = vst [vmem:[#allocation3 + $0x8] sm:$0xff] %v4098
        %p4101 = scmp.eq.s32.totalorder %s33, 3
        // Predicated region
        $region105: #{critic_forward.1} parent=63 // pred_check
          %p4102 = pneg %p4101
        $region106: #{critic_forward.1} parent=63 // pred_check_branch
          %4104 = sbr.rel (%p4102) target = $region108
        $region107: #{critic_forward.1} parent=63 // pred_region
          %v4105 = vld [vmem:[#allocation3] sm:$0xff]
          %v4106 = vld [vmem:[#allocation3 + $0x8] sm:$0xff]
          %v4107 = vld [vmem:[#allocation16] sm:$0xff]
          %v4109 = vlaneseq
          %v4110 = vshrl.u32 %v4109, 7
          %v4111 = vsub.s32 0, %v4110
          %v4112 = vrot.slane %v4107, %v4111
          %v4113 = vlaneseq
          %v4114 = vshrl.u32 %v4113, 7
          %v4115 = vsub.s32 1, %v4114
          %v4116 = vrot.slane %v4107, %v4115
          %v4117 = vlaneseq
          %v4118 = vshrl.u32 %v4117, 7
          %v4119 = vsub.s32 2, %v4118
          %v4120 = vrot.slane %v4107, %v4119
          %v4121 = vlaneseq
          %v4122 = vshrl.u32 %v4121, 7
          %v4123 = vsub.s32 3, %v4122
          %v4124 = vrot.slane %v4107, %v4123
          %v4125 = vlaneseq
          %v4126 = vshrl.u32 %v4125, 7
          %v4127 = vsub.s32 4, %v4126
          %v4128 = vrot.slane %v4107, %v4127
          %v4129 = vlaneseq
          %v4130 = vshrl.u32 %v4129, 7
          %v4131 = vsub.s32 5, %v4130
          %v4132 = vrot.slane %v4107, %v4131
          %v4133 = vlaneseq
          %v4134 = vshrl.u32 %v4133, 7
          %v4135 = vsub.s32 6, %v4134
          %v4136 = vrot.slane %v4107, %v4135
          %v4137 = vlaneseq
          %v4138 = vshrl.u32 %v4137, 7
          %v4139 = vsub.s32 7, %v4138
          %v4140 = vrot.slane %v4107, %v4139
          %v4141 = vcombine.low %v4112, %v4116
          %v4142 = vcombine.low %v4120, %v4124
          %v4144 = vunpack.c.l.s4 1983009808
          %v4145 = vunpack.c.0.s8 %v4144
          %v4146 = vlaneseq
          %v4147 = vshrl.u32 %v4146, 7
          %v4148 = vsub.s32 %v4145, %v4147
          %v4149 = vrot.slane %v4141, %v4148
          %v4151 = vunpack.c.l.s4 1983009808
          %v4152 = vunpack.c.0.s8 %v4151
          %v4153 = vlaneseq
          %v4154 = vshrl.u32 %v4153, 7
          %v4155 = vsub.s32 %v4152, %v4154
          %v4156 = vrot.slane %v4142, %v4155
          %v4157 = vcombine.low %v4149, %v4156
          %v4158 = vcombine.low %v4128, %v4132
          %v4159 = vcombine.low %v4136, %v4140
          %v4161 = vunpack.c.l.s4 1983009808
          %v4162 = vunpack.c.0.s8 %v4161
          %v4163 = vlaneseq
          %v4164 = vshrl.u32 %v4163, 7
          %v4165 = vsub.s32 %v4162, %v4164
          %v4166 = vrot.slane %v4158, %v4165
          %v4168 = vunpack.c.l.s4 1983009808
          %v4169 = vunpack.c.0.s8 %v4168
          %v4170 = vlaneseq
          %v4171 = vshrl.u32 %v4170, 7
          %v4172 = vsub.s32 %v4169, %v4171
          %v4173 = vrot.slane %v4159, %v4172
          %v4174 = vcombine.low %v4166, %v4173
          %v4177 = vadd.f32 %v4105, %v4157
          %v4178 = vadd.f32 %v4106, %v4174
          %v4179 = vmax.f32 %v4177, 0.0
          %v4180 = vmax.f32 %v4178, 0.0
          %v4181 = vld [vmem:[#allocation18] sm:$0xff]
          %v4183 = vlaneseq
          %v4184 = vshrl.u32 %v4183, 7
          %v4185 = vsub.s32 0, %v4184
          %v4186 = vrot.slane %v4181, %v4185
          %v4187 = vlaneseq
          %v4188 = vshrl.u32 %v4187, 7
          %v4189 = vsub.s32 1, %v4188
          %v4190 = vrot.slane %v4181, %v4189
          %v4191 = vlaneseq
          %v4192 = vshrl.u32 %v4191, 7
          %v4193 = vsub.s32 2, %v4192
          %v4194 = vrot.slane %v4181, %v4193
          %v4195 = vlaneseq
          %v4196 = vshrl.u32 %v4195, 7
          %v4197 = vsub.s32 3, %v4196
          %v4198 = vrot.slane %v4181, %v4197
          %v4199 = vlaneseq
          %v4200 = vshrl.u32 %v4199, 7
          %v4201 = vsub.s32 4, %v4200
          %v4202 = vrot.slane %v4181, %v4201
          %v4203 = vlaneseq
          %v4204 = vshrl.u32 %v4203, 7
          %v4205 = vsub.s32 5, %v4204
          %v4206 = vrot.slane %v4181, %v4205
          %v4207 = vlaneseq
          %v4208 = vshrl.u32 %v4207, 7
          %v4209 = vsub.s32 6, %v4208
          %v4210 = vrot.slane %v4181, %v4209
          %v4211 = vlaneseq
          %v4212 = vshrl.u32 %v4211, 7
          %v4213 = vsub.s32 7, %v4212
          %v4214 = vrot.slane %v4181, %v4213
          %v4215 = vcombine.low %v4186, %v4190
          %v4216 = vcombine.low %v4194, %v4198
          %v4218 = vunpack.c.l.s4 1983009808
          %v4219 = vunpack.c.0.s8 %v4218
          %v4220 = vlaneseq
          %v4221 = vshrl.u32 %v4220, 7
          %v4222 = vsub.s32 %v4219, %v4221
          %v4223 = vrot.slane %v4215, %v4222
          %v4225 = vunpack.c.l.s4 1983009808
          %v4226 = vunpack.c.0.s8 %v4225
          %v4227 = vlaneseq
          %v4228 = vshrl.u32 %v4227, 7
          %v4229 = vsub.s32 %v4226, %v4228
          %v4230 = vrot.slane %v4216, %v4229
          %v4231 = vcombine.low %v4223, %v4230
          %v4232 = vcombine.low %v4202, %v4206
          %v4233 = vcombine.low %v4210, %v4214
          %v4235 = vunpack.c.l.s4 1983009808
          %v4236 = vunpack.c.0.s8 %v4235
          %v4237 = vlaneseq
          %v4238 = vshrl.u32 %v4237, 7
          %v4239 = vsub.s32 %v4236, %v4238
          %v4240 = vrot.slane %v4232, %v4239
          %v4242 = vunpack.c.l.s4 1983009808
          %v4243 = vunpack.c.0.s8 %v4242
          %v4244 = vlaneseq
          %v4245 = vshrl.u32 %v4244, 7
          %v4246 = vsub.s32 %v4243, %v4245
          %v4247 = vrot.slane %v4233, %v4246
          %v4248 = vcombine.low %v4240, %v4247
          %v4251 = vmul.f32 %v4179, %v4231
          %v4252 = vmul.f32 %v4180, %v4248
          %v4255 = vcombine.high %v4251, %v4251
          %v4257 = vunpack.c.l.s4 1983009808
          %v4258 = vunpack.c.0.s8 %v4257
          %v4259 = vlaneseq
          %v4260 = vshrl.u32 %v4259, 7
          %v4261 = vsub.s32 %v4258, %v4260
          %v4262 = vrot.slane %v4251, %v4261
          %v4264 = vunpack.c.l.s4 1983009808
          %v4265 = vunpack.c.0.s8 %v4264
          %v4266 = vlaneseq
          %v4267 = vshrl.u32 %v4266, 7
          %v4268 = vsub.s32 %v4265, %v4267
          %v4269 = vrot.slane %v4255, %v4268
          %v4270 = vcombine.high %v4262, %v4262
          %v4271 = vcombine.high %v4269, %v4269
          %v4272 = vcombine.high %v4252, %v4252
          %v4274 = vunpack.c.l.s4 1983009808
          %v4275 = vunpack.c.0.s8 %v4274
          %v4276 = vlaneseq
          %v4277 = vshrl.u32 %v4276, 7
          %v4278 = vsub.s32 %v4275, %v4277
          %v4279 = vrot.slane %v4252, %v4278
          %v4281 = vunpack.c.l.s4 1983009808
          %v4282 = vunpack.c.0.s8 %v4281
          %v4283 = vlaneseq
          %v4284 = vshrl.u32 %v4283, 7
          %v4285 = vsub.s32 %v4282, %v4284
          %v4286 = vrot.slane %v4272, %v4285
          %v4287 = vcombine.high %v4279, %v4279
          %v4288 = vcombine.high %v4286, %v4286
          %vm4297 = vcmask 1041408
          %v4298 = vsel %vm4297, %v4262, 0.0
          %v4299 = vsel %vm4297, %v4270, 0.0
          %v4300 = vadd.f32 %v4298, %v4299
          %v4301 = vsel %vm4297, %v4269, 0.0
          %v4302 = vadd.f32 %v4300, %v4301
          %v4303 = vsel %vm4297, %v4271, 0.0
          %v4304 = vadd.f32 %v4302, %v4303
          %v4305 = vsel %vm4297, %v4279, 0.0
          %v4306 = vadd.f32 %v4304, %v4305
          %v4307 = vsel %vm4297, %v4287, 0.0
          %v4308 = vadd.f32 %v4306, %v4307
          %v4309 = vsel %vm4297, %v4286, 0.0
          %v4310 = vadd.f32 %v4308, %v4309
          %v4311 = vsel %vm4297, %v4288, 0.0
          %v4312 = vadd.f32 %v4310, %v4311
          %4313 = vadd.xlane.f32.xlu0 %v4312
          %v4314 = vpop.xlane.xlu0 %4313
          %v4315 = vld [vmem:[#allocation4] sm:$0x1]
          %v4317 = vlaneseq
          %v4318 = vshrl.u32 %v4317, 7
          %v4319 = vsub.s32 0, %v4318
          %v4320 = vrot.slane %v4315, %v4319
          %v4322 = vadd.f32 %v4314, %v4320
          %vm4323 = vcmask 1024
          %4324 = vst.msk [vmem:[%s11] sm:$0x3] %vm4323, %v4322
        $region108: #{critic_forward.1} parent=63 // pred_fallthru
          _
        // Predicated region
        $region109: #{critic_forward.1} parent=63 // pred_check
          %p4325 = pneg %p297
        $region110: #{critic_forward.1} parent=63 // pred_check_branch
          %4327 = sbr.rel (%p4325) target = $region112
        $region111: #{critic_forward.1} parent=63 // pred_region
          _
        $region112: #{critic_forward.1} parent=63 // pred_fallthru
          _
        // Predicated region
        $region113: #{critic_forward.1} parent=63 // pred_check
          %p4328 = pneg %p297
        $region114: #{critic_forward.1} parent=63 // pred_check_branch
          %4330 = sbr.rel (%p4328) target = $region116
        $region115: #{critic_forward.1} parent=63 // pred_region
          _
        $region116: #{critic_forward.1} parent=63 // pred_fallthru
          _
      $region64: #{critic_forward.1} parent=5 // pred_fallthru
        _
      %p4331 = scmp.le.s32.totalorder 2, %s28
      // Predicated region
      $region117: #{critic_forward.1} parent=5 // pred_check
        %p4332 = pneg %p4331
      $region118: #{critic_forward.1} parent=5 // pred_check_branch
        %4334 = sbr.rel (%p4332) target = $region120
      $region119: #{critic_forward.1} parent=5 // pred_region
        %s4335 = ssub.s32 %s28, 2
      $region120: #{critic_forward.1} parent=5 // pred_fallthru
        _
    $region6: #{critic_forward.1} parent=1 // loop_footer
      %s32 = sadd.s32 1, %s28
    $region7: #{critic_forward.1} parent=1 // loop_footer_branch
      %27 = sbr.rel target = $region3
    $region8: #{critic_forward.1} parent=1 // loop_exit
      _
    %4336 = vsyncpa [#allocation6], 1
    %s4337 = scalar_lea.sflag [#allocation6], 1
    %4338 = vsyncpa %s4337, 1
    %4339 = vsyncpa [#allocation8], 1
    %4340 = vsyncpa [#allocation11], 1
    %s4341 = scalar_lea.sflag [#allocation11], 1
    %4342 = vsyncpa %s4341, 1
    %4343 = vsyncpa [#allocation14], 1
    %s4344 = scalar_lea.sflag [#allocation14], 1
    %4345 = vsyncpa %s4344, 1
    %4346 = vsyncpa [#allocation17], 1

</llo_original>
